<compile_context>
chip_gen: v5e
topology: v5e:2x2
jax: 0.10.0
libtpu: 0.0.40
codegen_flags: <defaults>
</compile_context>

<pallas_src>
import math

import jax
import jax.numpy as jnp
from jax import lax
from jax.experimental import pallas as pl
from jax.experimental.pallas import tpu as pltpu

N_FEATURE = 16          # AE default n_feature
M = 20                  # number of mixture components
POS_DIM = 8             # position vector width

_VMEM = pl.BlockSpec(memory_space=pltpu.MemorySpace.VMEM)
_TN = (((0,), (0,)), ((), ()))      # LHS-transposed contraction (scatter)


def _round8(x):
    return -(-x // 8) * 8


# ----------------------------------------------------------------------------
# Fused kernel (whole AE forward: encode -> decode -> loss)
# ----------------------------------------------------------------------------
def _make_ae_kernel(n_nodes, nis, nis_pad, n_feature=N_FEATURE, m=M):
    L = len(nis)
    offs = [0]
    for p in nis_pad:
        offs.append(offs[-1] + p)
    T = offs[-1]
    nf = n_feature
    H2 = nf // 2
    inv_two_pi = 1.0 / (2.0 * math.pi)
    inv_sqrt_two_pi = 1.0 / math.sqrt(2.0 * math.pi)

    def dot(a, b):
        return jnp.dot(a, b, preferred_element_type=jnp.float32)

    def dot_t(a, b):        # a^T @ b  (scatter), contracts dim 0 of both
        return lax.dot_general(a, b, dimension_numbers=_TN,
                               preferred_element_type=jnp.float32)

    def kernel(x_ref, f_ref, xf_ref, idxl_ref, idxr_ref, idxf_ref,
               enc_w_ref, enc_b_ref,
               fch_w_ref, fch_b_ref,
               rnn_wp_ref, rnn_wf_ref, rnn_wh_ref, rnn_b_ref,
               fc_w_ref, fc_b_ref,
               loss_ref):
        X = x_ref[...]                       # (n, 8)
        F0 = f_ref[...]                      # (n, nf)
        XF = xf_ref[...]                     # (n, 8+nf) = [x | h | c]
        idxl = idxl_ref[...]                 # (T, 1) int32, -1 pad
        idxr = idxr_ref[...]
        idxf = idxf_ref[...]

        enc_w, enc_b = enc_w_ref[...], enc_b_ref[...]    # (8+nf, 4H2) c-rows zero
        fch_w, fch_b = fch_w_ref[...], fch_b_ref[...]
        rnn_wp, rnn_wf, rnn_wh = rnn_wp_ref[...], rnn_wf_ref[...], rnn_wh_ref[...]
        rnn_b = rnn_b_ref[...]
        fc_w, fc_b = fc_w_ref[...], fc_b_ref[...]

        # Three one-hot gather matrices (padding rows -1 -> all-zero rows).
        col_iota = lax.broadcasted_iota(jnp.int32, (T, n_nodes), 1)
        oh_l = (col_iota == idxl).astype(jnp.float32)
        oh_r = (col_iota == idxr).astype(jnp.float32)
        oh_fa = (col_iota == idxf).astype(jnp.float32)

        # ---------------- Encoder: all levels, one batched LSTM --------------
        g_l = dot(oh_l, XF)                              # (T, 8+nf)
        g_r = dot(oh_r, XF)
        G = jnp.concatenate([g_l, g_r], axis=0)          # (2T, 8+nf)

        # Gate matmul consumes [x | h | c] directly; c rows of enc_w are zero.
        gates = dot(G, enc_w) + enc_b                    # (2T, 4*H2)
        i_g = jax.nn.sigmoid(gates[:, 0 * H2:1 * H2])
        f_g = jax.nn.sigmoid(gates[:, 1 * H2:2 * H2])
        g_g = jnp.tanh(gates[:, 2 * H2:3 * H2])
        o_g = jax.nn.sigmoid(gates[:, 3 * H2:4 * H2])
        c_lr = G[:, POS_DIM + H2:POS_DIM + nf]           # (2T, H2)
        c_new = f_g * c_lr + i_g * g_g
        h_new = o_g * jnp.tanh(c_new)
        enc_out = jnp.concatenate([h_new[:T] + h_new[T:],
                                   c_new[:T] + c_new[T:]], axis=1)   # (T, nf)

        # Scatter father rows (fathers are unique across all levels).
        ones_T = jnp.ones((T, 1), jnp.float32)
        mask_fa = dot_t(oh_fa, ones_T)                   # (n, 1)
        feat = F0 * (1.0 - mask_fa) + dot_t(oh_fa, enc_out)

        # ---------------- Decoder: root -> leaves (static in-kernel loop) ----
        total = jnp.zeros((1, 1), jnp.float32)
        for li in range(L - 1, -1, -1):
            r0, r1 = offs[li], offs[li + 1]
            npad = nis_pad[li]
            ni = nis[li]
            oh_fa_l = oh_fa[r0:r1, :]
            oh_l_l = oh_l[r0:r1, :]
            oh_r_l = oh_r[r0:r1, :]
            valid = (idxf[r0:r1, :] >= 0).astype(jnp.float32)        # (npad, 1)

            f_fa = dot(oh_fa_l, feat)                                # (npad, nf)
            p_fa = dot(oh_fa_l, X)                                   # (npad, 8)
            p_l = dot(oh_l_l, X)
            p_r = dot(oh_r_l, X)

            z = jnp.tanh(dot(f_fa, fch_w) + fch_b)                   # (npad, 2nf)
            h_fa, c_fa = z[:, :nf], z[:, nf:]

            # Split-weight partial matmuls (no lane concat feeding the MXU).
            g2 = dot(p_fa, rnn_wp) + dot(f_fa, rnn_wf) + dot(h_fa, rnn_wh) + rnn_b
            i2 = jax.nn.sigmoid(g2[:, 0 * nf:1 * nf])
            f2 = jax.nn.sigmoid(g2[:, 1 * nf:2 * nf])
            gg2 = jnp.tanh(g2[:, 2 * nf:3 * nf])
            o2 = jax.nn.sigmoid(g2[:, 3 * nf:4 * nf])
            c_o = f2 * c_fa + i2 * gg2
            h_o = o2 * jnp.tanh(c_o)

            h_left, h_right = h_o[:, :H2], h_o[:, H2:]
            c_left, c_right = c_o[:, :H2], c_o[:, H2:]

            # Left/right share one fc matmul (rows stacked, 8-aligned).
            y = dot(jnp.concatenate([h_left, h_right], axis=0), fc_w) + fc_b

            # fc column layout (see init_params):
            #   [pi(M) | mu1=mu_x,mu_a (2M) | mu2=mu_y,mu_b (2M) | mu_s(M)
            #    | logsig = sig_x,sig_a,sig_y,sig_b,sig_s (5M) | rho_xy,rho_ab (2M) | pen(3)]
            pi_ = jax.nn.softmax(y[:, 0:m], axis=1)
            mu1 = y[:, m:3 * m]
            mu2 = y[:, 3 * m:5 * m]
            mu_s = y[:, 5 * m:6 * m]
            inv_sig = jnp.exp(-y[:, 6 * m:11 * m])   # divide-free: 1/sigma directly
            rho = jnp.tanh(y[:, 11 * m:13 * m])
            q = jax.nn.softmax(y[:, 13 * m:13 * m + 3], axis=1)

            # Four (point, parameter) pairings stacked along rows:
            #   [ (p_l,par_l) ; (p_r,par_r) ; (p_l,par_r) ; (p_r,par_l) ]
            def stack4(a):  # a is (2*npad, k), rows ordered [left; right]
                return jnp.concatenate(
                    [a[:npad], a[npad:], a[npad:], a[:npad]], axis=0)

            P4 = jnp.concatenate([p_l, p_r, p_l, p_r], axis=0)       # (4*npad, 8)
            pi4 = stack4(pi_)
            mu1_4, mu2_4, mus4 = stack4(mu1), stack4(mu2), stack4(mu_s)
            isig4, rho4, q4 = stack4(inv_sig), stack4(rho), stack4(q)

            dx, dy = P4[:, 0:1], P4[:, 1:2]
            da, db, ds = P4[:, 2:3], P4[:, 3:4], P4[:, 4:5]
            pp = P4[:, 5:8]

            # xy and ab bivariate PDFs fused into one 2M-wide pass.
            lane2 = lax.broadcasted_iota(jnp.int32, (4 * npad, 2 * m), 1)
            d1 = jnp.where(lane2 < m, dx, da)
            d2 = jnp.where(lane2 < m, dy, db)
            inv_s1 = isig4[:, 0:2 * m]
            inv_s2 = isig4[:, 2 * m:4 * m]
            inv_ss = isig4[:, 4 * m:5 * m]

            e1 = (d1 - mu1_4) * inv_s1
            e2 = (d2 - mu2_4) * inv_s2
            omr2 = 1.0 - rho4 * rho4
            inv_omr2 = pl.reciprocal(omr2, approx=True)
            Zb = e1 * e1 + e2 * e2 - 2.0 * rho4 * e1 * e2
            pdf12 = jnp.exp(-0.5 * Zb * inv_omr2) * (
                inv_s1 * inv_s2 * lax.rsqrt(omr2) * inv_two_pi)
            es = (ds - mus4) * inv_ss
            pdf_s = jnp.exp(-0.5 * es * es) * (inv_ss * inv_sqrt_two_pi)

            s_xy = jnp.sum(pi4 * pdf12[:, :m], axis=1, keepdims=True)
            s_ab = jnp.sum(pi4 * pdf12[:, m:], axis=1, keepdims=True)
            s_s = jnp.sum(pi4 * pdf_s, axis=1, keepdims=True)

            # Matches the torch reference: 1e-5 guard on mixture sums only,
            # log(q) unguarded, strict '<' for the swap (first-min tie break).
            rl = (-jnp.log(1e-5 + s_xy) - jnp.log(1e-5 + s_ab)
                  - jnp.log(1e-5 + s_s)
                  - jnp.sum(pp * jnp.log(q4), axis=1, keepdims=True))  # (4*npad, 1)

            l_llrr = rl[0 * npad:1 * npad] + rl[1 * npad:2 * npad]
            l_rllr = rl[2 * npad:3 * npad] + rl[3 * npad:4 * npad]

            loss_vec = jnp.minimum(l_llrr, l_rllr) * valid
            total = total + jnp.sum(loss_vec, axis=0, keepdims=True) * (1.0 / ni)

            # Swap left/right child features where the crossed pairing is better,
            # then scatter both children with ONE trans-contraction (indices of
            # children within a level are disjoint).
            swap = l_rllr < l_llrr
            f_left = jnp.concatenate([h_left, c_left], axis=1)
            f_right = jnp.concatenate([h_right, c_right], axis=1)
            ofl = jnp.where(swap, f_right, f_left)
            ofr = jnp.where(swap, f_left, f_right)

            oh_lr = jnp.concatenate([oh_l_l, oh_r_l], axis=0)        # (2*npad, n)
            vals = jnp.concatenate([ofl, ofr], axis=0)               # (2*npad, nf)
            ones_lr = jnp.ones((2 * npad, 1), jnp.float32)
            mask_lr = dot_t(oh_lr, ones_lr)                          # (n, 1)
            feat = feat * (1.0 - mask_lr) + dot_t(oh_lr, vals)

        loss_ref[...] = total * (1.0 / L)

    return kernel


# ----------------------------------------------------------------------------
# Wrapper
# ----------------------------------------------------------------------------
def ae_forward(params, X, Feature, I_list):
    """AE.forward: X (1, n, 8), Feature (1, n, nf), I_list: list of (1, ni, 3) int32."""
    X = X[0]
    Feature = Feature[0]
    n = X.shape[0]
    nf = Feature.shape[1]
    H2 = nf // 2
    nis = tuple(int(it.shape[1]) for it in I_list)
    nis_pad = tuple(_round8(ni) for ni in nis)
    T = sum(nis_pad)

    # Stack levels at cumulative offsets, each padded only to a multiple of 8
    # (-1 index = ignored row).
    blocks = []
    for it, npad in zip(I_list, nis_pad):
        I = it[0].astype(jnp.int32)
        pad = npad - I.shape[0]
        if pad:
            I = jnp.concatenate([I, jnp.full((pad, 3), -1, jnp.int32)], axis=0)
        blocks.append(I)
    idx = jnp.concatenate(blocks, axis=0)        # (T, 3)
    idxl, idxr, idxf = idx[:, 0:1], idx[:, 1:2], idx[:, 2:3]

    # Fused gather operand [X | F0] and kernel-ready weights.
    XF = jnp.concatenate([X, Feature], axis=1)                           # (n, 8+nf)
    enc_w_full = jnp.concatenate(
        [params['enc_w'], jnp.zeros((H2, 4 * H2), jnp.float32)], axis=0)  # c-rows zero
    rnn_w = params['dec_rnn_w']
    rnn_wp = rnn_w[:POS_DIM]
    rnn_wf = rnn_w[POS_DIM:POS_DIM + nf]
    rnn_wh = rnn_w[POS_DIM + nf:]

    # VMEM budget hint (inert for small trees; keeps large trees under the
    # scoped default without exceeding v7x's 64 MiB physical VMEM).
    n_lanes = ((n + 127) // 128) * 128
    onehot_bytes = 3 * T * n_lanes * 4
    compiler_params = None
    if onehot_bytes > (8 << 20):
        compiler_params = pltpu.CompilerParams(
            vmem_limit_bytes=int(min(56 << 20, 2 * onehot_bytes + (8 << 20))))

    kernel = _make_ae_kernel(n_nodes=n, nis=nis, nis_pad=nis_pad,
                             n_feature=nf, m=M)
    loss = pl.pallas_call(
        kernel,
        out_shape=jax.ShapeDtypeStruct((1, 1), jnp.float32),
        in_specs=[_VMEM] * 16,
        out_specs=_VMEM,
        compiler_params=compiler_params,
    )(X, Feature, XF, idxl, idxr, idxf,
      enc_w_full, params['enc_b'],
      params['dec_fch_w'], params['dec_fch_b'],
      rnn_wp, rnn_wf, rnn_wh, params['dec_rnn_b'],
      params['dec_fc_w'], params['dec_fc_b'])
    return loss[0, 0]


# ----------------------------------------------------------------------------
# Pure-JAX reference (same math, original per-level loop structure) — used only
# as a correctness check in __main__.
# ----------------------------------------------------------------------------
def ae_forward_reference(params, X, Feature, I_list):
    X = X[0]
    Feature = Feature[0]
    nf, H2, m = N_FEATURE, N_FEATURE // 2, M
    hp = lax.Precision.HIGHEST

    def dot(a, b):
        return jnp.dot(a, b, precision=hp, preferred_element_type=jnp.float32)

    # encode (reads from the ORIGINAL Feature, as in the torch reference)
    feat_new = Feature
    for item in I_list:
        I = item[0]
        xl, xr = X[I[:, 0]], X[I[:, 1]]
        fl, fr = Feature[I[:, 0]], Feature[I[:, 1]]

        def cell(x, h, c):
            g = dot(jnp.concatenate([x, h], 1), params['enc_w']) + params['enc_b']
            i = jax.nn.sigmoid(g[:, :H2]); f = jax.nn.sigmoid(g[:, H2:2 * H2])
            gg = jnp.tanh(g[:, 2 * H2:3 * H2]); o = jax.nn.sigmoid(g[:, 3 * H2:])
            c2 = f * c + i * gg
            return o * jnp.tanh(c2), c2

        hl, cl = cell(xl, fl[:, :H2], fl[:, H2:])
        hr, cr = cell(xr, fr[:, :H2], fr[:, H2:])
        feat_new = feat_new.at[I[:, 2]].set(jnp.concatenate([hl + hr, cl + cr], 1))

    def get_parameter(y):
        return (jax.nn.softmax(y[:, :m], axis=1),
                y[:, m:3 * m], y[:, 3 * m:5 * m], y[:, 5 * m:6 * m],
                jnp.exp(y[:, 6 * m:11 * m]), jnp.tanh(y[:, 11 * m:13 * m]),
                jax.nn.softmax(y[:, 13 * m:], axis=1))

    def recon(p, par):
        pi_, mu1, mu2, mu_s, sig, rho, q = par
        dx, dy, da, db, ds = (p[:, k:k + 1] for k in range(5))
        pp = p[:, 5:8]
        mu_x, mu_a = mu1[:, :m], mu1[:, m:]
        mu_y, mu_b = mu2[:, :m], mu2[:, m:]
        sx, sa = sig[:, :m], sig[:, m:2 * m]
        sy, sb = sig[:, 2 * m:3 * m], sig[:, 3 * m:4 * m]
        ss = sig[:, 4 * m:5 * m]
        rxy, rab = rho[:, :m], rho[:, m:]
        two_pi = 2.0 * math.pi
        Zxy = ((dx - mu_x) / sx) ** 2 + ((dy - mu_y) / sy) ** 2 \
            - 2 * rxy * (dx - mu_x) * (dy - mu_y) / (sx * sy)
        pdf_xy = jnp.exp(-Zxy / (2 * (1 - rxy ** 2))) / (two_pi * sx * sy * jnp.sqrt(1 - rxy ** 2))
        Zab = ((da - mu_a) / sa) ** 2 + ((db - mu_b) / sb) ** 2 \
            - 2 * rab * (da - mu_a) * (db - mu_b) / (sa * sb)
        pdf_ab = jnp.exp(-Zab / (2 * (1 - rab ** 2))) / (two_pi * sa * sb * jnp.sqrt(1 - rab ** 2))
        pdf_s = jnp.exp(-((ds - mu_s) / ss) ** 2 / 2) / (math.sqrt(two_pi) * ss)
        LS = (-jnp.log(1e-5 + jnp.sum(pi_ * pdf_xy, 1, keepdims=True))
              - jnp.log(1e-5 + jnp.sum(pi_ * pdf_ab, 1, keepdims=True))
              - jnp.log(1e-5 + jnp.sum(pi_ * pdf_s, 1, keepdims=True)))
        return LS - jnp.sum(pp * jnp.log(q), 1, keepdims=True)

    feat = feat_new
    L = len(I_list)
    total = jnp.float32(0.0)
    for i in range(L):
        I = I_list[L - 1 - i][0]
        p_l, p_r, p_fa = X[I[:, 0]], X[I[:, 1]], X[I[:, 2]]
        f_fa = feat[I[:, 2]]
        z = jnp.tanh(dot(f_fa, params['dec_fch_w']) + params['dec_fch_b'])
        h_fa, c_fa = z[:, :nf], z[:, nf:]
        g = dot(jnp.concatenate([p_fa, f_fa, h_fa], 1), params['dec_rnn_w']) + params['dec_rnn_b']
        i_g = jax.nn.sigmoid(g[:, :nf]); f_g = jax.nn.sigmoid(g[:, nf:2 * nf])
        g_g = jnp.tanh(g[:, 2 * nf:3 * nf]); o_g = jax.nn.sigmoid(g[:, 3 * nf:])
        c_o = f_g * c_fa + i_g * g_g
        h_o = o_g * jnp.tanh(c_o)
        h_l, h_r = h_o[:, :H2], h_o[:, H2:]
        c_l, c_r = c_o[:, :H2], c_o[:, H2:]
        par_l = get_parameter(dot(h_l, params['dec_fc_w']) + params['dec_fc_b'])
        par_r = get_parameter(dot(h_r, params['dec_fc_w']) + params['dec_fc_b'])
        l_llrr = recon(p_l, par_l) + recon(p_r, par_r)
        l_rllr = recon(p_l, par_r) + recon(p_r, par_l)
        ni = I.shape[0]
        total = total + jnp.sum(jnp.minimum(l_llrr, l_rllr)) / float(ni)
        swap = l_rllr < l_llrr
        fl_ = jnp.concatenate([h_l, c_l], 1); fr_ = jnp.concatenate([h_r, c_r], 1)
        feat = feat.at[I[:, 0]].set(jnp.where(swap, fr_, fl_))
        feat = feat.at[I[:, 1]].set(jnp.where(swap, fl_, fr_))
    return total / L


# ----------------------------------------------------------------------------
# Deterministic parameter init (PyTorch-style uniform(-1/sqrt(fan), 1/sqrt(fan)))
# Weights are stored pre-transposed [in, out] and K-fused for the kernel.
# ----------------------------------------------------------------------------
def init_params(key, n_feature=N_FEATURE, m=M):
    ks = jax.random.split(key, 12)

    def u(k, shape, fan):
        bound = 1.0 / math.sqrt(fan)
        return jax.random.uniform(k, shape, jnp.float32, -bound, bound)

    H2 = n_feature // 2
    p = {}
    # Encoder LSTMCell(8, nf/2): fused [W_ih; W_hh] -> (8+H2, 4*H2)
    p['enc_w'] = jnp.concatenate([u(ks[0], (POS_DIM, 4 * H2), H2),
                                  u(ks[1], (H2, 4 * H2), H2)], axis=0)
    p['enc_b'] = u(ks[2], (1, 4 * H2), H2) + u(ks[3], (1, 4 * H2), H2)  # b_ih + b_hh
    # Decoder fc_h: Linear(nf, 2*nf)
    p['dec_fch_w'] = u(ks[4], (n_feature, 2 * n_feature), n_feature)
    p['dec_fch_b'] = u(ks[5], (1, 2 * n_feature), n_feature)
    # Decoder LSTMCell(nf+8, nf): fused [W_ih (P rows, F rows); W_hh] -> (8+2*nf, 4*nf)
    p['dec_rnn_w'] = jnp.concatenate(
        [u(ks[6], (POS_DIM + n_feature, 4 * n_feature), n_feature),
         u(ks[7], (n_feature, 4 * n_feature), n_feature)], axis=0)
    p['dec_rnn_b'] = (u(ks[8], (1, 4 * n_feature), n_feature)
                      + u(ks[9], (1, 4 * n_feature), n_feature))
    # Decoder fc: Linear(nf/2, 13*M + 3). Output columns laid out as
    #   [pi(M) | mu_x mu_a (2M) | mu_y mu_b (2M) | mu_slope (M)
    #    | sig_x sig_a sig_y sig_b sig_slope (5M) | rho_xy rho_ab (2M) | pen(3)]
    # so the bivariate-PDF math runs once over 2M-wide lane slabs and exp/tanh
    # each run once over a contiguous region.
    p['dec_fc_w'] = u(ks[10], (H2, 13 * m + 3), H2)
    p['dec_fc_b'] = u(ks[11], (1, 13 * m + 3), H2)
    return p


# ----------------------------------------------------------------------------
if __name__ == "__main__":
    key = jax.random.PRNGKey(0)
    kp, kx, kf = jax.random.split(key, 3)
    params = init_params(kp)

    # Small complete binary tree: 7 nodes (leaves 0..3, internal 4,5, root 6).
    n_nodes = 7
    X = jax.random.normal(kx, (1, n_nodes, POS_DIM), jnp.float32)
    Feature = jax.random.normal(kf, (1, n_nodes, N_FEATURE), jnp.float32)
    I_list = [
        jnp.array([[[0, 1, 4], [2, 3, 5]]], dtype=jnp.int32),  # level 0: (1, 2, 3)
        jnp.array([[[4, 5, 6]]], dtype=jnp.int32),             # level 1: (1, 1, 3)
    ]

    loss = ae_forward(params, X, Feature, I_list)
    loss = jax.block_until_ready(loss)
    assert bool(jnp.isfinite(loss)), "kernel loss is not finite"

    ref = jax.block_until_ready(ae_forward_reference(params, X, Feature, I_list))
    assert bool(jnp.isfinite(ref)), "reference loss is not finite"
    tol = 5e-2 * max(1.0, abs(float(ref)))
    assert abs(float(loss) - float(ref)) <= tol, (float(loss), float(ref))

    print("KERNEL_OK")
</pallas_src>

<mosaic_0001>
module attributes {stable_mosaic.version = 11 : i64} {
  func.func @kernel(%arg0: memref<7x8xf32, #tpu.memory_space<vmem>>, %arg1: memref<7x16xf32, #tpu.memory_space<vmem>>, %arg2: memref<7x24xf32, #tpu.memory_space<vmem>>, %arg3: memref<16x1xi32, #tpu.memory_space<vmem>>, %arg4: memref<16x1xi32, #tpu.memory_space<vmem>>, %arg5: memref<16x1xi32, #tpu.memory_space<vmem>>, %arg6: memref<24x32xf32, #tpu.memory_space<vmem>>, %arg7: memref<1x32xf32, #tpu.memory_space<vmem>>, %arg8: memref<16x32xf32, #tpu.memory_space<vmem>>, %arg9: memref<1x32xf32, #tpu.memory_space<vmem>>, %arg10: memref<8x64xf32, #tpu.memory_space<vmem>>, %arg11: memref<16x64xf32, #tpu.memory_space<vmem>>, %arg12: memref<16x64xf32, #tpu.memory_space<vmem>>, %arg13: memref<1x64xf32, #tpu.memory_space<vmem>>, %arg14: memref<8x263xf32, #tpu.memory_space<vmem>>, %arg15: memref<1x263xf32, #tpu.memory_space<vmem>>, %arg16: memref<1x1xf32, #tpu.memory_space<vmem>>) attributes {dimension_semantics = [], scalar_prefetch = 0 : i64, scratch_operands = 0 : i64, tpu.core_type = #tpu.core_type<tc>} {
    %c0 = arith.constant 0 : index
    %c0_0 = arith.constant 0 : index
    %0 = vector.load %arg0[%c0, %c0_0] : memref<7x8xf32, #tpu.memory_space<vmem>>, vector<7x8xf32>
    %c0_1 = arith.constant 0 : index
    %c0_2 = arith.constant 0 : index
    %1 = vector.load %arg1[%c0_1, %c0_2] : memref<7x16xf32, #tpu.memory_space<vmem>>, vector<7x16xf32>
    %c0_3 = arith.constant 0 : index
    %c0_4 = arith.constant 0 : index
    %2 = vector.load %arg2[%c0_3, %c0_4] : memref<7x24xf32, #tpu.memory_space<vmem>>, vector<7x24xf32>
    %c0_5 = arith.constant 0 : index
    %c0_6 = arith.constant 0 : index
    %3 = vector.load %arg3[%c0_5, %c0_6] : memref<16x1xi32, #tpu.memory_space<vmem>>, vector<16x1xi32>
    %c0_7 = arith.constant 0 : index
    %c0_8 = arith.constant 0 : index
    %4 = vector.load %arg4[%c0_7, %c0_8] : memref<16x1xi32, #tpu.memory_space<vmem>>, vector<16x1xi32>
    %c0_9 = arith.constant 0 : index
    %c0_10 = arith.constant 0 : index
    %5 = vector.load %arg5[%c0_9, %c0_10] : memref<16x1xi32, #tpu.memory_space<vmem>>, vector<16x1xi32>
    %c0_11 = arith.constant 0 : index
    %c0_12 = arith.constant 0 : index
    %6 = vector.load %arg6[%c0_11, %c0_12] : memref<24x32xf32, #tpu.memory_space<vmem>>, vector<24x32xf32>
    %c0_13 = arith.constant 0 : index
    %c0_14 = arith.constant 0 : index
    %7 = vector.load %arg7[%c0_13, %c0_14] : memref<1x32xf32, #tpu.memory_space<vmem>>, vector<1x32xf32>
    %c0_15 = arith.constant 0 : index
    %c0_16 = arith.constant 0 : index
    %8 = vector.load %arg8[%c0_15, %c0_16] : memref<16x32xf32, #tpu.memory_space<vmem>>, vector<16x32xf32>
    %c0_17 = arith.constant 0 : index
    %c0_18 = arith.constant 0 : index
    %9 = vector.load %arg9[%c0_17, %c0_18] : memref<1x32xf32, #tpu.memory_space<vmem>>, vector<1x32xf32>
    %c0_19 = arith.constant 0 : index
    %c0_20 = arith.constant 0 : index
    %10 = vector.load %arg10[%c0_19, %c0_20] : memref<8x64xf32, #tpu.memory_space<vmem>>, vector<8x64xf32>
    %c0_21 = arith.constant 0 : index
    %c0_22 = arith.constant 0 : index
    %11 = vector.load %arg11[%c0_21, %c0_22] : memref<16x64xf32, #tpu.memory_space<vmem>>, vector<16x64xf32>
    %c0_23 = arith.constant 0 : index
    %c0_24 = arith.constant 0 : index
    %12 = vector.load %arg12[%c0_23, %c0_24] : memref<16x64xf32, #tpu.memory_space<vmem>>, vector<16x64xf32>
    %c0_25 = arith.constant 0 : index
    %c0_26 = arith.constant 0 : index
    %13 = vector.load %arg13[%c0_25, %c0_26] : memref<1x64xf32, #tpu.memory_space<vmem>>, vector<1x64xf32>
    %c0_27 = arith.constant 0 : index
    %c0_28 = arith.constant 0 : index
    %14 = vector.load %arg14[%c0_27, %c0_28] : memref<8x263xf32, #tpu.memory_space<vmem>>, vector<8x263xf32>
    %c0_29 = arith.constant 0 : index
    %c0_30 = arith.constant 0 : index
    %15 = vector.load %arg15[%c0_29, %c0_30] : memref<1x263xf32, #tpu.memory_space<vmem>>, vector<1x263xf32>
    %16 = tpu.iota {dimensions = array<i32: 1>} : vector<16x7xi32>
    %17 = vector.broadcast %3 : vector<16x1xi32> to vector<16x7xi32>
    %18 = arith.cmpi eq, %16, %17 : vector<16x7xi32>
    %19 = arith.extui %18 : vector<16x7xi1> to vector<16x7xi32>
    %20 = arith.sitofp %19 : vector<16x7xi32> to vector<16x7xf32>
    %21 = vector.broadcast %4 : vector<16x1xi32> to vector<16x7xi32>
    %22 = arith.cmpi eq, %16, %21 : vector<16x7xi32>
    %23 = arith.extui %22 : vector<16x7xi1> to vector<16x7xi32>
    %24 = arith.sitofp %23 : vector<16x7xi32> to vector<16x7xf32>
    %25 = vector.broadcast %5 : vector<16x1xi32> to vector<16x7xi32>
    %26 = arith.cmpi eq, %16, %25 : vector<16x7xi32>
    %27 = arith.extui %26 : vector<16x7xi1> to vector<16x7xi32>
    %28 = arith.sitofp %27 : vector<16x7xi32> to vector<16x7xf32>
    %cst = arith.constant dense<0.000000e+00> : vector<16x24xf32>
    %29 = tpu.matmul %20, %2, %cst {dimension_numbers = #tpu.dot_dimension_numbers<[1], [0], [0], [1], [0, 0, 1, 1], [], []>} : vector<16x7xf32>, vector<7x24xf32>, vector<16x24xf32> -> vector<16x24xf32>
    %cst_31 = arith.constant dense<0.000000e+00> : vector<16x24xf32>
    %30 = tpu.matmul %24, %2, %cst_31 {dimension_numbers = #tpu.dot_dimension_numbers<[1], [0], [0], [1], [0, 0, 1, 1], [], []>} : vector<16x7xf32>, vector<7x24xf32>, vector<16x24xf32> -> vector<16x24xf32>
    %31 = tpu.concatenate %29, %30 in 0 : vector<16x24xf32>, vector<16x24xf32> -> vector<32x24xf32>
    %cst_32 = arith.constant dense<0.000000e+00> : vector<32x32xf32>
    %32 = tpu.matmul %31, %6, %cst_32 {dimension_numbers = #tpu.dot_dimension_numbers<[1], [0], [0], [1], [0, 0, 1, 1], [], []>} : vector<32x24xf32>, vector<24x32xf32>, vector<32x32xf32> -> vector<32x32xf32>
    %33 = vector.broadcast %7 : vector<1x32xf32> to vector<32x32xf32>
    %34 = arith.addf %32, %33 : vector<32x32xf32>
    %35 = vector.extract_strided_slice %34 {offsets = [0, 0], sizes = [32, 8], strides = [1, 1]} : vector<32x32xf32> to vector<32x8xf32>
    %36 = arith.negf %35 : vector<32x8xf32>
    %37 = math.exp %36 : vector<32x8xf32>
    %cst_33 = arith.constant 1.000000e+00 : f32
    %38 = vector.broadcast %cst_33 : f32 to vector<32x8xf32>
    %39 = arith.addf %38, %37 : vector<32x8xf32>
    %40 = arith.divf %38, %39 : vector<32x8xf32>
    %41 = vector.extract_strided_slice %34 {offsets = [0, 8], sizes = [32, 8], strides = [1, 1]} : vector<32x32xf32> to vector<32x8xf32>
    %42 = arith.negf %41 : vector<32x8xf32>
    %43 = math.exp %42 : vector<32x8xf32>
    %cst_34 = arith.constant 1.000000e+00 : f32
    %44 = vector.broadcast %cst_34 : f32 to vector<32x8xf32>
    %45 = arith.addf %44, %43 : vector<32x8xf32>
    %46 = arith.divf %44, %45 : vector<32x8xf32>
    %47 = vector.extract_strided_slice %34 {offsets = [0, 16], sizes = [32, 8], strides = [1, 1]} : vector<32x32xf32> to vector<32x8xf32>
    %48 = math.tanh %47 : vector<32x8xf32>
    %49 = vector.extract_strided_slice %34 {offsets = [0, 24], sizes = [32, 8], strides = [1, 1]} : vector<32x32xf32> to vector<32x8xf32>
    %50 = arith.negf %49 : vector<32x8xf32>
    %51 = math.exp %50 : vector<32x8xf32>
    %cst_35 = arith.constant 1.000000e+00 : f32
    %52 = vector.broadcast %cst_35 : f32 to vector<32x8xf32>
    %53 = arith.addf %52, %51 : vector<32x8xf32>
    %54 = arith.divf %52, %53 : vector<32x8xf32>
    %55 = vector.extract_strided_slice %31 {offsets = [0, 16], sizes = [32, 8], strides = [1, 1]} : vector<32x24xf32> to vector<32x8xf32>
    %56 = arith.mulf %46, %55 : vector<32x8xf32>
    %57 = arith.mulf %40, %48 : vector<32x8xf32>
    %58 = arith.addf %56, %57 : vector<32x8xf32>
    %59 = math.tanh %58 : vector<32x8xf32>
    %60 = arith.mulf %54, %59 : vector<32x8xf32>
    %61 = vector.extract_strided_slice %60 {offsets = [0, 0], sizes = [16, 8], strides = [1, 1]} : vector<32x8xf32> to vector<16x8xf32>
    %62 = vector.extract_strided_slice %60 {offsets = [16, 0], sizes = [16, 8], strides = [1, 1]} : vector<32x8xf32> to vector<16x8xf32>
    %63 = arith.addf %61, %62 : vector<16x8xf32>
    %64 = vector.extract_strided_slice %58 {offsets = [0, 0], sizes = [16, 8], strides = [1, 1]} : vector<32x8xf32> to vector<16x8xf32>
    %65 = vector.extract_strided_slice %58 {offsets = [16, 0], sizes = [16, 8], strides = [1, 1]} : vector<32x8xf32> to vector<16x8xf32>
    %66 = arith.addf %64, %65 : vector<16x8xf32>
    %67 = tpu.concatenate %63, %66 in 1 : vector<16x8xf32>, vector<16x8xf32> -> vector<16x16xf32>
    %cst_36 = arith.constant 1.000000e+00 : f32
    %68 = vector.broadcast %cst_36 : f32 to vector<16x1xf32>
    %cst_37 = arith.constant dense<0.000000e+00> : vector<7x1xf32>
    %69 = tpu.matmul %28, %68, %cst_37 {dimension_numbers = #tpu.dot_dimension_numbers<[0], [0], [1], [1], [0, 1, 1, 1], [], []>} : vector<16x7xf32>, vector<16x1xf32>, vector<7x1xf32> -> vector<7x1xf32>
    %cst_38 = arith.constant 1.000000e+00 : f32
    %70 = vector.broadcast %cst_38 : f32 to vector<7x1xf32>
    %71 = arith.subf %70, %69 : vector<7x1xf32>
    %72 = vector.broadcast %71 : vector<7x1xf32> to vector<7x16xf32>
    %73 = arith.mulf %1, %72 : vector<7x16xf32>
    %cst_39 = arith.constant dense<0.000000e+00> : vector<7x16xf32>
    %74 = tpu.matmul %28, %67, %cst_39 {dimension_numbers = #tpu.dot_dimension_numbers<[0], [0], [1], [1], [0, 1, 1, 1], [], []>} : vector<16x7xf32>, vector<16x16xf32>, vector<7x16xf32> -> vector<7x16xf32>
    %75 = arith.addf %73, %74 : vector<7x16xf32>
    %cst_40 = arith.constant 0.000000e+00 : f32
    %76 = vector.broadcast %cst_40 : f32 to vector<1x1xf32>
    %77 = vector.extract_strided_slice %28 {offsets = [8, 0], sizes = [8, 7], strides = [1, 1]} : vector<16x7xf32> to vector<8x7xf32>
    %78 = vector.extract_strided_slice %20 {offsets = [8, 0], sizes = [8, 7], strides = [1, 1]} : vector<16x7xf32> to vector<8x7xf32>
    %79 = vector.extract_strided_slice %24 {offsets = [8, 0], sizes = [8, 7], strides = [1, 1]} : vector<16x7xf32> to vector<8x7xf32>
    %80 = vector.extract_strided_slice %5 {offsets = [8, 0], sizes = [8, 1], strides = [1, 1]} : vector<16x1xi32> to vector<8x1xi32>
    %c0_i32 = arith.constant 0 : i32
    %81 = vector.broadcast %c0_i32 : i32 to vector<8x1xi32>
    %82 = arith.cmpi sge, %80, %81 : vector<8x1xi32>
    %83 = arith.extui %82 : vector<8x1xi1> to vector<8x1xi32>
    %84 = arith.sitofp %83 : vector<8x1xi32> to vector<8x1xf32>
    %cst_41 = arith.constant dense<0.000000e+00> : vector<8x16xf32>
    %85 = tpu.matmul %77, %75, %cst_41 {dimension_numbers = #tpu.dot_dimension_numbers<[1], [0], [0], [1], [0, 0, 1, 1], [], []>} : vector<8x7xf32>, vector<7x16xf32>, vector<8x16xf32> -> vector<8x16xf32>
    %cst_42 = arith.constant dense<0.000000e+00> : vector<8x8xf32>
    %86 = tpu.matmul %77, %0, %cst_42 {dimension_numbers = #tpu.dot_dimension_numbers<[1], [0], [0], [1], [0, 0, 1, 1], [], []>} : vector<8x7xf32>, vector<7x8xf32>, vector<8x8xf32> -> vector<8x8xf32>
    %cst_43 = arith.constant dense<0.000000e+00> : vector<8x8xf32>
    %87 = tpu.matmul %78, %0, %cst_43 {dimension_numbers = #tpu.dot_dimension_numbers<[1], [0], [0], [1], [0, 0, 1, 1], [], []>} : vector<8x7xf32>, vector<7x8xf32>, vector<8x8xf32> -> vector<8x8xf32>
    %cst_44 = arith.constant dense<0.000000e+00> : vector<8x8xf32>
    %88 = tpu.matmul %79, %0, %cst_44 {dimension_numbers = #tpu.dot_dimension_numbers<[1], [0], [0], [1], [0, 0, 1, 1], [], []>} : vector<8x7xf32>, vector<7x8xf32>, vector<8x8xf32> -> vector<8x8xf32>
    %cst_45 = arith.constant dense<0.000000e+00> : vector<8x32xf32>
    %89 = tpu.matmul %85, %8, %cst_45 {dimension_numbers = #tpu.dot_dimension_numbers<[1], [0], [0], [1], [0, 0, 1, 1], [], []>} : vector<8x16xf32>, vector<16x32xf32>, vector<8x32xf32> -> vector<8x32xf32>
    %90 = vector.broadcast %9 : vector<1x32xf32> to vector<8x32xf32>
    %91 = arith.addf %89, %90 : vector<8x32xf32>
    %92 = math.tanh %91 : vector<8x32xf32>
    %93 = vector.extract_strided_slice %92 {offsets = [0, 0], sizes = [8, 16], strides = [1, 1]} : vector<8x32xf32> to vector<8x16xf32>
    %94 = vector.extract_strided_slice %92 {offsets = [0, 16], sizes = [8, 16], strides = [1, 1]} : vector<8x32xf32> to vector<8x16xf32>
    %cst_46 = arith.constant dense<0.000000e+00> : vector<8x64xf32>
    %95 = tpu.matmul %86, %10, %cst_46 {dimension_numbers = #tpu.dot_dimension_numbers<[1], [0], [0], [1], [0, 0, 1, 1], [], []>} : vector<8x8xf32>, vector<8x64xf32>, vector<8x64xf32> -> vector<8x64xf32>
    %cst_47 = arith.constant dense<0.000000e+00> : vector<8x64xf32>
    %96 = tpu.matmul %85, %11, %cst_47 {dimension_numbers = #tpu.dot_dimension_numbers<[1], [0], [0], [1], [0, 0, 1, 1], [], []>} : vector<8x16xf32>, vector<16x64xf32>, vector<8x64xf32> -> vector<8x64xf32>
    %97 = arith.addf %95, %96 : vector<8x64xf32>
    %cst_48 = arith.constant dense<0.000000e+00> : vector<8x64xf32>
    %98 = tpu.matmul %93, %12, %cst_48 {dimension_numbers = #tpu.dot_dimension_numbers<[1], [0], [0], [1], [0, 0, 1, 1], [], []>} : vector<8x16xf32>, vector<16x64xf32>, vector<8x64xf32> -> vector<8x64xf32>
    %99 = arith.addf %97, %98 : vector<8x64xf32>
    %100 = vector.broadcast %13 : vector<1x64xf32> to vector<8x64xf32>
    %101 = arith.addf %99, %100 : vector<8x64xf32>
    %102 = vector.extract_strided_slice %101 {offsets = [0, 0], sizes = [8, 16], strides = [1, 1]} : vector<8x64xf32> to vector<8x16xf32>
    %103 = arith.negf %102 : vector<8x16xf32>
    %104 = math.exp %103 : vector<8x16xf32>
    %cst_49 = arith.constant 1.000000e+00 : f32
    %105 = vector.broadcast %cst_49 : f32 to vector<8x16xf32>
    %106 = arith.addf %105, %104 : vector<8x16xf32>
    %107 = arith.divf %105, %106 : vector<8x16xf32>
    %108 = vector.extract_strided_slice %101 {offsets = [0, 16], sizes = [8, 16], strides = [1, 1]} : vector<8x64xf32> to vector<8x16xf32>
    %109 = arith.negf %108 : vector<8x16xf32>
    %110 = math.exp %109 : vector<8x16xf32>
    %cst_50 = arith.constant 1.000000e+00 : f32
    %111 = vector.broadcast %cst_50 : f32 to vector<8x16xf32>
    %112 = arith.addf %111, %110 : vector<8x16xf32>
    %113 = arith.divf %111, %112 : vector<8x16xf32>
    %114 = vector.extract_strided_slice %101 {offsets = [0, 32], sizes = [8, 16], strides = [1, 1]} : vector<8x64xf32> to vector<8x16xf32>
    %115 = math.tanh %114 : vector<8x16xf32>
    %116 = vector.extract_strided_slice %101 {offsets = [0, 48], sizes = [8, 16], strides = [1, 1]} : vector<8x64xf32> to vector<8x16xf32>
    %117 = arith.negf %116 : vector<8x16xf32>
    %118 = math.exp %117 : vector<8x16xf32>
    %cst_51 = arith.constant 1.000000e+00 : f32
    %119 = vector.broadcast %cst_51 : f32 to vector<8x16xf32>
    %120 = arith.addf %119, %118 : vector<8x16xf32>
    %121 = arith.divf %119, %120 : vector<8x16xf32>
    %122 = arith.mulf %113, %94 : vector<8x16xf32>
    %123 = arith.mulf %107, %115 : vector<8x16xf32>
    %124 = arith.addf %122, %123 : vector<8x16xf32>
    %125 = math.tanh %124 : vector<8x16xf32>
    %126 = arith.mulf %121, %125 : vector<8x16xf32>
    %127 = vector.extract_strided_slice %126 {offsets = [0, 0], sizes = [8, 8], strides = [1, 1]} : vector<8x16xf32> to vector<8x8xf32>
    %128 = vector.extract_strided_slice %126 {offsets = [0, 8], sizes = [8, 8], strides = [1, 1]} : vector<8x16xf32> to vector<8x8xf32>
    %129 = vector.extract_strided_slice %124 {offsets = [0, 0], sizes = [8, 8], strides = [1, 1]} : vector<8x16xf32> to vector<8x8xf32>
    %130 = vector.extract_strided_slice %124 {offsets = [0, 8], sizes = [8, 8], strides = [1, 1]} : vector<8x16xf32> to vector<8x8xf32>
    %131 = tpu.concatenate %127, %128 in 0 : vector<8x8xf32>, vector<8x8xf32> -> vector<16x8xf32>
    %cst_52 = arith.constant dense<0.000000e+00> : vector<16x263xf32>
    %132 = tpu.matmul %131, %14, %cst_52 {dimension_numbers = #tpu.dot_dimension_numbers<[1], [0], [0], [1], [0, 0, 1, 1], [], []>} : vector<16x8xf32>, vector<8x263xf32>, vector<16x263xf32> -> vector<16x263xf32>
    %133 = vector.broadcast %15 : vector<1x263xf32> to vector<16x263xf32>
    %134 = arith.addf %132, %133 : vector<16x263xf32>
    %135 = vector.extract_strided_slice %134 {offsets = [0, 0], sizes = [16, 20], strides = [1, 1]} : vector<16x263xf32> to vector<16x20xf32>
    %cst_53 = arith.constant dense<0xFF800000> : vector<16xf32>
    %136 = vector.multi_reduction <maximumf>, %135, %cst_53 [1] : vector<16x20xf32> to vector<16xf32>
    %cst_54 = arith.constant 0xFF800000 : f32
    %137 = vector.broadcast %cst_54 : f32 to vector<16xf32>
    %138 = arith.maximumf %137, %136 : vector<16xf32>
    %139 = vector.shape_cast %138 : vector<16xf32> to vector<16x1xf32>
    %140 = vector.broadcast %139 : vector<16x1xf32> to vector<16x20xf32>
    %141 = arith.subf %135, %140 : vector<16x20xf32>
    %142 = math.exp %141 : vector<16x20xf32>
    %cst_55 = arith.constant dense<0.000000e+00> : vector<16xf32>
    %143 = vector.multi_reduction <add>, %142, %cst_55 [1] : vector<16x20xf32> to vector<16xf32>
    %144 = vector.shape_cast %143 : vector<16xf32> to vector<16x1xf32>
    %145 = vector.broadcast %144 : vector<16x1xf32> to vector<16x20xf32>
    %146 = arith.divf %142, %145 : vector<16x20xf32>
    %147 = vector.extract_strided_slice %134 {offsets = [0, 20], sizes = [16, 40], strides = [1, 1]} : vector<16x263xf32> to vector<16x40xf32>
    %148 = vector.extract_strided_slice %134 {offsets = [0, 60], sizes = [16, 40], strides = [1, 1]} : vector<16x263xf32> to vector<16x40xf32>
    %149 = vector.extract_strided_slice %134 {offsets = [0, 100], sizes = [16, 20], strides = [1, 1]} : vector<16x263xf32> to vector<16x20xf32>
    %150 = vector.extract_strided_slice %134 {offsets = [0, 120], sizes = [16, 100], strides = [1, 1]} : vector<16x263xf32> to vector<16x100xf32>
    %cst_56 = arith.constant 0.000000e+00 : f32
    %151 = vector.broadcast %cst_56 : f32 to vector<16x100xf32>
    %152 = arith.subf %151, %150 : vector<16x100xf32>
    %153 = math.exp %152 : vector<16x100xf32>
    %154 = vector.extract_strided_slice %134 {offsets = [0, 220], sizes = [16, 40], strides = [1, 1]} : vector<16x263xf32> to vector<16x40xf32>
    %155 = math.tanh %154 : vector<16x40xf32>
    %156 = vector.extract_strided_slice %134 {offsets = [0, 260], sizes = [16, 3], strides = [1, 1]} : vector<16x263xf32> to vector<16x3xf32>
    %cst_57 = arith.constant dense<0xFF800000> : vector<16xf32>
    %157 = vector.multi_reduction <maximumf>, %156, %cst_57 [1] : vector<16x3xf32> to vector<16xf32>
    %cst_58 = arith.constant 0xFF800000 : f32
    %158 = vector.broadcast %cst_58 : f32 to vector<16xf32>
    %159 = arith.maximumf %158, %157 : vector<16xf32>
    %160 = vector.shape_cast %159 : vector<16xf32> to vector<16x1xf32>
    %161 = vector.broadcast %160 : vector<16x1xf32> to vector<16x3xf32>
    %162 = arith.subf %156, %161 : vector<16x3xf32>
    %163 = math.exp %162 : vector<16x3xf32>
    %cst_59 = arith.constant dense<0.000000e+00> : vector<16xf32>
    %164 = vector.multi_reduction <add>, %163, %cst_59 [1] : vector<16x3xf32> to vector<16xf32>
    %165 = vector.shape_cast %164 : vector<16xf32> to vector<16x1xf32>
    %166 = vector.broadcast %165 : vector<16x1xf32> to vector<16x3xf32>
    %167 = arith.divf %163, %166 : vector<16x3xf32>
    %168 = tpu.concatenate %87, %88, %87, %88 in 0 : vector<8x8xf32>, vector<8x8xf32>, vector<8x8xf32>, vector<8x8xf32> -> vector<32x8xf32>
    %169 = vector.extract_strided_slice %146 {offsets = [0, 0], sizes = [8, 20], strides = [1, 1]} : vector<16x20xf32> to vector<8x20xf32>
    %170 = vector.extract_strided_slice %146 {offsets = [8, 0], sizes = [8, 20], strides = [1, 1]} : vector<16x20xf32> to vector<8x20xf32>
    %171 = vector.extract_strided_slice %146 {offsets = [8, 0], sizes = [8, 20], strides = [1, 1]} : vector<16x20xf32> to vector<8x20xf32>
    %172 = vector.extract_strided_slice %146 {offsets = [0, 0], sizes = [8, 20], strides = [1, 1]} : vector<16x20xf32> to vector<8x20xf32>
    %173 = tpu.concatenate %169, %170, %171, %172 in 0 : vector<8x20xf32>, vector<8x20xf32>, vector<8x20xf32>, vector<8x20xf32> -> vector<32x20xf32>
    %174 = vector.extract_strided_slice %147 {offsets = [0, 0], sizes = [8, 40], strides = [1, 1]} : vector<16x40xf32> to vector<8x40xf32>
    %175 = vector.extract_strided_slice %147 {offsets = [8, 0], sizes = [8, 40], strides = [1, 1]} : vector<16x40xf32> to vector<8x40xf32>
    %176 = vector.extract_strided_slice %147 {offsets = [8, 0], sizes = [8, 40], strides = [1, 1]} : vector<16x40xf32> to vector<8x40xf32>
    %177 = vector.extract_strided_slice %147 {offsets = [0, 0], sizes = [8, 40], strides = [1, 1]} : vector<16x40xf32> to vector<8x40xf32>
    %178 = tpu.concatenate %174, %175, %176, %177 in 0 : vector<8x40xf32>, vector<8x40xf32>, vector<8x40xf32>, vector<8x40xf32> -> vector<32x40xf32>
    %179 = vector.extract_strided_slice %148 {offsets = [0, 0], sizes = [8, 40], strides = [1, 1]} : vector<16x40xf32> to vector<8x40xf32>
    %180 = vector.extract_strided_slice %148 {offsets = [8, 0], sizes = [8, 40], strides = [1, 1]} : vector<16x40xf32> to vector<8x40xf32>
    %181 = vector.extract_strided_slice %148 {offsets = [8, 0], sizes = [8, 40], strides = [1, 1]} : vector<16x40xf32> to vector<8x40xf32>
    %182 = vector.extract_strided_slice %148 {offsets = [0, 0], sizes = [8, 40], strides = [1, 1]} : vector<16x40xf32> to vector<8x40xf32>
    %183 = tpu.concatenate %179, %180, %181, %182 in 0 : vector<8x40xf32>, vector<8x40xf32>, vector<8x40xf32>, vector<8x40xf32> -> vector<32x40xf32>
    %184 = vector.extract_strided_slice %149 {offsets = [0, 0], sizes = [8, 20], strides = [1, 1]} : vector<16x20xf32> to vector<8x20xf32>
    %185 = vector.extract_strided_slice %149 {offsets = [8, 0], sizes = [8, 20], strides = [1, 1]} : vector<16x20xf32> to vector<8x20xf32>
    %186 = vector.extract_strided_slice %149 {offsets = [8, 0], sizes = [8, 20], strides = [1, 1]} : vector<16x20xf32> to vector<8x20xf32>
    %187 = vector.extract_strided_slice %149 {offsets = [0, 0], sizes = [8, 20], strides = [1, 1]} : vector<16x20xf32> to vector<8x20xf32>
    %188 = tpu.concatenate %184, %185, %186, %187 in 0 : vector<8x20xf32>, vector<8x20xf32>, vector<8x20xf32>, vector<8x20xf32> -> vector<32x20xf32>
    %189 = vector.extract_strided_slice %153 {offsets = [0, 0], sizes = [8, 100], strides = [1, 1]} : vector<16x100xf32> to vector<8x100xf32>
    %190 = vector.extract_strided_slice %153 {offsets = [8, 0], sizes = [8, 100], strides = [1, 1]} : vector<16x100xf32> to vector<8x100xf32>
    %191 = vector.extract_strided_slice %153 {offsets = [8, 0], sizes = [8, 100], strides = [1, 1]} : vector<16x100xf32> to vector<8x100xf32>
    %192 = vector.extract_strided_slice %153 {offsets = [0, 0], sizes = [8, 100], strides = [1, 1]} : vector<16x100xf32> to vector<8x100xf32>
    %193 = tpu.concatenate %189, %190, %191, %192 in 0 : vector<8x100xf32>, vector<8x100xf32>, vector<8x100xf32>, vector<8x100xf32> -> vector<32x100xf32>
    %194 = vector.extract_strided_slice %155 {offsets = [0, 0], sizes = [8, 40], strides = [1, 1]} : vector<16x40xf32> to vector<8x40xf32>
    %195 = vector.extract_strided_slice %155 {offsets = [8, 0], sizes = [8, 40], strides = [1, 1]} : vector<16x40xf32> to vector<8x40xf32>
    %196 = vector.extract_strided_slice %155 {offsets = [8, 0], sizes = [8, 40], strides = [1, 1]} : vector<16x40xf32> to vector<8x40xf32>
    %197 = vector.extract_strided_slice %155 {offsets = [0, 0], sizes = [8, 40], strides = [1, 1]} : vector<16x40xf32> to vector<8x40xf32>
    %198 = tpu.concatenate %194, %195, %196, %197 in 0 : vector<8x40xf32>, vector<8x40xf32>, vector<8x40xf32>, vector<8x40xf32> -> vector<32x40xf32>
    %199 = vector.extract_strided_slice %167 {offsets = [0, 0], sizes = [8, 3], strides = [1, 1]} : vector<16x3xf32> to vector<8x3xf32>
    %200 = vector.extract_strided_slice %167 {offsets = [8, 0], sizes = [8, 3], strides = [1, 1]} : vector<16x3xf32> to vector<8x3xf32>
    %201 = vector.extract_strided_slice %167 {offsets = [8, 0], sizes = [8, 3], strides = [1, 1]} : vector<16x3xf32> to vector<8x3xf32>
    %202 = vector.extract_strided_slice %167 {offsets = [0, 0], sizes = [8, 3], strides = [1, 1]} : vector<16x3xf32> to vector<8x3xf32>
    %203 = tpu.concatenate %199, %200, %201, %202 in 0 : vector<8x3xf32>, vector<8x3xf32>, vector<8x3xf32>, vector<8x3xf32> -> vector<32x3xf32>
    %204 = vector.extract_strided_slice %168 {offsets = [0, 0], sizes = [32, 1], strides = [1, 1]} : vector<32x8xf32> to vector<32x1xf32>
    %205 = vector.extract_strided_slice %168 {offsets = [0, 1], sizes = [32, 1], strides = [1, 1]} : vector<32x8xf32> to vector<32x1xf32>
    %206 = vector.extract_strided_slice %168 {offsets = [0, 2], sizes = [32, 1], strides = [1, 1]} : vector<32x8xf32> to vector<32x1xf32>
    %207 = vector.extract_strided_slice %168 {offsets = [0, 3], sizes = [32, 1], strides = [1, 1]} : vector<32x8xf32> to vector<32x1xf32>
    %208 = vector.extract_strided_slice %168 {offsets = [0, 4], sizes = [32, 1], strides = [1, 1]} : vector<32x8xf32> to vector<32x1xf32>
    %209 = vector.extract_strided_slice %168 {offsets = [0, 5], sizes = [32, 3], strides = [1, 1]} : vector<32x8xf32> to vector<32x3xf32>
    %210 = tpu.iota {dimensions = array<i32: 1>} : vector<32x40xi32>
    %c20_i32 = arith.constant 20 : i32
    %211 = vector.broadcast %c20_i32 : i32 to vector<32x40xi32>
    %212 = arith.cmpi slt, %210, %211 : vector<32x40xi32>
    %213 = vector.shape_cast %204 : vector<32x1xf32> to vector<32x1xf32>
    %214 = vector.broadcast %213 : vector<32x1xf32> to vector<32x40xf32>
    %215 = vector.shape_cast %206 : vector<32x1xf32> to vector<32x1xf32>
    %216 = vector.broadcast %215 : vector<32x1xf32> to vector<32x40xf32>
    %217 = arith.select %212, %214, %216 : vector<32x40xi1>, vector<32x40xf32>
    %c20_i32_60 = arith.constant 20 : i32
    %218 = vector.broadcast %c20_i32_60 : i32 to vector<32x40xi32>
    %219 = arith.cmpi slt, %210, %218 : vector<32x40xi32>
    %220 = vector.shape_cast %205 : vector<32x1xf32> to vector<32x1xf32>
    %221 = vector.broadcast %220 : vector<32x1xf32> to vector<32x40xf32>
    %222 = vector.shape_cast %207 : vector<32x1xf32> to vector<32x1xf32>
    %223 = vector.broadcast %222 : vector<32x1xf32> to vector<32x40xf32>
    %224 = arith.select %219, %221, %223 : vector<32x40xi1>, vector<32x40xf32>
    %225 = vector.extract_strided_slice %193 {offsets = [0, 0], sizes = [32, 40], strides = [1, 1]} : vector<32x100xf32> to vector<32x40xf32>
    %226 = vector.extract_strided_slice %193 {offsets = [0, 40], sizes = [32, 40], strides = [1, 1]} : vector<32x100xf32> to vector<32x40xf32>
    %227 = vector.extract_strided_slice %193 {offsets = [0, 80], sizes = [32, 20], strides = [1, 1]} : vector<32x100xf32> to vector<32x20xf32>
    %228 = arith.subf %217, %178 : vector<32x40xf32>
    %229 = arith.mulf %228, %225 : vector<32x40xf32>
    %230 = arith.subf %224, %183 : vector<32x40xf32>
    %231 = arith.mulf %230, %226 : vector<32x40xf32>
    %232 = arith.mulf %198, %198 : vector<32x40xf32>
    %cst_61 = arith.constant 1.000000e+00 : f32
    %233 = vector.broadcast %cst_61 : f32 to vector<32x40xf32>
    %234 = arith.subf %233, %232 : vector<32x40xf32>
    %235 = tpu.reciprocal %234 {approx = true} : vector<32x40xf32> -> vector<32x40xf32>
    %236 = arith.mulf %229, %229 : vector<32x40xf32>
    %237 = arith.mulf %231, %231 : vector<32x40xf32>
    %238 = arith.addf %236, %237 : vector<32x40xf32>
    %cst_62 = arith.constant 2.000000e+00 : f32
    %239 = vector.broadcast %cst_62 : f32 to vector<32x40xf32>
    %240 = arith.mulf %239, %198 : vector<32x40xf32>
    %241 = arith.mulf %240, %229 : vector<32x40xf32>
    %242 = arith.mulf %241, %231 : vector<32x40xf32>
    %243 = arith.subf %238, %242 : vector<32x40xf32>
    %cst_63 = arith.constant -5.000000e-01 : f32
    %244 = vector.broadcast %cst_63 : f32 to vector<32x40xf32>
    %245 = arith.mulf %244, %243 : vector<32x40xf32>
    %246 = arith.mulf %245, %235 : vector<32x40xf32>
    %247 = math.exp %246 : vector<32x40xf32>
    %248 = arith.mulf %225, %226 : vector<32x40xf32>
    %249 = math.rsqrt %234 : vector<32x40xf32>
    %250 = arith.mulf %248, %249 : vector<32x40xf32>
    %cst_64 = arith.constant 0.159154937 : f32
    %251 = vector.broadcast %cst_64 : f32 to vector<32x40xf32>
    %252 = arith.mulf %250, %251 : vector<32x40xf32>
    %253 = arith.mulf %247, %252 : vector<32x40xf32>
    %254 = vector.broadcast %208 : vector<32x1xf32> to vector<32x20xf32>
    %255 = arith.subf %254, %188 : vector<32x20xf32>
    %256 = arith.mulf %255, %227 : vector<32x20xf32>
    %cst_65 = arith.constant -5.000000e-01 : f32
    %257 = vector.broadcast %cst_65 : f32 to vector<32x20xf32>
    %258 = arith.mulf %257, %256 : vector<32x20xf32>
    %259 = arith.mulf %258, %256 : vector<32x20xf32>
    %260 = math.exp %259 : vector<32x20xf32>
    %cst_66 = arith.constant 0.398942292 : f32
    %261 = vector.broadcast %cst_66 : f32 to vector<32x20xf32>
    %262 = arith.mulf %227, %261 : vector<32x20xf32>
    %263 = arith.mulf %260, %262 : vector<32x20xf32>
    %264 = vector.extract_strided_slice %253 {offsets = [0, 0], sizes = [32, 20], strides = [1, 1]} : vector<32x40xf32> to vector<32x20xf32>
    %265 = arith.mulf %173, %264 : vector<32x20xf32>
    %cst_67 = arith.constant dense<0.000000e+00> : vector<32xf32>
    %266 = vector.multi_reduction <add>, %265, %cst_67 [1] : vector<32x20xf32> to vector<32xf32>
    %267 = vector.shape_cast %266 : vector<32xf32> to vector<32x1xf32>
    %268 = vector.extract_strided_slice %253 {offsets = [0, 20], sizes = [32, 20], strides = [1, 1]} : vector<32x40xf32> to vector<32x20xf32>
    %269 = arith.mulf %173, %268 : vector<32x20xf32>
    %cst_68 = arith.constant dense<0.000000e+00> : vector<32xf32>
    %270 = vector.multi_reduction <add>, %269, %cst_68 [1] : vector<32x20xf32> to vector<32xf32>
    %271 = vector.shape_cast %270 : vector<32xf32> to vector<32x1xf32>
    %272 = arith.mulf %173, %263 : vector<32x20xf32>
    %cst_69 = arith.constant dense<0.000000e+00> : vector<32xf32>
    %273 = vector.multi_reduction <add>, %272, %cst_69 [1] : vector<32x20xf32> to vector<32xf32>
    %274 = vector.shape_cast %273 : vector<32xf32> to vector<32x1xf32>
    %cst_70 = arith.constant 9.99999974E-6 : f32
    %275 = vector.broadcast %cst_70 : f32 to vector<32x1xf32>
    %276 = arith.addf %275, %267 : vector<32x1xf32>
    %277 = math.log %276 : vector<32x1xf32>
    %cst_71 = arith.constant 0.000000e+00 : f32
    %278 = vector.broadcast %cst_71 : f32 to vector<32x1xf32>
    %279 = arith.subf %278, %277 : vector<32x1xf32>
    %cst_72 = arith.constant 9.99999974E-6 : f32
    %280 = vector.broadcast %cst_72 : f32 to vector<32x1xf32>
    %281 = arith.addf %280, %271 : vector<32x1xf32>
    %282 = math.log %281 : vector<32x1xf32>
    %283 = arith.subf %279, %282 : vector<32x1xf32>
    %cst_73 = arith.constant 9.99999974E-6 : f32
    %284 = vector.broadcast %cst_73 : f32 to vector<32x1xf32>
    %285 = arith.addf %284, %274 : vector<32x1xf32>
    %286 = math.log %285 : vector<32x1xf32>
    %287 = arith.subf %283, %286 : vector<32x1xf32>
    %288 = math.log %203 : vector<32x3xf32>
    %289 = arith.mulf %209, %288 : vector<32x3xf32>
    %cst_74 = arith.constant dense<0.000000e+00> : vector<32xf32>
    %290 = vector.multi_reduction <add>, %289, %cst_74 [1] : vector<32x3xf32> to vector<32xf32>
    %291 = vector.shape_cast %290 : vector<32xf32> to vector<32x1xf32>
    %292 = arith.subf %287, %291 : vector<32x1xf32>
    %293 = vector.extract_strided_slice %292 {offsets = [0, 0], sizes = [8, 1], strides = [1, 1]} : vector<32x1xf32> to vector<8x1xf32>
    %294 = vector.extract_strided_slice %292 {offsets = [8, 0], sizes = [8, 1], strides = [1, 1]} : vector<32x1xf32> to vector<8x1xf32>
    %295 = arith.addf %293, %294 : vector<8x1xf32>
    %296 = vector.extract_strided_slice %292 {offsets = [16, 0], sizes = [8, 1], strides = [1, 1]} : vector<32x1xf32> to vector<8x1xf32>
    %297 = vector.extract_strided_slice %292 {offsets = [24, 0], sizes = [8, 1], strides = [1, 1]} : vector<32x1xf32> to vector<8x1xf32>
    %298 = arith.addf %296, %297 : vector<8x1xf32>
    %299 = arith.minimumf %295, %298 : vector<8x1xf32>
    %300 = arith.mulf %299, %84 : vector<8x1xf32>
    %cst_75 = arith.constant dense<0.000000e+00> : vector<1xf32>
    %301 = vector.multi_reduction <add>, %300, %cst_75 [0] : vector<8x1xf32> to vector<1xf32>
    %302 = vector.shape_cast %301 : vector<1xf32> to vector<1x1xf32>
    %cst_76 = arith.constant 1.000000e+00 : f32
    %303 = vector.broadcast %cst_76 : f32 to vector<1x1xf32>
    %304 = arith.mulf %302, %303 : vector<1x1xf32>
    %305 = arith.addf %76, %304 : vector<1x1xf32>
    %306 = arith.cmpf olt, %298, %295 : vector<8x1xf32>
    %307 = tpu.concatenate %127, %129 in 1 : vector<8x8xf32>, vector<8x8xf32> -> vector<8x16xf32>
    %308 = tpu.concatenate %128, %130 in 1 : vector<8x8xf32>, vector<8x8xf32> -> vector<8x16xf32>
    %309 = vector.shape_cast %306 : vector<8x1xi1> to vector<8x1xi1>
    %310 = vector.broadcast %309 : vector<8x1xi1> to vector<8x16xi1>
    %311 = arith.select %310, %308, %307 : vector<8x16xi1>, vector<8x16xf32>
    %312 = vector.shape_cast %306 : vector<8x1xi1> to vector<8x1xi1>
    %313 = vector.broadcast %312 : vector<8x1xi1> to vector<8x16xi1>
    %314 = arith.select %313, %307, %308 : vector<8x16xi1>, vector<8x16xf32>
    %315 = tpu.concatenate %78, %79 in 0 : vector<8x7xf32>, vector<8x7xf32> -> vector<16x7xf32>
    %316 = tpu.concatenate %311, %314 in 0 : vector<8x16xf32>, vector<8x16xf32> -> vector<16x16xf32>
    %cst_77 = arith.constant 1.000000e+00 : f32
    %317 = vector.broadcast %cst_77 : f32 to vector<16x1xf32>
    %cst_78 = arith.constant dense<0.000000e+00> : vector<7x1xf32>
    %318 = tpu.matmul %315, %317, %cst_78 {dimension_numbers = #tpu.dot_dimension_numbers<[0], [0], [1], [1], [0, 1, 1, 1], [], []>} : vector<16x7xf32>, vector<16x1xf32>, vector<7x1xf32> -> vector<7x1xf32>
    %cst_79 = arith.constant 1.000000e+00 : f32
    %319 = vector.broadcast %cst_79 : f32 to vector<7x1xf32>
    %320 = arith.subf %319, %318 : vector<7x1xf32>
    %321 = vector.broadcast %320 : vector<7x1xf32> to vector<7x16xf32>
    %322 = arith.mulf %75, %321 : vector<7x16xf32>
    %cst_80 = arith.constant dense<0.000000e+00> : vector<7x16xf32>
    %323 = tpu.matmul %315, %316, %cst_80 {dimension_numbers = #tpu.dot_dimension_numbers<[0], [0], [1], [1], [0, 1, 1, 1], [], []>} : vector<16x7xf32>, vector<16x16xf32>, vector<7x16xf32> -> vector<7x16xf32>
    %324 = arith.addf %322, %323 : vector<7x16xf32>
    %325 = vector.extract_strided_slice %28 {offsets = [0, 0], sizes = [8, 7], strides = [1, 1]} : vector<16x7xf32> to vector<8x7xf32>
    %326 = vector.extract_strided_slice %20 {offsets = [0, 0], sizes = [8, 7], strides = [1, 1]} : vector<16x7xf32> to vector<8x7xf32>
    %327 = vector.extract_strided_slice %24 {offsets = [0, 0], sizes = [8, 7], strides = [1, 1]} : vector<16x7xf32> to vector<8x7xf32>
    %328 = vector.extract_strided_slice %5 {offsets = [0, 0], sizes = [8, 1], strides = [1, 1]} : vector<16x1xi32> to vector<8x1xi32>
    %c0_i32_81 = arith.constant 0 : i32
    %329 = vector.broadcast %c0_i32_81 : i32 to vector<8x1xi32>
    %330 = arith.cmpi sge, %328, %329 : vector<8x1xi32>
    %331 = arith.extui %330 : vector<8x1xi1> to vector<8x1xi32>
    %332 = arith.sitofp %331 : vector<8x1xi32> to vector<8x1xf32>
    %cst_82 = arith.constant dense<0.000000e+00> : vector<8x16xf32>
    %333 = tpu.matmul %325, %324, %cst_82 {dimension_numbers = #tpu.dot_dimension_numbers<[1], [0], [0], [1], [0, 0, 1, 1], [], []>} : vector<8x7xf32>, vector<7x16xf32>, vector<8x16xf32> -> vector<8x16xf32>
    %cst_83 = arith.constant dense<0.000000e+00> : vector<8x8xf32>
    %334 = tpu.matmul %325, %0, %cst_83 {dimension_numbers = #tpu.dot_dimension_numbers<[1], [0], [0], [1], [0, 0, 1, 1], [], []>} : vector<8x7xf32>, vector<7x8xf32>, vector<8x8xf32> -> vector<8x8xf32>
    %cst_84 = arith.constant dense<0.000000e+00> : vector<8x8xf32>
    %335 = tpu.matmul %326, %0, %cst_84 {dimension_numbers = #tpu.dot_dimension_numbers<[1], [0], [0], [1], [0, 0, 1, 1], [], []>} : vector<8x7xf32>, vector<7x8xf32>, vector<8x8xf32> -> vector<8x8xf32>
    %cst_85 = arith.constant dense<0.000000e+00> : vector<8x8xf32>
    %336 = tpu.matmul %327, %0, %cst_85 {dimension_numbers = #tpu.dot_dimension_numbers<[1], [0], [0], [1], [0, 0, 1, 1], [], []>} : vector<8x7xf32>, vector<7x8xf32>, vector<8x8xf32> -> vector<8x8xf32>
    %cst_86 = arith.constant dense<0.000000e+00> : vector<8x32xf32>
    %337 = tpu.matmul %333, %8, %cst_86 {dimension_numbers = #tpu.dot_dimension_numbers<[1], [0], [0], [1], [0, 0, 1, 1], [], []>} : vector<8x16xf32>, vector<16x32xf32>, vector<8x32xf32> -> vector<8x32xf32>
    %338 = vector.broadcast %9 : vector<1x32xf32> to vector<8x32xf32>
    %339 = arith.addf %337, %338 : vector<8x32xf32>
    %340 = math.tanh %339 : vector<8x32xf32>
    %341 = vector.extract_strided_slice %340 {offsets = [0, 0], sizes = [8, 16], strides = [1, 1]} : vector<8x32xf32> to vector<8x16xf32>
    %342 = vector.extract_strided_slice %340 {offsets = [0, 16], sizes = [8, 16], strides = [1, 1]} : vector<8x32xf32> to vector<8x16xf32>
    %cst_87 = arith.constant dense<0.000000e+00> : vector<8x64xf32>
    %343 = tpu.matmul %334, %10, %cst_87 {dimension_numbers = #tpu.dot_dimension_numbers<[1], [0], [0], [1], [0, 0, 1, 1], [], []>} : vector<8x8xf32>, vector<8x64xf32>, vector<8x64xf32> -> vector<8x64xf32>
    %cst_88 = arith.constant dense<0.000000e+00> : vector<8x64xf32>
    %344 = tpu.matmul %333, %11, %cst_88 {dimension_numbers = #tpu.dot_dimension_numbers<[1], [0], [0], [1], [0, 0, 1, 1], [], []>} : vector<8x16xf32>, vector<16x64xf32>, vector<8x64xf32> -> vector<8x64xf32>
    %345 = arith.addf %343, %344 : vector<8x64xf32>
    %cst_89 = arith.constant dense<0.000000e+00> : vector<8x64xf32>
    %346 = tpu.matmul %341, %12, %cst_89 {dimension_numbers = #tpu.dot_dimension_numbers<[1], [0], [0], [1], [0, 0, 1, 1], [], []>} : vector<8x16xf32>, vector<16x64xf32>, vector<8x64xf32> -> vector<8x64xf32>
    %347 = arith.addf %345, %346 : vector<8x64xf32>
    %348 = vector.broadcast %13 : vector<1x64xf32> to vector<8x64xf32>
    %349 = arith.addf %347, %348 : vector<8x64xf32>
    %350 = vector.extract_strided_slice %349 {offsets = [0, 0], sizes = [8, 16], strides = [1, 1]} : vector<8x64xf32> to vector<8x16xf32>
    %351 = arith.negf %350 : vector<8x16xf32>
    %352 = math.exp %351 : vector<8x16xf32>
    %cst_90 = arith.constant 1.000000e+00 : f32
    %353 = vector.broadcast %cst_90 : f32 to vector<8x16xf32>
    %354 = arith.addf %353, %352 : vector<8x16xf32>
    %355 = arith.divf %353, %354 : vector<8x16xf32>
    %356 = vector.extract_strided_slice %349 {offsets = [0, 16], sizes = [8, 16], strides = [1, 1]} : vector<8x64xf32> to vector<8x16xf32>
    %357 = arith.negf %356 : vector<8x16xf32>
    %358 = math.exp %357 : vector<8x16xf32>
    %cst_91 = arith.constant 1.000000e+00 : f32
    %359 = vector.broadcast %cst_91 : f32 to vector<8x16xf32>
    %360 = arith.addf %359, %358 : vector<8x16xf32>
    %361 = arith.divf %359, %360 : vector<8x16xf32>
    %362 = vector.extract_strided_slice %349 {offsets = [0, 32], sizes = [8, 16], strides = [1, 1]} : vector<8x64xf32> to vector<8x16xf32>
    %363 = math.tanh %362 : vector<8x16xf32>
    %364 = vector.extract_strided_slice %349 {offsets = [0, 48], sizes = [8, 16], strides = [1, 1]} : vector<8x64xf32> to vector<8x16xf32>
    %365 = arith.negf %364 : vector<8x16xf32>
    %366 = math.exp %365 : vector<8x16xf32>
    %cst_92 = arith.constant 1.000000e+00 : f32
    %367 = vector.broadcast %cst_92 : f32 to vector<8x16xf32>
    %368 = arith.addf %367, %366 : vector<8x16xf32>
    %369 = arith.divf %367, %368 : vector<8x16xf32>
    %370 = arith.mulf %361, %342 : vector<8x16xf32>
    %371 = arith.mulf %355, %363 : vector<8x16xf32>
    %372 = arith.addf %370, %371 : vector<8x16xf32>
    %373 = math.tanh %372 : vector<8x16xf32>
    %374 = arith.mulf %369, %373 : vector<8x16xf32>
    %375 = vector.extract_strided_slice %374 {offsets = [0, 0], sizes = [8, 8], strides = [1, 1]} : vector<8x16xf32> to vector<8x8xf32>
    %376 = vector.extract_strided_slice %374 {offsets = [0, 8], sizes = [8, 8], strides = [1, 1]} : vector<8x16xf32> to vector<8x8xf32>
    %377 = tpu.concatenate %375, %376 in 0 : vector<8x8xf32>, vector<8x8xf32> -> vector<16x8xf32>
    %cst_93 = arith.constant dense<0.000000e+00> : vector<16x263xf32>
    %378 = tpu.matmul %377, %14, %cst_93 {dimension_numbers = #tpu.dot_dimension_numbers<[1], [0], [0], [1], [0, 0, 1, 1], [], []>} : vector<16x8xf32>, vector<8x263xf32>, vector<16x263xf32> -> vector<16x263xf32>
    %379 = vector.broadcast %15 : vector<1x263xf32> to vector<16x263xf32>
    %380 = arith.addf %378, %379 : vector<16x263xf32>
    %381 = vector.extract_strided_slice %380 {offsets = [0, 0], sizes = [16, 20], strides = [1, 1]} : vector<16x263xf32> to vector<16x20xf32>
    %cst_94 = arith.constant dense<0xFF800000> : vector<16xf32>
    %382 = vector.multi_reduction <maximumf>, %381, %cst_94 [1] : vector<16x20xf32> to vector<16xf32>
    %cst_95 = arith.constant 0xFF800000 : f32
    %383 = vector.broadcast %cst_95 : f32 to vector<16xf32>
    %384 = arith.maximumf %383, %382 : vector<16xf32>
    %385 = vector.shape_cast %384 : vector<16xf32> to vector<16x1xf32>
    %386 = vector.broadcast %385 : vector<16x1xf32> to vector<16x20xf32>
    %387 = arith.subf %381, %386 : vector<16x20xf32>
    %388 = math.exp %387 : vector<16x20xf32>
    %cst_96 = arith.constant dense<0.000000e+00> : vector<16xf32>
    %389 = vector.multi_reduction <add>, %388, %cst_96 [1] : vector<16x20xf32> to vector<16xf32>
    %390 = vector.shape_cast %389 : vector<16xf32> to vector<16x1xf32>
    %391 = vector.broadcast %390 : vector<16x1xf32> to vector<16x20xf32>
    %392 = arith.divf %388, %391 : vector<16x20xf32>
    %393 = vector.extract_strided_slice %380 {offsets = [0, 20], sizes = [16, 40], strides = [1, 1]} : vector<16x263xf32> to vector<16x40xf32>
    %394 = vector.extract_strided_slice %380 {offsets = [0, 60], sizes = [16, 40], strides = [1, 1]} : vector<16x263xf32> to vector<16x40xf32>
    %395 = vector.extract_strided_slice %380 {offsets = [0, 100], sizes = [16, 20], strides = [1, 1]} : vector<16x263xf32> to vector<16x20xf32>
    %396 = vector.extract_strided_slice %380 {offsets = [0, 120], sizes = [16, 100], strides = [1, 1]} : vector<16x263xf32> to vector<16x100xf32>
    %cst_97 = arith.constant 0.000000e+00 : f32
    %397 = vector.broadcast %cst_97 : f32 to vector<16x100xf32>
    %398 = arith.subf %397, %396 : vector<16x100xf32>
    %399 = math.exp %398 : vector<16x100xf32>
    %400 = vector.extract_strided_slice %380 {offsets = [0, 220], sizes = [16, 40], strides = [1, 1]} : vector<16x263xf32> to vector<16x40xf32>
    %401 = math.tanh %400 : vector<16x40xf32>
    %402 = vector.extract_strided_slice %380 {offsets = [0, 260], sizes = [16, 3], strides = [1, 1]} : vector<16x263xf32> to vector<16x3xf32>
    %cst_98 = arith.constant dense<0xFF800000> : vector<16xf32>
    %403 = vector.multi_reduction <maximumf>, %402, %cst_98 [1] : vector<16x3xf32> to vector<16xf32>
    %cst_99 = arith.constant 0xFF800000 : f32
    %404 = vector.broadcast %cst_99 : f32 to vector<16xf32>
    %405 = arith.maximumf %404, %403 : vector<16xf32>
    %406 = vector.shape_cast %405 : vector<16xf32> to vector<16x1xf32>
    %407 = vector.broadcast %406 : vector<16x1xf32> to vector<16x3xf32>
    %408 = arith.subf %402, %407 : vector<16x3xf32>
    %409 = math.exp %408 : vector<16x3xf32>
    %cst_100 = arith.constant dense<0.000000e+00> : vector<16xf32>
    %410 = vector.multi_reduction <add>, %409, %cst_100 [1] : vector<16x3xf32> to vector<16xf32>
    %411 = vector.shape_cast %410 : vector<16xf32> to vector<16x1xf32>
    %412 = vector.broadcast %411 : vector<16x1xf32> to vector<16x3xf32>
    %413 = arith.divf %409, %412 : vector<16x3xf32>
    %414 = tpu.concatenate %335, %336, %335, %336 in 0 : vector<8x8xf32>, vector<8x8xf32>, vector<8x8xf32>, vector<8x8xf32> -> vector<32x8xf32>
    %415 = vector.extract_strided_slice %392 {offsets = [0, 0], sizes = [8, 20], strides = [1, 1]} : vector<16x20xf32> to vector<8x20xf32>
    %416 = vector.extract_strided_slice %392 {offsets = [8, 0], sizes = [8, 20], strides = [1, 1]} : vector<16x20xf32> to vector<8x20xf32>
    %417 = vector.extract_strided_slice %392 {offsets = [8, 0], sizes = [8, 20], strides = [1, 1]} : vector<16x20xf32> to vector<8x20xf32>
    %418 = vector.extract_strided_slice %392 {offsets = [0, 0], sizes = [8, 20], strides = [1, 1]} : vector<16x20xf32> to vector<8x20xf32>
    %419 = tpu.concatenate %415, %416, %417, %418 in 0 : vector<8x20xf32>, vector<8x20xf32>, vector<8x20xf32>, vector<8x20xf32> -> vector<32x20xf32>
    %420 = vector.extract_strided_slice %393 {offsets = [0, 0], sizes = [8, 40], strides = [1, 1]} : vector<16x40xf32> to vector<8x40xf32>
    %421 = vector.extract_strided_slice %393 {offsets = [8, 0], sizes = [8, 40], strides = [1, 1]} : vector<16x40xf32> to vector<8x40xf32>
    %422 = vector.extract_strided_slice %393 {offsets = [8, 0], sizes = [8, 40], strides = [1, 1]} : vector<16x40xf32> to vector<8x40xf32>
    %423 = vector.extract_strided_slice %393 {offsets = [0, 0], sizes = [8, 40], strides = [1, 1]} : vector<16x40xf32> to vector<8x40xf32>
    %424 = tpu.concatenate %420, %421, %422, %423 in 0 : vector<8x40xf32>, vector<8x40xf32>, vector<8x40xf32>, vector<8x40xf32> -> vector<32x40xf32>
    %425 = vector.extract_strided_slice %394 {offsets = [0, 0], sizes = [8, 40], strides = [1, 1]} : vector<16x40xf32> to vector<8x40xf32>
    %426 = vector.extract_strided_slice %394 {offsets = [8, 0], sizes = [8, 40], strides = [1, 1]} : vector<16x40xf32> to vector<8x40xf32>
    %427 = vector.extract_strided_slice %394 {offsets = [8, 0], sizes = [8, 40], strides = [1, 1]} : vector<16x40xf32> to vector<8x40xf32>
    %428 = vector.extract_strided_slice %394 {offsets = [0, 0], sizes = [8, 40], strides = [1, 1]} : vector<16x40xf32> to vector<8x40xf32>
    %429 = tpu.concatenate %425, %426, %427, %428 in 0 : vector<8x40xf32>, vector<8x40xf32>, vector<8x40xf32>, vector<8x40xf32> -> vector<32x40xf32>
    %430 = vector.extract_strided_slice %395 {offsets = [0, 0], sizes = [8, 20], strides = [1, 1]} : vector<16x20xf32> to vector<8x20xf32>
    %431 = vector.extract_strided_slice %395 {offsets = [8, 0], sizes = [8, 20], strides = [1, 1]} : vector<16x20xf32> to vector<8x20xf32>
    %432 = vector.extract_strided_slice %395 {offsets = [8, 0], sizes = [8, 20], strides = [1, 1]} : vector<16x20xf32> to vector<8x20xf32>
    %433 = vector.extract_strided_slice %395 {offsets = [0, 0], sizes = [8, 20], strides = [1, 1]} : vector<16x20xf32> to vector<8x20xf32>
    %434 = tpu.concatenate %430, %431, %432, %433 in 0 : vector<8x20xf32>, vector<8x20xf32>, vector<8x20xf32>, vector<8x20xf32> -> vector<32x20xf32>
    %435 = vector.extract_strided_slice %399 {offsets = [0, 0], sizes = [8, 100], strides = [1, 1]} : vector<16x100xf32> to vector<8x100xf32>
    %436 = vector.extract_strided_slice %399 {offsets = [8, 0], sizes = [8, 100], strides = [1, 1]} : vector<16x100xf32> to vector<8x100xf32>
    %437 = vector.extract_strided_slice %399 {offsets = [8, 0], sizes = [8, 100], strides = [1, 1]} : vector<16x100xf32> to vector<8x100xf32>
    %438 = vector.extract_strided_slice %399 {offsets = [0, 0], sizes = [8, 100], strides = [1, 1]} : vector<16x100xf32> to vector<8x100xf32>
    %439 = tpu.concatenate %435, %436, %437, %438 in 0 : vector<8x100xf32>, vector<8x100xf32>, vector<8x100xf32>, vector<8x100xf32> -> vector<32x100xf32>
    %440 = vector.extract_strided_slice %401 {offsets = [0, 0], sizes = [8, 40], strides = [1, 1]} : vector<16x40xf32> to vector<8x40xf32>
    %441 = vector.extract_strided_slice %401 {offsets = [8, 0], sizes = [8, 40], strides = [1, 1]} : vector<16x40xf32> to vector<8x40xf32>
    %442 = vector.extract_strided_slice %401 {offsets = [8, 0], sizes = [8, 40], strides = [1, 1]} : vector<16x40xf32> to vector<8x40xf32>
    %443 = vector.extract_strided_slice %401 {offsets = [0, 0], sizes = [8, 40], strides = [1, 1]} : vector<16x40xf32> to vector<8x40xf32>
    %444 = tpu.concatenate %440, %441, %442, %443 in 0 : vector<8x40xf32>, vector<8x40xf32>, vector<8x40xf32>, vector<8x40xf32> -> vector<32x40xf32>
    %445 = vector.extract_strided_slice %413 {offsets = [0, 0], sizes = [8, 3], strides = [1, 1]} : vector<16x3xf32> to vector<8x3xf32>
    %446 = vector.extract_strided_slice %413 {offsets = [8, 0], sizes = [8, 3], strides = [1, 1]} : vector<16x3xf32> to vector<8x3xf32>
    %447 = vector.extract_strided_slice %413 {offsets = [8, 0], sizes = [8, 3], strides = [1, 1]} : vector<16x3xf32> to vector<8x3xf32>
    %448 = vector.extract_strided_slice %413 {offsets = [0, 0], sizes = [8, 3], strides = [1, 1]} : vector<16x3xf32> to vector<8x3xf32>
    %449 = tpu.concatenate %445, %446, %447, %448 in 0 : vector<8x3xf32>, vector<8x3xf32>, vector<8x3xf32>, vector<8x3xf32> -> vector<32x3xf32>
    %450 = vector.extract_strided_slice %414 {offsets = [0, 0], sizes = [32, 1], strides = [1, 1]} : vector<32x8xf32> to vector<32x1xf32>
    %451 = vector.extract_strided_slice %414 {offsets = [0, 1], sizes = [32, 1], strides = [1, 1]} : vector<32x8xf32> to vector<32x1xf32>
    %452 = vector.extract_strided_slice %414 {offsets = [0, 2], sizes = [32, 1], strides = [1, 1]} : vector<32x8xf32> to vector<32x1xf32>
    %453 = vector.extract_strided_slice %414 {offsets = [0, 3], sizes = [32, 1], strides = [1, 1]} : vector<32x8xf32> to vector<32x1xf32>
    %454 = vector.extract_strided_slice %414 {offsets = [0, 4], sizes = [32, 1], strides = [1, 1]} : vector<32x8xf32> to vector<32x1xf32>
    %455 = vector.extract_strided_slice %414 {offsets = [0, 5], sizes = [32, 3], strides = [1, 1]} : vector<32x8xf32> to vector<32x3xf32>
    %456 = tpu.iota {dimensions = array<i32: 1>} : vector<32x40xi32>
    %c20_i32_101 = arith.constant 20 : i32
    %457 = vector.broadcast %c20_i32_101 : i32 to vector<32x40xi32>
    %458 = arith.cmpi slt, %456, %457 : vector<32x40xi32>
    %459 = vector.shape_cast %450 : vector<32x1xf32> to vector<32x1xf32>
    %460 = vector.broadcast %459 : vector<32x1xf32> to vector<32x40xf32>
    %461 = vector.shape_cast %452 : vector<32x1xf32> to vector<32x1xf32>
    %462 = vector.broadcast %461 : vector<32x1xf32> to vector<32x40xf32>
    %463 = arith.select %458, %460, %462 : vector<32x40xi1>, vector<32x40xf32>
    %c20_i32_102 = arith.constant 20 : i32
    %464 = vector.broadcast %c20_i32_102 : i32 to vector<32x40xi32>
    %465 = arith.cmpi slt, %456, %464 : vector<32x40xi32>
    %466 = vector.shape_cast %451 : vector<32x1xf32> to vector<32x1xf32>
    %467 = vector.broadcast %466 : vector<32x1xf32> to vector<32x40xf32>
    %468 = vector.shape_cast %453 : vector<32x1xf32> to vector<32x1xf32>
    %469 = vector.broadcast %468 : vector<32x1xf32> to vector<32x40xf32>
    %470 = arith.select %465, %467, %469 : vector<32x40xi1>, vector<32x40xf32>
    %471 = vector.extract_strided_slice %439 {offsets = [0, 0], sizes = [32, 40], strides = [1, 1]} : vector<32x100xf32> to vector<32x40xf32>
    %472 = vector.extract_strided_slice %439 {offsets = [0, 40], sizes = [32, 40], strides = [1, 1]} : vector<32x100xf32> to vector<32x40xf32>
    %473 = vector.extract_strided_slice %439 {offsets = [0, 80], sizes = [32, 20], strides = [1, 1]} : vector<32x100xf32> to vector<32x20xf32>
    %474 = arith.subf %463, %424 : vector<32x40xf32>
    %475 = arith.mulf %474, %471 : vector<32x40xf32>
    %476 = arith.subf %470, %429 : vector<32x40xf32>
    %477 = arith.mulf %476, %472 : vector<32x40xf32>
    %478 = arith.mulf %444, %444 : vector<32x40xf32>
    %cst_103 = arith.constant 1.000000e+00 : f32
    %479 = vector.broadcast %cst_103 : f32 to vector<32x40xf32>
    %480 = arith.subf %479, %478 : vector<32x40xf32>
    %481 = tpu.reciprocal %480 {approx = true} : vector<32x40xf32> -> vector<32x40xf32>
    %482 = arith.mulf %475, %475 : vector<32x40xf32>
    %483 = arith.mulf %477, %477 : vector<32x40xf32>
    %484 = arith.addf %482, %483 : vector<32x40xf32>
    %cst_104 = arith.constant 2.000000e+00 : f32
    %485 = vector.broadcast %cst_104 : f32 to vector<32x40xf32>
    %486 = arith.mulf %485, %444 : vector<32x40xf32>
    %487 = arith.mulf %486, %475 : vector<32x40xf32>
    %488 = arith.mulf %487, %477 : vector<32x40xf32>
    %489 = arith.subf %484, %488 : vector<32x40xf32>
    %cst_105 = arith.constant -5.000000e-01 : f32
    %490 = vector.broadcast %cst_105 : f32 to vector<32x40xf32>
    %491 = arith.mulf %490, %489 : vector<32x40xf32>
    %492 = arith.mulf %491, %481 : vector<32x40xf32>
    %493 = math.exp %492 : vector<32x40xf32>
    %494 = arith.mulf %471, %472 : vector<32x40xf32>
    %495 = math.rsqrt %480 : vector<32x40xf32>
    %496 = arith.mulf %494, %495 : vector<32x40xf32>
    %cst_106 = arith.constant 0.159154937 : f32
    %497 = vector.broadcast %cst_106 : f32 to vector<32x40xf32>
    %498 = arith.mulf %496, %497 : vector<32x40xf32>
    %499 = arith.mulf %493, %498 : vector<32x40xf32>
    %500 = vector.broadcast %454 : vector<32x1xf32> to vector<32x20xf32>
    %501 = arith.subf %500, %434 : vector<32x20xf32>
    %502 = arith.mulf %501, %473 : vector<32x20xf32>
    %cst_107 = arith.constant -5.000000e-01 : f32
    %503 = vector.broadcast %cst_107 : f32 to vector<32x20xf32>
    %504 = arith.mulf %503, %502 : vector<32x20xf32>
    %505 = arith.mulf %504, %502 : vector<32x20xf32>
    %506 = math.exp %505 : vector<32x20xf32>
    %cst_108 = arith.constant 0.398942292 : f32
    %507 = vector.broadcast %cst_108 : f32 to vector<32x20xf32>
    %508 = arith.mulf %473, %507 : vector<32x20xf32>
    %509 = arith.mulf %506, %508 : vector<32x20xf32>
    %510 = vector.extract_strided_slice %499 {offsets = [0, 0], sizes = [32, 20], strides = [1, 1]} : vector<32x40xf32> to vector<32x20xf32>
    %511 = arith.mulf %419, %510 : vector<32x20xf32>
    %cst_109 = arith.constant dense<0.000000e+00> : vector<32xf32>
    %512 = vector.multi_reduction <add>, %511, %cst_109 [1] : vector<32x20xf32> to vector<32xf32>
    %513 = vector.shape_cast %512 : vector<32xf32> to vector<32x1xf32>
    %514 = vector.extract_strided_slice %499 {offsets = [0, 20], sizes = [32, 20], strides = [1, 1]} : vector<32x40xf32> to vector<32x20xf32>
    %515 = arith.mulf %419, %514 : vector<32x20xf32>
    %cst_110 = arith.constant dense<0.000000e+00> : vector<32xf32>
    %516 = vector.multi_reduction <add>, %515, %cst_110 [1] : vector<32x20xf32> to vector<32xf32>
    %517 = vector.shape_cast %516 : vector<32xf32> to vector<32x1xf32>
    %518 = arith.mulf %419, %509 : vector<32x20xf32>
    %cst_111 = arith.constant dense<0.000000e+00> : vector<32xf32>
    %519 = vector.multi_reduction <add>, %518, %cst_111 [1] : vector<32x20xf32> to vector<32xf32>
    %520 = vector.shape_cast %519 : vector<32xf32> to vector<32x1xf32>
    %cst_112 = arith.constant 9.99999974E-6 : f32
    %521 = vector.broadcast %cst_112 : f32 to vector<32x1xf32>
    %522 = arith.addf %521, %513 : vector<32x1xf32>
    %523 = math.log %522 : vector<32x1xf32>
    %cst_113 = arith.constant 0.000000e+00 : f32
    %524 = vector.broadcast %cst_113 : f32 to vector<32x1xf32>
    %525 = arith.subf %524, %523 : vector<32x1xf32>
    %cst_114 = arith.constant 9.99999974E-6 : f32
    %526 = vector.broadcast %cst_114 : f32 to vector<32x1xf32>
    %527 = arith.addf %526, %517 : vector<32x1xf32>
    %528 = math.log %527 : vector<32x1xf32>
    %529 = arith.subf %525, %528 : vector<32x1xf32>
    %cst_115 = arith.constant 9.99999974E-6 : f32
    %530 = vector.broadcast %cst_115 : f32 to vector<32x1xf32>
    %531 = arith.addf %530, %520 : vector<32x1xf32>
    %532 = math.log %531 : vector<32x1xf32>
    %533 = arith.subf %529, %532 : vector<32x1xf32>
    %534 = math.log %449 : vector<32x3xf32>
    %535 = arith.mulf %455, %534 : vector<32x3xf32>
    %cst_116 = arith.constant dense<0.000000e+00> : vector<32xf32>
    %536 = vector.multi_reduction <add>, %535, %cst_116 [1] : vector<32x3xf32> to vector<32xf32>
    %537 = vector.shape_cast %536 : vector<32xf32> to vector<32x1xf32>
    %538 = arith.subf %533, %537 : vector<32x1xf32>
    %539 = vector.extract_strided_slice %538 {offsets = [0, 0], sizes = [8, 1], strides = [1, 1]} : vector<32x1xf32> to vector<8x1xf32>
    %540 = vector.extract_strided_slice %538 {offsets = [8, 0], sizes = [8, 1], strides = [1, 1]} : vector<32x1xf32> to vector<8x1xf32>
    %541 = arith.addf %539, %540 : vector<8x1xf32>
    %542 = vector.extract_strided_slice %538 {offsets = [16, 0], sizes = [8, 1], strides = [1, 1]} : vector<32x1xf32> to vector<8x1xf32>
    %543 = vector.extract_strided_slice %538 {offsets = [24, 0], sizes = [8, 1], strides = [1, 1]} : vector<32x1xf32> to vector<8x1xf32>
    %544 = arith.addf %542, %543 : vector<8x1xf32>
    %545 = arith.minimumf %541, %544 : vector<8x1xf32>
    %546 = arith.mulf %545, %332 : vector<8x1xf32>
    %cst_117 = arith.constant dense<0.000000e+00> : vector<1xf32>
    %547 = vector.multi_reduction <add>, %546, %cst_117 [0] : vector<8x1xf32> to vector<1xf32>
    %548 = vector.shape_cast %547 : vector<1xf32> to vector<1x1xf32>
    %cst_118 = arith.constant 5.000000e-01 : f32
    %549 = vector.broadcast %cst_118 : f32 to vector<1x1xf32>
    %550 = arith.mulf %548, %549 : vector<1x1xf32>
    %551 = arith.addf %305, %550 : vector<1x1xf32>
    %cst_119 = arith.constant 5.000000e-01 : f32
    %552 = vector.broadcast %cst_119 : f32 to vector<1x1xf32>
    %553 = arith.mulf %551, %552 : vector<1x1xf32>
    %c0_120 = arith.constant 0 : index
    %c0_121 = arith.constant 0 : index
    %554 = vector.load %arg16[%c0_120, %c0_121] : memref<1x1xf32, #tpu.memory_space<vmem>>, vector<1x1xf32>
    tpu.vector_store %arg16[%c0_120, %c0_121], %553 {strides = array<i32>} : memref<1x1xf32, #tpu.memory_space<vmem>>, vector<1x1xf32>,
    return
  }
}

</mosaic_0001>

<llo_original>
// kernel: tpu_custom_call.1
$region0: #{tpu_custom_call.1}
  #allocation0 [shape = 'u32[]', space=smem, size = 0x4, offset = 0x4, fixed_abs, tag = 'smem constant byte address 0x4 - core index']
  #allocation1 [shape = 'u32[72,128]{1,0:T(1,128)}', space=vmem, size = 0x9000, scoped, tag = 'internal scratch']
  %s0 = inlined_call_operand.hbm [shape: f32[7,8], index: 0, kind: input, shape index: {}]
  %s1 = inlined_call_operand.hbm [shape: f32[7,16], index: 1, kind: input, shape index: {}]
  %s2 = inlined_call_operand.hbm [shape: f32[7,24], index: 2, kind: input, shape index: {}]
  %s3 = inlined_call_operand.vmem [shape: s32[16,1], index: 3, kind: input, shape index: {}]
  %s4 = inlined_call_operand.vmem [shape: s32[16,1], index: 4, kind: input, shape index: {}]
  %s5 = inlined_call_operand.vmem [shape: s32[16,1], index: 5, kind: input, shape index: {}]
  %s6 = inlined_call_operand.vmem [shape: f32[24,32], index: 6, kind: input, shape index: {}]
  %s7 = inlined_call_operand.vmem [shape: f32[1,32], index: 7, kind: input, shape index: {}]
  %s8 = inlined_call_operand.hbm [shape: f32[16,32], index: 8, kind: input, shape index: {}]
  %s9 = inlined_call_operand.hbm [shape: f32[1,32], index: 9, kind: input, shape index: {}]
  %s10 = inlined_call_operand.vmem [shape: f32[8,64], index: 10, kind: input, shape index: {}]
  %s11 = inlined_call_operand.hbm [shape: f32[16,64], index: 11, kind: input, shape index: {}]
  %s12 = inlined_call_operand.hbm [shape: f32[16,64], index: 12, kind: input, shape index: {}]
  %s13 = inlined_call_operand.hbm [shape: f32[1,64], index: 13, kind: input, shape index: {}]
  %s14 = inlined_call_operand.vmem [shape: f32[8,263], index: 14, kind: input, shape index: {}]
  %s15 = inlined_call_operand.vmem [shape: f32[1,263], index: 15, kind: input, shape index: {}]
  %s16 = inlined_call_operand.hbm [shape: f32[1,1], index: 16, kind: output, shape index: {}]
  %s17 = sld [smem:[#allocation0]]
  $region106: #{tpu_custom_call.1} parent=0
    _
  %s19 = ssub.s32 1, %s17
  %s20 = scalar_select 0, %s19, %s17
  $region1: #{tpu_custom_call.1} parent=0
    #allocation2 [shape = 'u8[4096]{0}', space=vmem, size = 0x1000, scoped, tag = 'input window, operand 0, single buffered']
    #allocation3 [shape = 's32[1]{0}', space=sflag, size = 0x4, scoped, tag = 'scoped memory for tpu_custom_call.1']
    #allocation4 [shape = 's32[1]{0}', space=sflag, size = 0x4, scoped, tag = 'scoped memory for tpu_custom_call.1']
    #allocation5 [shape = 'u8[4096]{0}', space=vmem, size = 0x1000, scoped, tag = 'input window, operand 1, single buffered']
    #allocation6 [shape = 's32[1]{0}', space=sflag, size = 0x4, scoped, tag = 'scoped memory for tpu_custom_call.1']
    #allocation7 [shape = 'u8[4096]{0}', space=vmem, size = 0x1000, scoped, tag = 'input window, operand 2, single buffered']
    #allocation8 [shape = 'u8[8192]{0}', space=vmem, size = 0x2000, scoped, tag = 'input window, operand 8, single buffered']
    #allocation9 [shape = 's32[1]{0}', space=sflag, size = 0x4, scoped, tag = 'scoped memory for tpu_custom_call.1']
    #allocation10 [shape = 'u8[512]{0}', space=vmem, size = 0x400, scoped, tag = 'input window, operand 9, single buffered']
    #allocation11 [shape = 'u8[8192]{0}', space=vmem, size = 0x2000, scoped, tag = 'input window, operand 11, single buffered']
    #allocation12 [shape = 's32[1]{0}', space=sflag, size = 0x4, scoped, tag = 'scoped memory for tpu_custom_call.1']
    #allocation13 [shape = 'u8[8192]{0}', space=vmem, size = 0x2000, scoped, tag = 'input window, operand 12, single buffered']
    #allocation14 [shape = 'u8[512]{0}', space=vmem, size = 0x400, scoped, tag = 'input window, operand 13, single buffered']
    #allocation15 [shape = 's32[1]{0}', space=sflag, size = 0x4, scoped, tag = 'scoped memory for tpu_custom_call.1']
    #allocation16 [shape = 'u8[512]{0}', space=vmem, size = 0x400, scoped, tag = 'output window, operand 0, single buffered']
    %21 = vsyncpa [#allocation3], 0
    %22 = vsyncpa [#allocation6], 0
    %23 = vsyncpa [#allocation9], 0
    %24 = vsyncpa [#allocation12], 0
    %25 = vsyncpa [#allocation15], 0
    %26 = vsyncpa [#allocation4], 0
    // Predicated region
    $region2: #{tpu_custom_call.1} parent=1 // pred_check
      _
    $region3: #{tpu_custom_call.1} parent=1 // pred_check_branch
      %28 = sbr.rel (0) target = $region5
    $region4: #{tpu_custom_call.1} parent=1 // pred_region
      %30 = vsyncadd [#allocation3], 0
      %s32 = sshll.u32 %s0, 4
      %s33 = int_to_ptr.hbm [resolvable:$true] %s32
      %s34 = sshll.u32 [#allocation2], 4
      %s35 = int_to_ptr.vmem [resolvable:$true] %s34
      %37 = dma.hbm_to_vmem [thread:$0]  %s33, 128, %s35, [#allocation3]
    $region5: #{tpu_custom_call.1} parent=1 // pred_fallthru
      _
    // Predicated region
    $region6: #{tpu_custom_call.1} parent=1 // pred_check
      _
    $region7: #{tpu_custom_call.1} parent=1 // pred_check_branch
      %39 = sbr.rel (0) target = $region9
    $region8: #{tpu_custom_call.1} parent=1 // pred_region
      %41 = vsyncadd [#allocation6], 0
      %s43 = sshll.u32 %s1, 4
      %s44 = int_to_ptr.hbm [resolvable:$true] %s43
      %s45 = sshll.u32 [#allocation5], 4
      %s46 = int_to_ptr.vmem [resolvable:$true] %s45
      %48 = dma.hbm_to_vmem [thread:$0]  %s44, 128, %s46, [#allocation6]
    $region9: #{tpu_custom_call.1} parent=1 // pred_fallthru
      _
    // Predicated region
    $region10: #{tpu_custom_call.1} parent=1 // pred_check
      _
    $region11: #{tpu_custom_call.1} parent=1 // pred_check_branch
      %50 = sbr.rel (0) target = $region13
    $region12: #{tpu_custom_call.1} parent=1 // pred_region
      %52 = vsyncadd [#allocation6], 0
      %s54 = sshll.u32 %s2, 4
      %s55 = int_to_ptr.hbm [resolvable:$true] %s54
      %s56 = sshll.u32 [#allocation7], 4
      %s57 = int_to_ptr.vmem [resolvable:$true] %s56
      %59 = dma.hbm_to_vmem [thread:$0]  %s55, 128, %s57, [#allocation6]
    $region13: #{tpu_custom_call.1} parent=1 // pred_fallthru
      _
    // Predicated region
    $region14: #{tpu_custom_call.1} parent=1 // pred_check
      _
    $region15: #{tpu_custom_call.1} parent=1 // pred_check_branch
      %61 = sbr.rel (0) target = $region17
    $region16: #{tpu_custom_call.1} parent=1 // pred_region
      _
    $region17: #{tpu_custom_call.1} parent=1 // pred_fallthru
      _
    // Predicated region
    $region18: #{tpu_custom_call.1} parent=1 // pred_check
      _
    $region19: #{tpu_custom_call.1} parent=1 // pred_check_branch
      %63 = sbr.rel (0) target = $region21
    $region20: #{tpu_custom_call.1} parent=1 // pred_region
      _
    $region21: #{tpu_custom_call.1} parent=1 // pred_fallthru
      _
    // Predicated region
    $region22: #{tpu_custom_call.1} parent=1 // pred_check
      _
    $region23: #{tpu_custom_call.1} parent=1 // pred_check_branch
      %65 = sbr.rel (0) target = $region25
    $region24: #{tpu_custom_call.1} parent=1 // pred_region
      _
    $region25: #{tpu_custom_call.1} parent=1 // pred_fallthru
      _
    // Predicated region
    $region26: #{tpu_custom_call.1} parent=1 // pred_check
      _
    $region27: #{tpu_custom_call.1} parent=1 // pred_check_branch
      %67 = sbr.rel (0) target = $region29
    $region28: #{tpu_custom_call.1} parent=1 // pred_region
      _
    $region29: #{tpu_custom_call.1} parent=1 // pred_fallthru
      _
    // Predicated region
    $region30: #{tpu_custom_call.1} parent=1 // pred_check
      _
    $region31: #{tpu_custom_call.1} parent=1 // pred_check_branch
      %69 = sbr.rel (0) target = $region33
    $region32: #{tpu_custom_call.1} parent=1 // pred_region
      _
    $region33: #{tpu_custom_call.1} parent=1 // pred_fallthru
      _
    // Predicated region
    $region34: #{tpu_custom_call.1} parent=1 // pred_check
      _
    $region35: #{tpu_custom_call.1} parent=1 // pred_check_branch
      %71 = sbr.rel (0) target = $region37
    $region36: #{tpu_custom_call.1} parent=1 // pred_region
      %73 = vsyncadd [#allocation9], 0
      %s74 = sshll.u32 %s8, 4
      %s75 = int_to_ptr.hbm [resolvable:$true] %s74
      %s76 = sshll.u32 [#allocation8], 4
      %s77 = int_to_ptr.vmem [resolvable:$true] %s76
      %82 = dma.hbm_to_vmem [thread:$0]  %s75, 256, %s77, [#allocation9], 128, 128, 8
    $region37: #{tpu_custom_call.1} parent=1 // pred_fallthru
      _
    // Predicated region
    $region38: #{tpu_custom_call.1} parent=1 // pred_check
      _
    $region39: #{tpu_custom_call.1} parent=1 // pred_check_branch
      %84 = sbr.rel (0) target = $region41
    $region40: #{tpu_custom_call.1} parent=1 // pred_region
      %86 = vsyncadd [#allocation9], 0
      %s88 = sshll.u32 %s9, 4
      %s89 = int_to_ptr.hbm [resolvable:$true] %s88
      %s90 = sshll.u32 [#allocation10], 4
      %s91 = int_to_ptr.vmem [resolvable:$true] %s90
      %93 = dma.hbm_to_vmem [thread:$0]  %s89, 16, %s91, [#allocation9]
    $region41: #{tpu_custom_call.1} parent=1 // pred_fallthru
      _
    // Predicated region
    $region42: #{tpu_custom_call.1} parent=1 // pred_check
      _
    $region43: #{tpu_custom_call.1} parent=1 // pred_check_branch
      %95 = sbr.rel (0) target = $region45
    $region44: #{tpu_custom_call.1} parent=1 // pred_region
      _
    $region45: #{tpu_custom_call.1} parent=1 // pred_fallthru
      _
    // Predicated region
    $region46: #{tpu_custom_call.1} parent=1 // pred_check
      _
    $region47: #{tpu_custom_call.1} parent=1 // pred_check_branch
      %97 = sbr.rel (0) target = $region49
    $region48: #{tpu_custom_call.1} parent=1 // pred_region
      %99 = vsyncadd [#allocation12], 0
      %s100 = sshll.u32 %s11, 4
      %s101 = int_to_ptr.hbm [resolvable:$true] %s100
      %s102 = sshll.u32 [#allocation11], 4
      %s103 = int_to_ptr.vmem [resolvable:$true] %s102
      %108 = dma.hbm_to_vmem [thread:$0]  %s101, 256, %s103, [#allocation12], 128, 128, 8
    $region49: #{tpu_custom_call.1} parent=1 // pred_fallthru
      _
    // Predicated region
    $region50: #{tpu_custom_call.1} parent=1 // pred_check
      _
    $region51: #{tpu_custom_call.1} parent=1 // pred_check_branch
      %110 = sbr.rel (0) target = $region53
    $region52: #{tpu_custom_call.1} parent=1 // pred_region
      %112 = vsyncadd [#allocation12], 0
      %s113 = sshll.u32 %s12, 4
      %s114 = int_to_ptr.hbm [resolvable:$true] %s113
      %s115 = sshll.u32 [#allocation13], 4
      %s116 = int_to_ptr.vmem [resolvable:$true] %s115
      %121 = dma.hbm_to_vmem [thread:$0]  %s114, 256, %s116, [#allocation12], 128, 128, 8
    $region53: #{tpu_custom_call.1} parent=1 // pred_fallthru
      _
    // Predicated region
    $region54: #{tpu_custom_call.1} parent=1 // pred_check
      _
    $region55: #{tpu_custom_call.1} parent=1 // pred_check_branch
      %123 = sbr.rel (0) target = $region57
    $region56: #{tpu_custom_call.1} parent=1 // pred_region
      %125 = vsyncadd [#allocation15], 0
      %s127 = sshll.u32 %s13, 4
      %s128 = int_to_ptr.hbm [resolvable:$true] %s127
      %s129 = sshll.u32 [#allocation14], 4
      %s130 = int_to_ptr.vmem [resolvable:$true] %s129
      %132 = dma.hbm_to_vmem [thread:$0]  %s128, 16, %s130, [#allocation15]
    $region57: #{tpu_custom_call.1} parent=1 // pred_fallthru
      _
    // Predicated region
    $region58: #{tpu_custom_call.1} parent=1 // pred_check
      _
    $region59: #{tpu_custom_call.1} parent=1 // pred_check_branch
      %134 = sbr.rel (0) target = $region61
    $region60: #{tpu_custom_call.1} parent=1 // pred_region
      _
    $region61: #{tpu_custom_call.1} parent=1 // pred_fallthru
      _
    // Predicated region
    $region62: #{tpu_custom_call.1} parent=1 // pred_check
      _
    $region63: #{tpu_custom_call.1} parent=1 // pred_check_branch
      %136 = sbr.rel (0) target = $region65
    $region64: #{tpu_custom_call.1} parent=1 // pred_region
      _
    $region65: #{tpu_custom_call.1} parent=1 // pred_fallthru
      _
    // Predicated region
    $region66: #{tpu_custom_call.1} parent=1 // pred_check
      _
    $region67: #{tpu_custom_call.1} parent=1 // pred_check_branch
      %138 = sbr.rel (0) target = $region69
    $region68: #{tpu_custom_call.1} parent=1 // pred_region
      %140 = dma.done [#allocation3], 128
    $region69: #{tpu_custom_call.1} parent=1 // pred_fallthru
      _
    // Predicated region
    $region70: #{tpu_custom_call.1} parent=1 // pred_check
      _
    $region71: #{tpu_custom_call.1} parent=1 // pred_check_branch
      %142 = sbr.rel (0) target = $region73
    $region72: #{tpu_custom_call.1} parent=1 // pred_region
      %144 = dma.done [#allocation6], 128
    $region73: #{tpu_custom_call.1} parent=1 // pred_fallthru
      _
    // Predicated region
    $region74: #{tpu_custom_call.1} parent=1 // pred_check
      _
    $region75: #{tpu_custom_call.1} parent=1 // pred_check_branch
      %146 = sbr.rel (0) target = $region77
    $region76: #{tpu_custom_call.1} parent=1 // pred_region
      %148 = dma.done [#allocation6], 128
    $region77: #{tpu_custom_call.1} parent=1 // pred_fallthru
      _
    // Predicated region
    $region78: #{tpu_custom_call.1} parent=1 // pred_check
      _
    $region79: #{tpu_custom_call.1} parent=1 // pred_check_branch
      %150 = sbr.rel (0) target = $region81
    $region80: #{tpu_custom_call.1} parent=1 // pred_region
      %152 = dma.done [#allocation9], 256
    $region81: #{tpu_custom_call.1} parent=1 // pred_fallthru
      _
    // Predicated region
    $region82: #{tpu_custom_call.1} parent=1 // pred_check
      _
    $region83: #{tpu_custom_call.1} parent=1 // pred_check_branch
      %154 = sbr.rel (0) target = $region85
    $region84: #{tpu_custom_call.1} parent=1 // pred_region
      %156 = dma.done [#allocation9], 16
    $region85: #{tpu_custom_call.1} parent=1 // pred_fallthru
      _
    // Predicated region
    $region86: #{tpu_custom_call.1} parent=1 // pred_check
      _
    $region87: #{tpu_custom_call.1} parent=1 // pred_check_branch
      %158 = sbr.rel (0) target = $region89
    $region88: #{tpu_custom_call.1} parent=1 // pred_region
      %160 = dma.done [#allocation12], 256
    $region89: #{tpu_custom_call.1} parent=1 // pred_fallthru
      _
    // Predicated region
    $region90: #{tpu_custom_call.1} parent=1 // pred_check
      _
    $region91: #{tpu_custom_call.1} parent=1 // pred_check_branch
      %162 = sbr.rel (0) target = $region93
    $region92: #{tpu_custom_call.1} parent=1 // pred_region
      %164 = dma.done [#allocation12], 256
    $region93: #{tpu_custom_call.1} parent=1 // pred_fallthru
      _
    // Predicated region
    $region94: #{tpu_custom_call.1} parent=1 // pred_check
      _
    $region95: #{tpu_custom_call.1} parent=1 // pred_check_branch
      %166 = sbr.rel (0) target = $region97
    $region96: #{tpu_custom_call.1} parent=1 // pred_region
      %168 = dma.done [#allocation15], 16
    $region97: #{tpu_custom_call.1} parent=1 // pred_fallthru
      _
    %v169 = vld [vmem:[#allocation2] sm:$0x7f]
    %v170 = vld [vmem:[#allocation5] sm:$0x7f]
    %v171 = vld [vmem:[#allocation7] sm:$0x7f]
    %v172 = vld [vmem:[%s3] sm:$0xff]
    %v173 = vld [vmem:[%s3 + $0x8] sm:$0xff]
    %v174 = vld [vmem:[%s4] sm:$0xff]
    %v175 = vld [vmem:[%s4 + $0x8] sm:$0xff]
    %v176 = vld [vmem:[%s5] sm:$0xff]
    %v177 = vld [vmem:[%s5 + $0x8] sm:$0xff]
    %v178 = vld [vmem:[%s6] sm:$0xff]
    %v179 = vld [vmem:[%s6 + $0x8] sm:$0xff]
    %v180 = vld [vmem:[%s6 + $0x10] sm:$0xff]
    %v181 = vld [vmem:[%s7] sm:$0x1]
    %v182 = vld [vmem:[#allocation8] sm:$0xff]
    %v183 = vld [vmem:[#allocation8 + $0x8] sm:$0xff]
    %v184 = vld [vmem:[#allocation10] sm:$0x1]
    %v185 = vld [vmem:[%s10] sm:$0xff]
    %v186 = vld [vmem:[#allocation11] sm:$0xff]
    %v187 = vld [vmem:[#allocation11 + $0x8] sm:$0xff]
    %v188 = vld [vmem:[#allocation13] sm:$0xff]
    %v189 = vld [vmem:[#allocation13 + $0x8] sm:$0xff]
    %v190 = vld [vmem:[#allocation14] sm:$0x1]
    %v191 = vld [vmem:[%s14] sm:$0xff]
    %v192 = vld [vmem:[%s14 + $0x8] sm:$0xff]
    %v193 = vld [vmem:[%s14 + $0x10] sm:$0xff]
    %v194 = vld [vmem:[%s15] sm:$0x7]
    %v195 = vlaneseq
    %v196 = vand.u32 %v195, 127
    %197 = vset.pattern.permute.xlu0 0
    %198 = vperm.xlu0 %197, %v172
    %v199 = vpop.permute.xlu0 %198
    %200 = vset.pattern.permute.xlu0 0
    %201 = vperm.xlu0 %200, %v173
    %v202 = vpop.permute.xlu0 %201
    %vm203 = vcmp.eq.s32.totalorder %v196, %v199
    %vm204 = vcmp.eq.s32.totalorder %v196, %v202
    %v205 = vsel %vm203, 1, 0
    %v206 = vsel %vm204, 1, 0
    %v207 = vcvt.s32.f32 %v205
    %v208 = vcvt.s32.f32 %v206
    %209 = vset.pattern.permute.xlu0 0
    %210 = vperm.xlu0 %209, %v174
    %v211 = vpop.permute.xlu0 %210
    %212 = vset.pattern.permute.xlu0 0
    %213 = vperm.xlu0 %212, %v175
    %v214 = vpop.permute.xlu0 %213
    %vm215 = vcmp.eq.s32.totalorder %v196, %v211
    %vm216 = vcmp.eq.s32.totalorder %v196, %v214
    %v217 = vsel %vm215, 1, 0
    %v218 = vsel %vm216, 1, 0
    %v219 = vcvt.s32.f32 %v217
    %v220 = vcvt.s32.f32 %v218
    %221 = vset.pattern.permute.xlu0 0
    %222 = vperm.xlu0 %221, %v176
    %v223 = vpop.permute.xlu0 %222
    %224 = vset.pattern.permute.xlu0 0
    %225 = vperm.xlu0 %224, %v177
    %v226 = vpop.permute.xlu0 %225
    %vm227 = vcmp.eq.s32.totalorder %v196, %v223
    %vm228 = vcmp.eq.s32.totalorder %v196, %v226
    %v229 = vsel %vm227, 1, 0
    %v230 = vsel %vm228, 1, 0
    %v231 = vcvt.s32.f32 %v229
    %v232 = vcvt.s32.f32 %v230
    %vm233 = vcmask 56320
    %v235 = vsel %vm233, %v207, 0
    %v238 = vsel %vm233, %v208, 0
    %vm240 = vcmask 1046528
    %v242 = vsel %vm240, %v171, 0
    %244 = vmatpush.msra.mxu0 0.0
    %245 = vmatpush.msra.mxu0 0.0
    %246 = vmatpush.msra.mxu0 0.0
    %247 = vmatpush.msra.mxu0 0.0
    %248 = vmatpush.msra.mxu0 0.0
    %249 = vmatpush.msra.mxu0 0.0
    %250 = vmatpush.msra.mxu0 0.0
    %251 = vmatpush.msra.mxu0 0.0
    %252 = vmatpush.msra.mxu0 0.0
    %253 = vmatpush.msra.mxu0 0.0
    %254 = vmatpush.msra.mxu0 0.0
    %255 = vmatpush.msra.mxu0 0.0
    %256 = vmatpush.msra.mxu0 0.0
    %257 = vmatpush.msra.mxu0 0.0
    %258 = vmatpush.msra.mxu0 0.0
    %259 = vmatpush.msra.mxu0 %v242
    %260 = vmatmul.f32.gmra.mxu0 %v235
    %v261 = vpop.f32.mrf.mxu0
    %v262 = vadd.f32 0.0, %v261
    %263 = vmatmul.f32.gmra.mxu0 %v238
    %v264 = vpop.f32.mrf.mxu0
    %v265 = vadd.f32 0.0, %v264
    %266 = vdwg.mxu0
    %v268 = vsel %vm233, %v219, 0
    %v271 = vsel %vm233, %v220, 0
    %273 = vmatpush.msra.mxu0 0.0
    %274 = vmatpush.msra.mxu0 0.0
    %275 = vmatpush.msra.mxu0 0.0
    %276 = vmatpush.msra.mxu0 0.0
    %277 = vmatpush.msra.mxu0 0.0
    %278 = vmatpush.msra.mxu0 0.0
    %279 = vmatpush.msra.mxu0 0.0
    %280 = vmatpush.msra.mxu0 0.0
    %281 = vmatpush.msra.mxu0 0.0
    %282 = vmatpush.msra.mxu0 0.0
    %283 = vmatpush.msra.mxu0 0.0
    %284 = vmatpush.msra.mxu0 0.0
    %285 = vmatpush.msra.mxu0 0.0
    %286 = vmatpush.msra.mxu0 0.0
    %287 = vmatpush.msra.mxu0 0.0
    %288 = vmatpush.msra.mxu0 %v242
    %289 = vmatmul.f32.gmra.mxu0 %v268
    %v290 = vpop.f32.mrf.mxu0
    %v291 = vadd.f32 0.0, %v290
    %292 = vmatmul.f32.gmra.mxu0 %v271
    %v293 = vpop.f32.mrf.mxu0
    %v294 = vadd.f32 0.0, %v293
    %295 = vdwg.mxu0
    %v297 = vperm.slane %v181, 0
    %vm299 = vcmask 195584
    %v301 = vsel %vm299, %v262, 0
    %v304 = vsel %vm299, %v265, 0
    %v307 = vsel %vm299, %v291, 0
    %v310 = vsel %vm299, %v294, 0
    %312 = vmatpush.msra.mxu0 0.0
    %313 = vmatpush.msra.mxu0 0.0
    %314 = vmatpush.msra.mxu0 0.0
    %315 = vmatpush.msra.mxu0 0.0
    %316 = vmatpush.msra.mxu0 0.0
    %317 = vmatpush.msra.mxu0 0.0
    %318 = vmatpush.msra.mxu0 0.0
    %319 = vmatpush.msra.mxu0 0.0
    %320 = vmatpush.msra.mxu0 0.0
    %321 = vmatpush.msra.mxu0 0.0
    %322 = vmatpush.msra.mxu0 0.0
    %323 = vmatpush.msra.mxu0 0.0
    %324 = vmatpush.msra.mxu0 0.0
    %325 = vmatpush.msra.mxu0 %v180
    %326 = vmatpush.msra.mxu0 %v179
    %327 = vmatpush.msra.mxu0 %v178
    %328 = vmatmul.f32.gmra.mxu0 %v301
    %v329 = vpop.f32.mrf.mxu0
    %v330 = vadd.f32 %v297, %v329
    %331 = vmatmul.f32.gmra.mxu0 %v304
    %v332 = vpop.f32.mrf.mxu0
    %v333 = vadd.f32 %v297, %v332
    %334 = vmatmul.f32.gmra.mxu0 %v307
    %v335 = vpop.f32.mrf.mxu0
    %v336 = vadd.f32 %v297, %v335
    %337 = vmatmul.f32.gmra.mxu0 %v310
    %v338 = vpop.f32.mrf.mxu0
    %v339 = vadd.f32 %v297, %v338
    %340 = vdwg.mxu0
    %v341 = vxor.u32 %v330, 2147483648
    %v342 = vxor.u32 %v333, 2147483648
    %v343 = vxor.u32 %v336, 2147483648
    %v344 = vxor.u32 %v339, 2147483648
    %v345 = vmul.f32 %v341, 1.442695
    %v346 = vpow.pop %v345
    %v347 = vmul.f32 %v342, 1.442695
    %v348 = vpow.pop %v347
    %v349 = vmul.f32 %v343, 1.442695
    %v350 = vpow.pop %v349
    %v351 = vmul.f32 %v344, 1.442695
    %v352 = vpow.pop %v351
    %v353 = vadd.f32 %v346, 1.0
    %v354 = vadd.f32 %v348, 1.0
    %v355 = vadd.f32 %v350, 1.0
    %v356 = vadd.f32 %v352, 1.0
    %v357 = vrcp.pop %v353
    %v358 = vmul.f32 %v353, %v357
    %v359 = vsub.f32 1.0, %v358
    %v360 = vmul.f32 %v357, %v359
    %v361 = vadd.f32 %v357, %v360
    %vm362 = vweird.f32 %v353
    %vm363 = vweird.f32 %v357
    %vm364 = vmor %vm362, %vm363
    %v365 = vsel %vm364, %v357, %v361
    %v366 = vand.u32 2147483647, %v353
    %vm367 = vcmp.eq.f32.partialorder %v366, 8.507059e+37
    %v368 = vand.u32 %v353, 2147483648
    %v369 = vor.u32 1.1754944e-38, %v368
    %v370 = vsel %vm367, %v369, %v365
    %v371 = vmul.f32 1.0, %v370
    %v372 = vrcp.pop %v354
    %v373 = vmul.f32 %v354, %v372
    %v374 = vsub.f32 1.0, %v373
    %v375 = vmul.f32 %v372, %v374
    %v376 = vadd.f32 %v372, %v375
    %vm377 = vweird.f32 %v354
    %vm378 = vweird.f32 %v372
    %vm379 = vmor %vm377, %vm378
    %v380 = vsel %vm379, %v372, %v376
    %v381 = vand.u32 2147483647, %v354
    %vm382 = vcmp.eq.f32.partialorder %v381, 8.507059e+37
    %v383 = vand.u32 %v354, 2147483648
    %v384 = vor.u32 1.1754944e-38, %v383
    %v385 = vsel %vm382, %v384, %v380
    %v386 = vmul.f32 1.0, %v385
    %v387 = vrcp.pop %v355
    %v388 = vmul.f32 %v355, %v387
    %v389 = vsub.f32 1.0, %v388
    %v390 = vmul.f32 %v387, %v389
    %v391 = vadd.f32 %v387, %v390
    %vm392 = vweird.f32 %v355
    %vm393 = vweird.f32 %v387
    %vm394 = vmor %vm392, %vm393
    %v395 = vsel %vm394, %v387, %v391
    %v396 = vand.u32 2147483647, %v355
    %vm397 = vcmp.eq.f32.partialorder %v396, 8.507059e+37
    %v398 = vand.u32 %v355, 2147483648
    %v399 = vor.u32 1.1754944e-38, %v398
    %v400 = vsel %vm397, %v399, %v395
    %v401 = vmul.f32 1.0, %v400
    %v402 = vrcp.pop %v356
    %v403 = vmul.f32 %v356, %v402
    %v404 = vsub.f32 1.0, %v403
    %v405 = vmul.f32 %v402, %v404
    %v406 = vadd.f32 %v402, %v405
    %vm407 = vweird.f32 %v356
    %vm408 = vweird.f32 %v402
    %vm409 = vmor %vm407, %vm408
    %v410 = vsel %vm409, %v402, %v406
    %v411 = vand.u32 2147483647, %v356
    %vm412 = vcmp.eq.f32.partialorder %v411, 8.507059e+37
    %v413 = vand.u32 %v356, 2147483648
    %v414 = vor.u32 1.1754944e-38, %v413
    %v415 = vsel %vm412, %v414, %v410
    %v416 = vmul.f32 1.0, %v415
    %v417 = vtanh.pop %v330
    %v418 = vtanh.pop %v333
    %v419 = vtanh.pop %v336
    %v420 = vtanh.pop %v339
    %421 = vrot.lane.b32.xlu0 %v262, 120
    %v422 = vpop.permute.xlu0 %421
    %423 = vrot.lane.b32.xlu0 %v265, 120
    %v424 = vpop.permute.xlu0 %423
    %425 = vrot.lane.b32.xlu0 %v291, 120
    %v426 = vpop.permute.xlu0 %425
    %427 = vrot.lane.b32.xlu0 %v294, 120
    %v428 = vpop.permute.xlu0 %427
    %v433 = vmul.f32 %v371, %v422
    %v434 = vmul.f32 %v386, %v424
    %v435 = vmul.f32 %v401, %v426
    %v436 = vmul.f32 %v416, %v428
    %441 = vrot.lane.b32.xlu0 %v417, 112
    %v442 = vpop.permute.xlu0 %441
    %443 = vrot.lane.b32.xlu0 %v418, 112
    %v444 = vpop.permute.xlu0 %443
    %445 = vrot.lane.b32.xlu0 %v419, 112
    %v446 = vpop.permute.xlu0 %445
    %447 = vrot.lane.b32.xlu0 %v420, 112
    %v448 = vpop.permute.xlu0 %447
    %v453 = vmul.f32 %v371, %v442
    %v454 = vmul.f32 %v386, %v444
    %v455 = vmul.f32 %v401, %v446
    %v456 = vmul.f32 %v416, %v448
    %461 = vrot.lane.b32.xlu0 %v453, 8
    %v462 = vpop.permute.xlu0 %461
    %463 = vrot.lane.b32.xlu0 %v454, 8
    %v464 = vpop.permute.xlu0 %463
    %465 = vrot.lane.b32.xlu0 %v455, 8
    %v466 = vpop.permute.xlu0 %465
    %467 = vrot.lane.b32.xlu0 %v456, 8
    %v468 = vpop.permute.xlu0 %467
    %v473 = vadd.f32 %v433, %v462
    %v474 = vadd.f32 %v434, %v464
    %v475 = vadd.f32 %v435, %v466
    %v476 = vadd.f32 %v436, %v468
    %v477 = vtanh.pop %v473
    %v478 = vtanh.pop %v474
    %v479 = vtanh.pop %v475
    %v480 = vtanh.pop %v476
    %485 = vrot.lane.b32.xlu0 %v477, 16
    %v486 = vpop.permute.xlu0 %485
    %487 = vrot.lane.b32.xlu0 %v478, 16
    %v488 = vpop.permute.xlu0 %487
    %489 = vrot.lane.b32.xlu0 %v479, 16
    %v490 = vpop.permute.xlu0 %489
    %491 = vrot.lane.b32.xlu0 %v480, 16
    %v492 = vpop.permute.xlu0 %491
    %v497 = vmul.f32 %v371, %v486
    %v498 = vmul.f32 %v386, %v488
    %v499 = vmul.f32 %v401, %v490
    %v500 = vmul.f32 %v416, %v492
    %v501 = vadd.f32 %v497, %v499
    %v502 = vadd.f32 %v498, %v500
    %v503 = vadd.f32 %v473, %v475
    %v504 = vadd.f32 %v474, %v476
    %507 = vrot.lane.b32.xlu0 %v501, 104
    %v508 = vpop.permute.xlu0 %507
    %509 = vrot.lane.b32.xlu0 %v502, 104
    %v510 = vpop.permute.xlu0 %509
    %vm513 = vcmask 64512
    %v514 = vsel %vm513, %v508, %v503
    %v515 = vsel %vm513, %v510, %v504
    %516 = vxpose.xlu0.b32.start [1/16] %v231, 128
    %517 = vxpose.xlu0.b32.cont [2/16] %v232, 128
    %518 = vxpose.xlu0.b32.cont [3/16] 0.0, 128
    %519 = vxpose.xlu0.b32.cont [4/16] 0.0, 128
    %520 = vxpose.xlu0.b32.cont [5/16] 0.0, 128
    %521 = vxpose.xlu0.b32.cont [6/16] 0.0, 128
    %522 = vxpose.xlu0.b32.cont [7/16] 0.0, 128
    %523 = vxpose.xlu0.b32.cont [8/16] 0.0, 128
    %524 = vxpose.xlu0.b32.cont [9/16] 0.0, 128
    %525 = vxpose.xlu0.b32.cont [10/16] 0.0, 128
    %526 = vxpose.xlu0.b32.cont [11/16] 0.0, 128
    %527 = vxpose.xlu0.b32.cont [12/16] 0.0, 128
    %528 = vxpose.xlu0.b32.cont [13/16] 0.0, 128
    %529 = vxpose.xlu0.b32.cont [14/16] 0.0, 128
    %530 = vxpose.xlu0.b32.cont [15/16] 0.0, 128
    %531 = vxpose.xlu0.b32.end [16/16] 0.0, 128
    %v532 = vpop.trf.xlu0
    %v533 = vpop.trf.xlu0
    %v534 = vpop.trf.xlu0
    %v535 = vpop.trf.xlu0
    %v536 = vpop.trf.xlu0
    %v537 = vpop.trf.xlu0
    %v538 = vpop.trf.xlu0
    %v539 = vpop.trf.xlu0
    %v540 = vpop.trf.xlu0
    %v541 = vpop.trf.xlu0
    %v542 = vpop.trf.xlu0
    %v543 = vpop.trf.xlu0
    %v544 = vpop.trf.xlu0
    %v545 = vpop.trf.xlu0
    %v546 = vpop.trf.xlu0
    %v547 = vpop.trf.xlu0
    %vm548 = vcmask 130048
    %v550 = vsel %vm548, %v532, 0
    %552 = vmatpush.msra.mxu0 0.0
    %553 = vmatpush.msra.mxu0 0.0
    %554 = vmatpush.msra.mxu0 0.0
    %555 = vmatpush.msra.mxu0 0.0
    %556 = vmatpush.msra.mxu0 0.0
    %557 = vmatpush.msra.mxu0 0.0
    %558 = vmatpush.msra.mxu0 0.0
    %559 = vmatpush.msra.mxu0 0.0
    %560 = vmatpush.msra.mxu0 0.0
    %561 = vmatpush.msra.mxu0 0.0
    %562 = vmatpush.msra.mxu0 0.0
    %563 = vmatpush.msra.mxu0 0.0
    %564 = vmatpush.msra.mxu0 0.0
    %565 = vmatpush.msra.mxu0 0.0
    %566 = vmatpush.msra.mxu0 1.0
    %567 = vmatpush.msra.mxu0 1.0
    %568 = vmatmul.f32.gmra.mxu0 %v550
    %v569 = vpop.f32.mrf.mxu0
    %v570 = vadd.f32 0.0, %v569
    %571 = vdwg.mxu0
    %v572 = vsub.f32 1.0, %v570
    %574 = vset.pattern.permute.xlu0 0
    %575 = vperm.xlu0 %574, %v572
    %v576 = vpop.permute.xlu0 %575
    %v578 = vmul.f32 %v170, %v576
    %579 = vmatpush.msra.mxu0 0.0
    %580 = vmatpush.msra.mxu0 0.0
    %581 = vmatpush.msra.mxu0 0.0
    %582 = vmatpush.msra.mxu0 0.0
    %583 = vmatpush.msra.mxu0 0.0
    %584 = vmatpush.msra.mxu0 0.0
    %585 = vmatpush.msra.mxu0 0.0
    %586 = vmatpush.msra.mxu0 0.0
    %587 = vmatpush.msra.mxu0 0.0
    %588 = vmatpush.msra.mxu0 0.0
    %589 = vmatpush.msra.mxu0 0.0
    %590 = vmatpush.msra.mxu0 0.0
    %591 = vmatpush.msra.mxu0 0.0
    %592 = vmatpush.msra.mxu0 0.0
    %593 = vmatpush.msra.mxu0 %v515
    %594 = vmatpush.msra.mxu0 %v514
    %595 = vmatmul.f32.gmra.mxu0 %v550
    %v596 = vpop.f32.mrf.mxu0
    %v597 = vadd.f32 0.0, %v596
    %598 = vdwg.mxu0
    %v599 = vadd.f32 %v578, %v597
    %vm600 = vcmp.ge.s32.totalorder %v177, 0
    %v601 = vsel %vm600, 1, 0
    %v602 = vcvt.s32.f32 %v601
    %v604 = vsel %vm233, %v232, 0
    %v607 = vsel %vm240, %v599, 0
    %609 = vmatpush.msra.mxu0 0.0
    %610 = vmatpush.msra.mxu0 0.0
    %611 = vmatpush.msra.mxu0 0.0
    %612 = vmatpush.msra.mxu0 0.0
    %613 = vmatpush.msra.mxu0 0.0
    %614 = vmatpush.msra.mxu0 0.0
    %615 = vmatpush.msra.mxu0 0.0
    %616 = vmatpush.msra.mxu0 0.0
    %617 = vmatpush.msra.mxu0 0.0
    %618 = vmatpush.msra.mxu0 0.0
    %619 = vmatpush.msra.mxu0 0.0
    %620 = vmatpush.msra.mxu0 0.0
    %621 = vmatpush.msra.mxu0 0.0
    %622 = vmatpush.msra.mxu0 0.0
    %623 = vmatpush.msra.mxu0 0.0
    %624 = vmatpush.msra.mxu0 %v607
    %625 = vmatmul.f32.gmra.mxu0 %v604
    %v626 = vpop.f32.mrf.mxu0
    %v627 = vadd.f32 0.0, %v626
    %628 = vdwg.mxu0
    %v630 = vsel %vm240, %v169, 0
    %632 = vmatpush.msra.mxu0 0.0
    %633 = vmatpush.msra.mxu0 0.0
    %634 = vmatpush.msra.mxu0 0.0
    %635 = vmatpush.msra.mxu0 0.0
    %636 = vmatpush.msra.mxu0 0.0
    %637 = vmatpush.msra.mxu0 0.0
    %638 = vmatpush.msra.mxu0 0.0
    %639 = vmatpush.msra.mxu0 0.0
    %640 = vmatpush.msra.mxu0 0.0
    %641 = vmatpush.msra.mxu0 0.0
    %642 = vmatpush.msra.mxu0 0.0
    %643 = vmatpush.msra.mxu0 0.0
    %644 = vmatpush.msra.mxu0 0.0
    %645 = vmatpush.msra.mxu0 0.0
    %646 = vmatpush.msra.mxu0 0.0
    %647 = vmatpush.msra.mxu0 %v630
    %648 = vmatmul.f32.gmra.mxu0 %v604
    %v649 = vpop.f32.mrf.mxu0
    %v650 = vadd.f32 0.0, %v649
    %651 = vdwg.mxu0
    %652 = vmatpush.msra.mxu0 0.0
    %653 = vmatpush.msra.mxu0 0.0
    %654 = vmatpush.msra.mxu0 0.0
    %655 = vmatpush.msra.mxu0 0.0
    %656 = vmatpush.msra.mxu0 0.0
    %657 = vmatpush.msra.mxu0 0.0
    %658 = vmatpush.msra.mxu0 0.0
    %659 = vmatpush.msra.mxu0 0.0
    %660 = vmatpush.msra.mxu0 0.0
    %661 = vmatpush.msra.mxu0 0.0
    %662 = vmatpush.msra.mxu0 0.0
    %663 = vmatpush.msra.mxu0 0.0
    %664 = vmatpush.msra.mxu0 0.0
    %665 = vmatpush.msra.mxu0 0.0
    %666 = vmatpush.msra.mxu0 0.0
    %667 = vmatpush.msra.mxu0 %v630
    %668 = vmatmul.f32.gmra.mxu0 %v238
    %v669 = vpop.f32.mrf.mxu0
    %v670 = vadd.f32 0.0, %v669
    %671 = vdwg.mxu0
    %672 = vmatpush.msra.mxu0 0.0
    %673 = vmatpush.msra.mxu0 0.0
    %674 = vmatpush.msra.mxu0 0.0
    %675 = vmatpush.msra.mxu0 0.0
    %676 = vmatpush.msra.mxu0 0.0
    %677 = vmatpush.msra.mxu0 0.0
    %678 = vmatpush.msra.mxu0 0.0
    %679 = vmatpush.msra.mxu0 0.0
    %680 = vmatpush.msra.mxu0 0.0
    %681 = vmatpush.msra.mxu0 0.0
    %682 = vmatpush.msra.mxu0 0.0
    %683 = vmatpush.msra.mxu0 0.0
    %684 = vmatpush.msra.mxu0 0.0
    %685 = vmatpush.msra.mxu0 0.0
    %686 = vmatpush.msra.mxu0 0.0
    %687 = vmatpush.msra.mxu0 %v630
    %688 = vmatmul.f32.gmra.mxu0 %v271
    %v689 = vpop.f32.mrf.mxu0
    %v690 = vadd.f32 0.0, %v689
    %691 = vdwg.mxu0
    %v693 = vperm.slane %v184, 0
    %v696 = vsel %vm548, %v627, 0
    %698 = vmatpush.msra.mxu0 0.0
    %699 = vmatpush.msra.mxu0 0.0
    %700 = vmatpush.msra.mxu0 0.0
    %701 = vmatpush.msra.mxu0 0.0
    %702 = vmatpush.msra.mxu0 0.0
    %703 = vmatpush.msra.mxu0 0.0
    %704 = vmatpush.msra.mxu0 0.0
    %705 = vmatpush.msra.mxu0 0.0
    %706 = vmatpush.msra.mxu0 0.0
    %707 = vmatpush.msra.mxu0 0.0
    %708 = vmatpush.msra.mxu0 0.0
    %709 = vmatpush.msra.mxu0 0.0
    %710 = vmatpush.msra.mxu0 0.0
    %711 = vmatpush.msra.mxu0 0.0
    %712 = vmatpush.msra.mxu0 %v183
    %713 = vmatpush.msra.mxu0 %v182
    %714 = vmatmul.f32.gmra.mxu0 %v696
    %v715 = vpop.f32.mrf.mxu0
    %v716 = vadd.f32 %v693, %v715
    %717 = vdwg.mxu0
    %v718 = vtanh.pop %v716
    %719 = vmatpush.msra.mxu0 0.0
    %720 = vmatpush.msra.mxu0 0.0
    %721 = vmatpush.msra.mxu0 0.0
    %722 = vmatpush.msra.mxu0 0.0
    %723 = vmatpush.msra.mxu0 0.0
    %724 = vmatpush.msra.mxu0 0.0
    %725 = vmatpush.msra.mxu0 0.0
    %726 = vmatpush.msra.mxu0 0.0
    %727 = vmatpush.msra.mxu0 0.0
    %728 = vmatpush.msra.mxu0 0.0
    %729 = vmatpush.msra.mxu0 0.0
    %730 = vmatpush.msra.mxu0 0.0
    %731 = vmatpush.msra.mxu0 0.0
    %732 = vmatpush.msra.mxu0 0.0
    %733 = vmatpush.msra.mxu0 %v187
    %734 = vmatpush.msra.mxu0 %v186
    %735 = vmatmul.f32.gmra.mxu0 %v696
    %v736 = vpop.f32.mrf.mxu0
    %v737 = vadd.f32 0.0, %v736
    %738 = vdwg.mxu0
    %v740 = vsel %vm513, %v650, 0
    %742 = vmatpush.msra.mxu0 0.0
    %743 = vmatpush.msra.mxu0 0.0
    %744 = vmatpush.msra.mxu0 0.0
    %745 = vmatpush.msra.mxu0 0.0
    %746 = vmatpush.msra.mxu0 0.0
    %747 = vmatpush.msra.mxu0 0.0
    %748 = vmatpush.msra.mxu0 0.0
    %749 = vmatpush.msra.mxu0 0.0
    %750 = vmatpush.msra.mxu0 0.0
    %751 = vmatpush.msra.mxu0 0.0
    %752 = vmatpush.msra.mxu0 0.0
    %753 = vmatpush.msra.mxu0 0.0
    %754 = vmatpush.msra.mxu0 0.0
    %755 = vmatpush.msra.mxu0 0.0
    %756 = vmatpush.msra.mxu0 0.0
    %757 = vmatpush.msra.mxu0 %v185
    %758 = vmatmul.f32.gmra.mxu0 %v740
    %v759 = vpop.f32.mrf.mxu0
    %v760 = vadd.f32 %v737, %v759
    %761 = vdwg.mxu0
    %v763 = vsel %vm548, %v718, 0
    %765 = vmatpush.msra.mxu0 0.0
    %766 = vmatpush.msra.mxu0 0.0
    %767 = vmatpush.msra.mxu0 0.0
    %768 = vmatpush.msra.mxu0 0.0
    %769 = vmatpush.msra.mxu0 0.0
    %770 = vmatpush.msra.mxu0 0.0
    %771 = vmatpush.msra.mxu0 0.0
    %772 = vmatpush.msra.mxu0 0.0
    %773 = vmatpush.msra.mxu0 0.0
    %774 = vmatpush.msra.mxu0 0.0
    %775 = vmatpush.msra.mxu0 0.0
    %776 = vmatpush.msra.mxu0 0.0
    %777 = vmatpush.msra.mxu0 0.0
    %778 = vmatpush.msra.mxu0 0.0
    %779 = vmatpush.msra.mxu0 %v189
    %780 = vmatpush.msra.mxu0 %v188
    %781 = vmatmul.f32.gmra.mxu0 %v763
    %v782 = vpop.f32.mrf.mxu0
    %v783 = vadd.f32 0.0, %v782
    %784 = vdwg.mxu0
    %v785 = vadd.f32 %v760, %v783
    %v787 = vperm.slane %v190, 0
    %v789 = vadd.f32 %v785, %v787
    %v790 = vxor.u32 %v789, 2147483648
    %v791 = vmul.f32 %v790, 1.442695
    %v792 = vpow.pop %v791
    %v793 = vadd.f32 %v792, 1.0
    %v794 = vrcp.pop %v793
    %v795 = vmul.f32 %v793, %v794
    %v796 = vsub.f32 1.0, %v795
    %v797 = vmul.f32 %v794, %v796
    %v798 = vadd.f32 %v794, %v797
    %vm799 = vweird.f32 %v793
    %vm800 = vweird.f32 %v794
    %vm801 = vmor %vm799, %vm800
    %v802 = vsel %vm801, %v794, %v798
    %v803 = vand.u32 2147483647, %v793
    %vm804 = vcmp.eq.f32.partialorder %v803, 8.507059e+37
    %v805 = vand.u32 %v793, 2147483648
    %v806 = vor.u32 1.1754944e-38, %v805
    %v807 = vsel %vm804, %v806, %v802
    %v808 = vmul.f32 1.0, %v807
    %v809 = vtanh.pop %v789
    %v810 = vmul.f32 %v808, %v718
    %812 = vrot.lane.b32.xlu0 %v809, 96
    %v813 = vpop.permute.xlu0 %812
    %v815 = vmul.f32 %v808, %v813
    %817 = vrot.lane.b32.xlu0 %v815, 16
    %v818 = vpop.permute.xlu0 %817
    %v820 = vadd.f32 %v810, %v818
    %v821 = vtanh.pop %v820
    %823 = vrot.lane.b32.xlu0 %v821, 32
    %v824 = vpop.permute.xlu0 %823
    %v826 = vmul.f32 %v808, %v824
    %828 = vrot.lane.b32.xlu0 %v826, 120
    %v829 = vpop.permute.xlu0 %828
    %v831 = vperm.slane %v194, 0
    %v832 = vperm.slane %v194, 1
    %v833 = vperm.slane %v194, 2
    %837 = vrot.lane.b32.xlu0 %v826, 80
    %v838 = vpop.permute.xlu0 %837
    %839 = vrot.lane.b32.xlu0 %v829, 80
    %v840 = vpop.permute.xlu0 %839
    %v841 = vsel %vm513, %v838, 0
    %v843 = vsel %vm513, %v840, 0
    %845 = vmatpush.msra.mxu0 0.0
    %846 = vmatpush.msra.mxu0 0.0
    %847 = vmatpush.msra.mxu0 0.0
    %848 = vmatpush.msra.mxu0 0.0
    %849 = vmatpush.msra.mxu0 0.0
    %850 = vmatpush.msra.mxu0 0.0
    %851 = vmatpush.msra.mxu0 0.0
    %852 = vmatpush.msra.mxu0 0.0
    %853 = vmatpush.msra.mxu0 0.0
    %854 = vmatpush.msra.mxu0 0.0
    %855 = vmatpush.msra.mxu0 0.0
    %856 = vmatpush.msra.mxu0 0.0
    %857 = vmatpush.msra.mxu0 0.0
    %858 = vmatpush.msra.mxu0 0.0
    %859 = vmatpush.msra.mxu0 0.0
    %860 = vmatpush.msra.mxu0 %v191
    %861 = vmatmul.f32.gmra.mxu0 %v841
    %v862 = vpop.f32.mrf.mxu0
    %v863 = vadd.f32 %v831, %v862
    %864 = vmatmul.f32.gmra.mxu0 %v843
    %v865 = vpop.f32.mrf.mxu0
    %v866 = vadd.f32 %v831, %v865
    %867 = vdwg.mxu0
    %868 = vmatpush.msra.mxu0 0.0
    %869 = vmatpush.msra.mxu0 0.0
    %870 = vmatpush.msra.mxu0 0.0
    %871 = vmatpush.msra.mxu0 0.0
    %872 = vmatpush.msra.mxu0 0.0
    %873 = vmatpush.msra.mxu0 0.0
    %874 = vmatpush.msra.mxu0 0.0
    %875 = vmatpush.msra.mxu0 0.0
    %876 = vmatpush.msra.mxu0 0.0
    %877 = vmatpush.msra.mxu0 0.0
    %878 = vmatpush.msra.mxu0 0.0
    %879 = vmatpush.msra.mxu0 0.0
    %880 = vmatpush.msra.mxu0 0.0
    %881 = vmatpush.msra.mxu0 0.0
    %882 = vmatpush.msra.mxu0 0.0
    %883 = vmatpush.msra.mxu0 %v192
    %884 = vmatmul.f32.gmra.mxu0 %v841
    %v885 = vpop.f32.mrf.mxu0
    %v886 = vadd.f32 %v832, %v885
    %887 = vmatmul.f32.gmra.mxu0 %v843
    %v888 = vpop.f32.mrf.mxu0
    %v889 = vadd.f32 %v832, %v888
    %890 = vdwg.mxu0
    %891 = vmatpush.msra.mxu0 0.0
    %892 = vmatpush.msra.mxu0 0.0
    %893 = vmatpush.msra.mxu0 0.0
    %894 = vmatpush.msra.mxu0 0.0
    %895 = vmatpush.msra.mxu0 0.0
    %896 = vmatpush.msra.mxu0 0.0
    %897 = vmatpush.msra.mxu0 0.0
    %898 = vmatpush.msra.mxu0 0.0
    %899 = vmatpush.msra.mxu0 0.0
    %900 = vmatpush.msra.mxu0 0.0
    %901 = vmatpush.msra.mxu0 0.0
    %902 = vmatpush.msra.mxu0 0.0
    %903 = vmatpush.msra.mxu0 0.0
    %904 = vmatpush.msra.mxu0 0.0
    %905 = vmatpush.msra.mxu0 0.0
    %906 = vmatpush.msra.mxu0 %v193
    %907 = vmatmul.f32.gmra.mxu0 %v841
    %v908 = vpop.f32.mrf.mxu0
    %v909 = vadd.f32 %v833, %v908
    %910 = vmatmul.f32.gmra.mxu0 %v843
    %v911 = vpop.f32.mrf.mxu0
    %v912 = vadd.f32 %v833, %v911
    %913 = vdwg.mxu0
    %vm914 = vcmask 162816
    %v915 = vsel %vm914, %v863, -inf
    %916 = vmax.xlane.f32.xlu0 %v915
    %v917 = vpop.xlane.xlu0 %916
    %v918 = vsel %vm914, %v866, -inf
    %919 = vmax.xlane.f32.xlu0 %v918
    %v920 = vpop.xlane.xlu0 %919
    %v921 = vsub.f32 %v863, %v917
    %v922 = vsub.f32 %v866, %v920
    %v923 = vmul.f32 %v921, 1.442695
    %v924 = vpow.pop %v923
    %v925 = vmul.f32 %v922, 1.442695
    %v926 = vpow.pop %v925
    %v927 = vsel %vm914, %v924, 0.0
    %928 = vadd.xlane.f32.xlu0 %v927
    %v929 = vpop.xlane.xlu0 %928
    %v930 = vsel %vm914, %v926, 0.0
    %931 = vadd.xlane.f32.xlu0 %v930
    %v932 = vpop.xlane.xlu0 %931
    %v933 = vrcp.pop %v929
    %v934 = vmul.f32 %v929, %v933
    %v935 = vsub.f32 1.0, %v934
    %v936 = vmul.f32 %v933, %v935
    %v937 = vadd.f32 %v933, %v936
    %vm938 = vweird.f32 %v929
    %vm939 = vweird.f32 %v933
    %vm940 = vmor %vm938, %vm939
    %v941 = vsel %vm940, %v933, %v937
    %v942 = vand.u32 2147483647, %v929
    %vm943 = vcmp.eq.f32.partialorder %v942, 8.507059e+37
    %v944 = vand.u32 %v929, 2147483648
    %v945 = vor.u32 1.1754944e-38, %v944
    %v946 = vsel %vm943, %v945, %v941
    %v947 = vmul.f32 %v924, %v946
    %v948 = vrcp.pop %v932
    %v949 = vmul.f32 %v932, %v948
    %v950 = vsub.f32 1.0, %v949
    %v951 = vmul.f32 %v948, %v950
    %v952 = vadd.f32 %v948, %v951
    %vm953 = vweird.f32 %v932
    %vm954 = vweird.f32 %v948
    %vm955 = vmor %vm953, %vm954
    %v956 = vsel %vm955, %v948, %v952
    %v957 = vand.u32 2147483647, %v932
    %vm958 = vcmp.eq.f32.partialorder %v957, 8.507059e+37
    %v959 = vand.u32 %v932, 2147483648
    %v960 = vor.u32 1.1754944e-38, %v959
    %v961 = vsel %vm958, %v960, %v956
    %v962 = vmul.f32 %v926, %v961
    %v963 = vsub.f32 0.0, %v863
    %v964 = vsub.f32 0.0, %v886
    %v965 = vsub.f32 0.0, %v866
    %v966 = vsub.f32 0.0, %v889
    %v967 = vmul.f32 %v963, 1.442695
    %v968 = vpow.pop %v967
    %v969 = vmul.f32 %v964, 1.442695
    %v970 = vpow.pop %v969
    %v971 = vmul.f32 %v965, 1.442695
    %v972 = vpow.pop %v971
    %v973 = vmul.f32 %v966, 1.442695
    %v974 = vpow.pop %v973
    %v975 = vtanh.pop %v886
    %v976 = vtanh.pop %v909
    %v977 = vtanh.pop %v889
    %v978 = vtanh.pop %v912
    %vm979 = vcmask 56352
    %v980 = vsel %vm979, %v909, -inf
    %981 = vmax.xlane.f32.xlu0 %v980
    %v982 = vpop.xlane.xlu0 %981
    %v983 = vsel %vm979, %v912, -inf
    %984 = vmax.xlane.f32.xlu0 %v983
    %v985 = vpop.xlane.xlu0 %984
    %v986 = vsub.f32 %v909, %v982
    %v987 = vsub.f32 %v912, %v985
    %v988 = vmul.f32 %v986, 1.442695
    %v989 = vpow.pop %v988
    %v990 = vmul.f32 %v987, 1.442695
    %v991 = vpow.pop %v990
    %994 = vrot.lane.b32.xlu0 %v989, 124
    %v995 = vpop.permute.xlu0 %994
    %996 = vrot.lane.b32.xlu0 %v991, 124
    %v997 = vpop.permute.xlu0 %996
    %vm1000 = vcmask 23552
    %v1001 = vsel %vm1000, %v995, 0.0
    %1002 = vadd.xlane.f32.xlu0 %v1001
    %v1003 = vpop.xlane.xlu0 %1002
    %v1004 = vsel %vm1000, %v997, 0.0
    %1005 = vadd.xlane.f32.xlu0 %v1004
    %v1006 = vpop.xlane.xlu0 %1005
    %v1007 = vrcp.pop %v1003
    %v1008 = vmul.f32 %v1003, %v1007
    %v1009 = vsub.f32 1.0, %v1008
    %v1010 = vmul.f32 %v1007, %v1009
    %v1011 = vadd.f32 %v1007, %v1010
    %vm1012 = vweird.f32 %v1003
    %vm1013 = vweird.f32 %v1007
    %vm1014 = vmor %vm1012, %vm1013
    %v1015 = vsel %vm1014, %v1007, %v1011
    %v1016 = vand.u32 2147483647, %v1003
    %vm1017 = vcmp.eq.f32.partialorder %v1016, 8.507059e+37
    %v1018 = vand.u32 %v1003, 2147483648
    %v1019 = vor.u32 1.1754944e-38, %v1018
    %v1020 = vsel %vm1017, %v1019, %v1015
    %v1021 = vmul.f32 %v989, %v1020
    %v1022 = vrcp.pop %v1006
    %v1023 = vmul.f32 %v1006, %v1022
    %v1024 = vsub.f32 1.0, %v1023
    %v1025 = vmul.f32 %v1022, %v1024
    %v1026 = vadd.f32 %v1022, %v1025
    %vm1027 = vweird.f32 %v1006
    %vm1028 = vweird.f32 %v1022
    %vm1029 = vmor %vm1027, %vm1028
    %v1030 = vsel %vm1029, %v1022, %v1026
    %v1031 = vand.u32 2147483647, %v1006
    %vm1032 = vcmp.eq.f32.partialorder %v1031, 8.507059e+37
    %v1033 = vand.u32 %v1006, 2147483648
    %v1034 = vor.u32 1.1754944e-38, %v1033
    %v1035 = vsel %vm1032, %v1034, %v1030
    %v1036 = vmul.f32 %v991, %v1035
    %vm1037 = vcmp.lt.s32.totalorder %v196, 20
    %1039 = vset.pattern.permute.xlu0 0
    %1040 = vperm.xlu0 %1039, %v670
    %v1041 = vpop.permute.xlu0 %1040
    %1044 = vset.pattern.permute.xlu0 0
    %1045 = vperm.xlu0 %1044, %v690
    %v1046 = vpop.permute.xlu0 %1045
    %1048 = vset.pattern.permute.xlu0 2
    %1049 = vperm.xlu0 %1048, %v670
    %v1050 = vpop.permute.xlu0 %1049
    %1052 = vset.pattern.permute.xlu0 2
    %1053 = vperm.xlu0 %1052, %v690
    %v1054 = vpop.permute.xlu0 %1053
    %v1056 = vsel %vm1037, %v1041, %v1050
    %v1057 = vsel %vm1037, %v1046, %v1054
    %1058 = vset.pattern.permute.xlu0 1
    %1059 = vperm.xlu0 %1058, %v670
    %v1060 = vpop.permute.xlu0 %1059
    %1062 = vset.pattern.permute.xlu0 1
    %1063 = vperm.xlu0 %1062, %v690
    %v1064 = vpop.permute.xlu0 %1063
    %1066 = vset.pattern.permute.xlu0 3
    %1067 = vperm.xlu0 %1066, %v670
    %v1068 = vpop.permute.xlu0 %1067
    %1070 = vset.pattern.permute.xlu0 3
    %1071 = vperm.xlu0 %1070, %v690
    %v1072 = vpop.permute.xlu0 %1071
    %v1074 = vsel %vm1037, %v1060, %v1068
    %v1075 = vsel %vm1037, %v1064, %v1072
    %1078 = vrot.lane.b32.xlu0 %v863, 108
    %v1079 = vpop.permute.xlu0 %1078
    %1080 = vrot.lane.b32.xlu0 %v866, 108
    %v1081 = vpop.permute.xlu0 %1080
    %v1084 = vsub.f32 %v1056, %v1079
    %v1085 = vsub.f32 %v1057, %v1081
    %v1086 = vsub.f32 %v1056, %v1081
    %v1087 = vsub.f32 %v1057, %v1079
    %1092 = vrot.lane.b32.xlu0 %v968, 8
    %v1093 = vpop.permute.xlu0 %1092
    %1094 = vrot.lane.b32.xlu0 %v970, 8
    %v1095 = vpop.permute.xlu0 %1094
    %1096 = vrot.lane.b32.xlu0 %v972, 8
    %v1097 = vpop.permute.xlu0 %1096
    %1098 = vrot.lane.b32.xlu0 %v974, 8
    %v1099 = vpop.permute.xlu0 %1098
    %v1100 = vsel %vm513, %v1093, %v1095
    %v1101 = vsel %vm513, %v1097, %v1099
    %v1104 = vmul.f32 %v1084, %v1100
    %v1105 = vmul.f32 %v1085, %v1101
    %v1106 = vmul.f32 %v1086, %v1101
    %v1107 = vmul.f32 %v1087, %v1100
    %1108 = vrot.lane.b32.xlu0 %v863, 68
    %v1109 = vpop.permute.xlu0 %1108
    %1110 = vrot.lane.b32.xlu0 %v866, 68
    %v1111 = vpop.permute.xlu0 %1110
    %v1114 = vsub.f32 %v1074, %v1109
    %v1115 = vsub.f32 %v1075, %v1111
    %v1116 = vsub.f32 %v1074, %v1111
    %v1117 = vsub.f32 %v1075, %v1109
    %1118 = vrot.lane.b32.xlu0 %v970, 96
    %v1119 = vpop.permute.xlu0 %1118
    %1120 = vrot.lane.b32.xlu0 %v974, 96
    %v1121 = vpop.permute.xlu0 %1120
    %v1124 = vmul.f32 %v1114, %v1119
    %v1125 = vmul.f32 %v1115, %v1121
    %v1126 = vmul.f32 %v1116, %v1121
    %v1127 = vmul.f32 %v1117, %v1119
    %v1128 = vmul.f32 %v975, %v975
    %v1129 = vmul.f32 %v976, %v976
    %v1130 = vmul.f32 %v977, %v977
    %v1131 = vmul.f32 %v978, %v978
    %v1132 = vsub.f32 1.0, %v1128
    %v1133 = vsub.f32 1.0, %v1129
    %v1134 = vsub.f32 1.0, %v1130
    %v1135 = vsub.f32 1.0, %v1131
    %v1136 = vrcp.pop %v1132
    %v1137 = vrcp.pop %v1133
    %v1138 = vrcp.pop %v1134
    %v1139 = vrcp.pop %v1135
    %v1140 = vmul.f32 %v1104, %v1104
    %v1141 = vmul.f32 %v1105, %v1105
    %v1142 = vmul.f32 %v1106, %v1106
    %v1143 = vmul.f32 %v1107, %v1107
    %v1144 = vmul.f32 %v1124, %v1124
    %v1145 = vmul.f32 %v1125, %v1125
    %v1146 = vmul.f32 %v1126, %v1126
    %v1147 = vmul.f32 %v1127, %v1127
    %v1148 = vadd.f32 %v1140, %v1144
    %v1149 = vadd.f32 %v1141, %v1145
    %v1150 = vadd.f32 %v1142, %v1146
    %v1151 = vadd.f32 %v1143, %v1147
    %v1152 = vmul.f32 %v975, 2.0
    %v1153 = vmul.f32 %v976, 2.0
    %v1154 = vmul.f32 %v977, 2.0
    %v1155 = vmul.f32 %v978, 2.0
    %1160 = vrot.lane.b32.xlu0 %v1104, 92
    %v1161 = vpop.permute.xlu0 %1160
    %1162 = vrot.lane.b32.xlu0 %v1105, 92
    %v1163 = vpop.permute.xlu0 %1162
    %1164 = vrot.lane.b32.xlu0 %v1106, 92
    %v1165 = vpop.permute.xlu0 %1164
    %1166 = vrot.lane.b32.xlu0 %v1107, 92
    %v1167 = vpop.permute.xlu0 %1166
    %v1172 = vmul.f32 %v1152, %v1161
    %v1173 = vmul.f32 %v1153, %v1161
    %v1174 = vmul.f32 %v1154, %v1163
    %v1175 = vmul.f32 %v1155, %v1163
    %v1176 = vmul.f32 %v1154, %v1165
    %v1177 = vmul.f32 %v1155, %v1165
    %v1178 = vmul.f32 %v1152, %v1167
    %v1179 = vmul.f32 %v1153, %v1167
    %1184 = vrot.lane.b32.xlu0 %v1124, 92
    %v1185 = vpop.permute.xlu0 %1184
    %1186 = vrot.lane.b32.xlu0 %v1125, 92
    %v1187 = vpop.permute.xlu0 %1186
    %1188 = vrot.lane.b32.xlu0 %v1126, 92
    %v1189 = vpop.permute.xlu0 %1188
    %1190 = vrot.lane.b32.xlu0 %v1127, 92
    %v1191 = vpop.permute.xlu0 %1190
    %v1196 = vmul.f32 %v1172, %v1185
    %v1197 = vmul.f32 %v1173, %v1185
    %v1198 = vmul.f32 %v1174, %v1187
    %v1199 = vmul.f32 %v1175, %v1187
    %v1200 = vmul.f32 %v1176, %v1189
    %v1201 = vmul.f32 %v1177, %v1189
    %v1202 = vmul.f32 %v1178, %v1191
    %v1203 = vmul.f32 %v1179, %v1191
    %1212 = vrot.lane.b32.xlu0 %v1196, 36
    %v1213 = vpop.permute.xlu0 %1212
    %1214 = vrot.lane.b32.xlu0 %v1197, 36
    %v1215 = vpop.permute.xlu0 %1214
    %1216 = vrot.lane.b32.xlu0 %v1198, 36
    %v1217 = vpop.permute.xlu0 %1216
    %1218 = vrot.lane.b32.xlu0 %v1199, 36
    %v1219 = vpop.permute.xlu0 %1218
    %1220 = vrot.lane.b32.xlu0 %v1200, 36
    %v1221 = vpop.permute.xlu0 %1220
    %1222 = vrot.lane.b32.xlu0 %v1201, 36
    %v1223 = vpop.permute.xlu0 %1222
    %1224 = vrot.lane.b32.xlu0 %v1202, 36
    %v1225 = vpop.permute.xlu0 %1224
    %1226 = vrot.lane.b32.xlu0 %v1203, 36
    %v1227 = vpop.permute.xlu0 %1226
    %vm1228 = vcmask 293888
    %v1229 = vsel %vm1228, %v1213, %v1215
    %v1230 = vsel %vm1228, %v1217, %v1219
    %v1231 = vsel %vm1228, %v1221, %v1223
    %v1232 = vsel %vm1228, %v1225, %v1227
    %v1237 = vsub.f32 %v1148, %v1229
    %v1238 = vsub.f32 %v1149, %v1230
    %v1239 = vsub.f32 %v1150, %v1231
    %v1240 = vsub.f32 %v1151, %v1232
    %v1241 = vmul.f32 %v1237, -0.5
    %v1242 = vmul.f32 %v1238, -0.5
    %v1243 = vmul.f32 %v1239, -0.5
    %v1244 = vmul.f32 %v1240, -0.5
    %1249 = vrot.lane.b32.xlu0 %v1136, 36
    %v1250 = vpop.permute.xlu0 %1249
    %1251 = vrot.lane.b32.xlu0 %v1137, 36
    %v1252 = vpop.permute.xlu0 %1251
    %1253 = vrot.lane.b32.xlu0 %v1138, 36
    %v1254 = vpop.permute.xlu0 %1253
    %1255 = vrot.lane.b32.xlu0 %v1139, 36
    %v1256 = vpop.permute.xlu0 %1255
    %v1257 = vsel %vm1228, %v1250, %v1252
    %v1258 = vsel %vm1228, %v1254, %v1256
    %v1261 = vmul.f32 %v1241, %v1257
    %v1262 = vmul.f32 %v1242, %v1258
    %v1263 = vmul.f32 %v1243, %v1258
    %v1264 = vmul.f32 %v1244, %v1257
    %v1265 = vmul.f32 %v1261, 1.442695
    %v1266 = vpow.pop %v1265
    %v1267 = vmul.f32 %v1262, 1.442695
    %v1268 = vpow.pop %v1267
    %v1269 = vmul.f32 %v1263, 1.442695
    %v1270 = vpow.pop %v1269
    %v1271 = vmul.f32 %v1264, 1.442695
    %v1272 = vpow.pop %v1271
    %1273 = vrot.lane.b32.xlu0 %v970, 88
    %v1274 = vpop.permute.xlu0 %1273
    %1275 = vrot.lane.b32.xlu0 %v974, 88
    %v1276 = vpop.permute.xlu0 %1275
    %v1279 = vmul.f32 %v968, %v1274
    %v1280 = vmul.f32 %v970, %v1274
    %v1281 = vmul.f32 %v972, %v1276
    %v1282 = vmul.f32 %v974, %v1276
    %v1283 = vrsqrt.pop %v1132
    %v1284 = vmul.f32 %v1283, %v1132
    %v1285 = vmul.f32 %v1284, %v1283
    %v1286 = vmul.f32 0.5, %v1285
    %v1287 = vsub.f32 1.5, %v1286
    %v1288 = vmul.f32 %v1283, %v1287
    %vm1289 = vweird.f32 %v1132
    %vm1290 = vweird.f32 %v1283
    %vm1291 = vmor %vm1289, %vm1290
    %v1292 = vsel %vm1291, %v1283, %v1288
    %v1293 = vrsqrt.pop %v1133
    %v1294 = vmul.f32 %v1293, %v1133
    %v1295 = vmul.f32 %v1294, %v1293
    %v1296 = vmul.f32 0.5, %v1295
    %v1297 = vsub.f32 1.5, %v1296
    %v1298 = vmul.f32 %v1293, %v1297
    %vm1299 = vweird.f32 %v1133
    %vm1300 = vweird.f32 %v1293
    %vm1301 = vmor %vm1299, %vm1300
    %v1302 = vsel %vm1301, %v1293, %v1298
    %v1303 = vrsqrt.pop %v1134
    %v1304 = vmul.f32 %v1303, %v1134
    %v1305 = vmul.f32 %v1304, %v1303
    %v1306 = vmul.f32 0.5, %v1305
    %v1307 = vsub.f32 1.5, %v1306
    %v1308 = vmul.f32 %v1303, %v1307
    %vm1309 = vweird.f32 %v1134
    %vm1310 = vweird.f32 %v1303
    %vm1311 = vmor %vm1309, %vm1310
    %v1312 = vsel %vm1311, %v1303, %v1308
    %v1313 = vrsqrt.pop %v1135
    %v1314 = vmul.f32 %v1313, %v1135
    %v1315 = vmul.f32 %v1314, %v1313
    %v1316 = vmul.f32 0.5, %v1315
    %v1317 = vsub.f32 1.5, %v1316
    %v1318 = vmul.f32 %v1313, %v1317
    %vm1319 = vweird.f32 %v1135
    %vm1320 = vweird.f32 %v1313
    %vm1321 = vmor %vm1319, %vm1320
    %v1322 = vsel %vm1321, %v1313, %v1318
    %1327 = vrot.lane.b32.xlu0 %v1292, 28
    %v1328 = vpop.permute.xlu0 %1327
    %1329 = vrot.lane.b32.xlu0 %v1302, 28
    %v1330 = vpop.permute.xlu0 %1329
    %1331 = vrot.lane.b32.xlu0 %v1312, 28
    %v1332 = vpop.permute.xlu0 %1331
    %1333 = vrot.lane.b32.xlu0 %v1322, 28
    %v1334 = vpop.permute.xlu0 %1333
    %vm1335 = vcmask 228352
    %v1336 = vsel %vm1335, %v1328, %v1330
    %v1337 = vsel %vm1335, %v1332, %v1334
    %v1342 = vmul.f32 %v1279, %v1328
    %v1343 = vmul.f32 %v1280, %v1336
    %v1344 = vmul.f32 %v1281, %v1332
    %v1345 = vmul.f32 %v1282, %v1337
    %v1346 = vmul.f32 %v1342, 0.15915494
    %v1347 = vmul.f32 %v1343, 0.15915494
    %v1348 = vmul.f32 %v1344, 0.15915494
    %v1349 = vmul.f32 %v1345, 0.15915494
    %1354 = vrot.lane.b32.xlu0 %v1346, 8
    %v1355 = vpop.permute.xlu0 %1354
    %1356 = vrot.lane.b32.xlu0 %v1347, 8
    %v1357 = vpop.permute.xlu0 %1356
    %1358 = vrot.lane.b32.xlu0 %v1348, 8
    %v1359 = vpop.permute.xlu0 %1358
    %1360 = vrot.lane.b32.xlu0 %v1349, 8
    %v1361 = vpop.permute.xlu0 %1360
    %v1362 = vsel %vm513, %v1355, %v1357
    %v1363 = vsel %vm513, %v1359, %v1361
    %v1366 = vmul.f32 %v1266, %v1362
    %v1367 = vmul.f32 %v1268, %v1363
    %v1368 = vmul.f32 %v1270, %v1363
    %v1369 = vmul.f32 %v1272, %v1362
    %1370 = vset.pattern.permute.xlu0 4
    %1371 = vperm.xlu0 %1370, %v670
    %v1372 = vpop.permute.xlu0 %1371
    %1374 = vset.pattern.permute.xlu0 4
    %1375 = vperm.xlu0 %1374, %v690
    %v1376 = vpop.permute.xlu0 %1375
    %v1378 = vsub.f32 %v1372, %v863
    %v1379 = vsub.f32 %v1376, %v866
    %v1380 = vsub.f32 %v1372, %v866
    %v1381 = vsub.f32 %v1376, %v863
    %1382 = vrot.lane.b32.xlu0 %v970, 28
    %v1383 = vpop.permute.xlu0 %1382
    %1384 = vrot.lane.b32.xlu0 %v974, 28
    %v1385 = vpop.permute.xlu0 %1384
    %v1388 = vmul.f32 %v1378, %v1383
    %v1389 = vmul.f32 %v1379, %v1385
    %v1390 = vmul.f32 %v1380, %v1385
    %v1391 = vmul.f32 %v1381, %v1383
    %v1392 = vmul.f32 %v1388, -0.5
    %v1393 = vmul.f32 %v1389, -0.5
    %v1394 = vmul.f32 %v1390, -0.5
    %v1395 = vmul.f32 %v1391, -0.5
    %v1396 = vmul.f32 %v1392, %v1388
    %v1397 = vmul.f32 %v1393, %v1389
    %v1398 = vmul.f32 %v1394, %v1390
    %v1399 = vmul.f32 %v1395, %v1391
    %v1400 = vmul.f32 %v1396, 1.442695
    %v1401 = vpow.pop %v1400
    %v1402 = vmul.f32 %v1397, 1.442695
    %v1403 = vpow.pop %v1402
    %v1404 = vmul.f32 %v1398, 1.442695
    %v1405 = vpow.pop %v1404
    %v1406 = vmul.f32 %v1399, 1.442695
    %v1407 = vpow.pop %v1406
    %v1408 = vmul.f32 %v970, 0.3989423
    %v1409 = vmul.f32 %v974, 0.3989423
    %1412 = vrot.lane.b32.xlu0 %v1408, 28
    %v1413 = vpop.permute.xlu0 %1412
    %1414 = vrot.lane.b32.xlu0 %v1409, 28
    %v1415 = vpop.permute.xlu0 %1414
    %v1418 = vmul.f32 %v1401, %v1413
    %v1419 = vmul.f32 %v1403, %v1415
    %v1420 = vmul.f32 %v1405, %v1415
    %v1421 = vmul.f32 %v1407, %v1413
    %v1422 = vmul.f32 %v947, %v1366
    %v1423 = vmul.f32 %v962, %v1367
    %v1424 = vmul.f32 %v962, %v1368
    %v1425 = vmul.f32 %v947, %v1369
    %v1426 = vsel %vm914, %v1422, 0.0
    %1427 = vadd.xlane.f32.xlu0 %v1426
    %v1428 = vpop.xlane.xlu0 %1427
    %v1429 = vsel %vm914, %v1423, 0.0
    %1430 = vadd.xlane.f32.xlu0 %v1429
    %v1431 = vpop.xlane.xlu0 %1430
    %v1432 = vsel %vm914, %v1424, 0.0
    %1433 = vadd.xlane.f32.xlu0 %v1432
    %v1434 = vpop.xlane.xlu0 %1433
    %v1435 = vsel %vm914, %v1425, 0.0
    %1436 = vadd.xlane.f32.xlu0 %v1435
    %v1437 = vpop.xlane.xlu0 %1436
    %1442 = vrot.lane.b32.xlu0 %v1366, 108
    %v1443 = vpop.permute.xlu0 %1442
    %1444 = vrot.lane.b32.xlu0 %v1367, 108
    %v1445 = vpop.permute.xlu0 %1444
    %1446 = vrot.lane.b32.xlu0 %v1368, 108
    %v1447 = vpop.permute.xlu0 %1446
    %1448 = vrot.lane.b32.xlu0 %v1369, 108
    %v1449 = vpop.permute.xlu0 %1448
    %v1454 = vmul.f32 %v947, %v1443
    %v1455 = vmul.f32 %v962, %v1445
    %v1456 = vmul.f32 %v962, %v1447
    %v1457 = vmul.f32 %v947, %v1449
    %v1458 = vsel %vm914, %v1454, 0.0
    %1459 = vadd.xlane.f32.xlu0 %v1458
    %v1460 = vpop.xlane.xlu0 %1459
    %v1461 = vsel %vm914, %v1455, 0.0
    %1462 = vadd.xlane.f32.xlu0 %v1461
    %v1463 = vpop.xlane.xlu0 %1462
    %v1464 = vsel %vm914, %v1456, 0.0
    %1465 = vadd.xlane.f32.xlu0 %v1464
    %v1466 = vpop.xlane.xlu0 %1465
    %v1467 = vsel %vm914, %v1457, 0.0
    %1468 = vadd.xlane.f32.xlu0 %v1467
    %v1469 = vpop.xlane.xlu0 %1468
    %1474 = vrot.lane.b32.xlu0 %v1418, 28
    %v1475 = vpop.permute.xlu0 %1474
    %1476 = vrot.lane.b32.xlu0 %v1419, 28
    %v1477 = vpop.permute.xlu0 %1476
    %1478 = vrot.lane.b32.xlu0 %v1420, 28
    %v1479 = vpop.permute.xlu0 %1478
    %1480 = vrot.lane.b32.xlu0 %v1421, 28
    %v1481 = vpop.permute.xlu0 %1480
    %v1486 = vmul.f32 %v947, %v1475
    %v1487 = vmul.f32 %v962, %v1477
    %v1488 = vmul.f32 %v962, %v1479
    %v1489 = vmul.f32 %v947, %v1481
    %v1490 = vsel %vm914, %v1486, 0.0
    %1491 = vadd.xlane.f32.xlu0 %v1490
    %v1492 = vpop.xlane.xlu0 %1491
    %v1493 = vsel %vm914, %v1487, 0.0
    %1494 = vadd.xlane.f32.xlu0 %v1493
    %v1495 = vpop.xlane.xlu0 %1494
    %v1496 = vsel %vm914, %v1488, 0.0
    %1497 = vadd.xlane.f32.xlu0 %v1496
    %v1498 = vpop.xlane.xlu0 %1497
    %v1499 = vsel %vm914, %v1489, 0.0
    %1500 = vadd.xlane.f32.xlu0 %v1499
    %v1501 = vpop.xlane.xlu0 %1500
    %v1502 = vadd.f32 %v1428, 1e-05
    %v1503 = vadd.f32 %v1431, 1e-05
    %v1504 = vadd.f32 %v1434, 1e-05
    %v1505 = vadd.f32 %v1437, 1e-05
    %v1506 = vlog2.pop %v1502
    %v1507 = vmul.f32 %v1506, 0.6931472
    %v1508 = vlog2.pop %v1503
    %v1509 = vmul.f32 %v1508, 0.6931472
    %v1510 = vlog2.pop %v1504
    %v1511 = vmul.f32 %v1510, 0.6931472
    %v1512 = vlog2.pop %v1505
    %v1513 = vmul.f32 %v1512, 0.6931472
    %v1514 = vsub.f32 0.0, %v1507
    %v1515 = vsub.f32 0.0, %v1509
    %v1516 = vsub.f32 0.0, %v1511
    %v1517 = vsub.f32 0.0, %v1513
    %v1518 = vadd.f32 %v1460, 1e-05
    %v1519 = vadd.f32 %v1463, 1e-05
    %v1520 = vadd.f32 %v1466, 1e-05
    %v1521 = vadd.f32 %v1469, 1e-05
    %v1522 = vlog2.pop %v1518
    %v1523 = vmul.f32 %v1522, 0.6931472
    %v1524 = vlog2.pop %v1519
    %v1525 = vmul.f32 %v1524, 0.6931472
    %v1526 = vlog2.pop %v1520
    %v1527 = vmul.f32 %v1526, 0.6931472
    %v1528 = vlog2.pop %v1521
    %v1529 = vmul.f32 %v1528, 0.6931472
    %v1530 = vsub.f32 %v1514, %v1523
    %v1531 = vsub.f32 %v1515, %v1525
    %v1532 = vsub.f32 %v1516, %v1527
    %v1533 = vsub.f32 %v1517, %v1529
    %v1534 = vadd.f32 %v1492, 1e-05
    %v1535 = vadd.f32 %v1495, 1e-05
    %v1536 = vadd.f32 %v1498, 1e-05
    %v1537 = vadd.f32 %v1501, 1e-05
    %v1538 = vlog2.pop %v1534
    %v1539 = vmul.f32 %v1538, 0.6931472
    %v1540 = vlog2.pop %v1535
    %v1541 = vmul.f32 %v1540, 0.6931472
    %v1542 = vlog2.pop %v1536
    %v1543 = vmul.f32 %v1542, 0.6931472
    %v1544 = vlog2.pop %v1537
    %v1545 = vmul.f32 %v1544, 0.6931472
    %v1546 = vsub.f32 %v1530, %v1539
    %v1547 = vsub.f32 %v1531, %v1541
    %v1548 = vsub.f32 %v1532, %v1543
    %v1549 = vsub.f32 %v1533, %v1545
    %v1550 = vlog2.pop %v1021
    %v1551 = vmul.f32 %v1550, 0.6931472
    %v1552 = vlog2.pop %v1036
    %v1553 = vmul.f32 %v1552, 0.6931472
    %1556 = vrot.lane.b32.xlu0 %v1551, 1
    %v1557 = vpop.permute.xlu0 %1556
    %1558 = vrot.lane.b32.xlu0 %v1553, 1
    %v1559 = vpop.permute.xlu0 %1558
    %v1562 = vmul.f32 %v670, %v1557
    %v1563 = vmul.f32 %v690, %v1559
    %v1564 = vmul.f32 %v670, %v1559
    %v1565 = vmul.f32 %v690, %v1557
    %1570 = vrot.lane.b32.xlu0 %v1562, 123
    %v1571 = vpop.permute.xlu0 %1570
    %1572 = vrot.lane.b32.xlu0 %v1563, 123
    %v1573 = vpop.permute.xlu0 %1572
    %1574 = vrot.lane.b32.xlu0 %v1564, 123
    %v1575 = vpop.permute.xlu0 %1574
    %1576 = vrot.lane.b32.xlu0 %v1565, 123
    %v1577 = vpop.permute.xlu0 %1576
    %v1582 = vsel %vm1000, %v1571, 0.0
    %1583 = vadd.xlane.f32.xlu0 %v1582
    %v1584 = vpop.xlane.xlu0 %1583
    %v1585 = vsel %vm1000, %v1573, 0.0
    %1586 = vadd.xlane.f32.xlu0 %v1585
    %v1587 = vpop.xlane.xlu0 %1586
    %v1588 = vsel %vm1000, %v1575, 0.0
    %1589 = vadd.xlane.f32.xlu0 %v1588
    %v1590 = vpop.xlane.xlu0 %1589
    %v1591 = vsel %vm1000, %v1577, 0.0
    %1592 = vadd.xlane.f32.xlu0 %v1591
    %v1593 = vpop.xlane.xlu0 %1592
    %v1594 = vsub.f32 %v1546, %v1584
    %v1595 = vsub.f32 %v1547, %v1587
    %v1596 = vsub.f32 %v1548, %v1590
    %v1597 = vsub.f32 %v1549, %v1593
    %v1598 = vadd.f32 %v1594, %v1595
    %v1599 = vadd.f32 %v1596, %v1597
    %v1600 = vmin.f32 %v1598, %v1599
    %v1601 = vmul.f32 %v1600, %v602
    %vm1602 = vcmask 7168
    %v1603 = vsel %vm1602, %v1601, 0.0
    %v1604 = vrot.slane %v1603, 4
    %v1605 = vadd.f32 %v1603, %v1604
    %v1606 = vrot.slane %v1605, 2
    %v1607 = vadd.f32 %v1605, %v1606
    %v1608 = vrot.slane %v1607, 1
    %v1609 = vadd.f32 %v1607, %v1608
    %v1610 = vadd.f32 %v1609, 0.0
    %vm1611 = vcmp.lt.f32.partialorder %v1599, %v1598
    %1614 = vrot.lane.b32.xlu0 %v820, 120
    %v1615 = vpop.permute.xlu0 %1614
    %v1617 = vsel %vm513, %v838, %v1615
    %1618 = vrot.lane.b32.xlu0 %v826, 72
    %v1619 = vpop.permute.xlu0 %1618
    %1621 = vrot.lane.b32.xlu0 %v820, 112
    %v1622 = vpop.permute.xlu0 %1621
    %v1624 = vsel %vm513, %v1619, %v1622
    %v1625 = vsel %vm1611, 1, 0
    %vm1626 = vcmp.eq.s32.totalorder %v1625, 1
    %v1627 = vsel %vm1626, %v1624, %v1617
    %v1628 = vsel %vm1626, %v1617, %v1624
    %1629 = vxpose.xlu0.b32.start [1/16] %v208, 128
    %1630 = vxpose.xlu0.b32.cont [2/16] %v220, 128
    %1631 = vxpose.xlu0.b32.cont [3/16] 0.0, 128
    %1632 = vxpose.xlu0.b32.cont [4/16] 0.0, 128
    %1633 = vxpose.xlu0.b32.cont [5/16] 0.0, 128
    %1634 = vxpose.xlu0.b32.cont [6/16] 0.0, 128
    %1635 = vxpose.xlu0.b32.cont [7/16] 0.0, 128
    %1636 = vxpose.xlu0.b32.cont [8/16] 0.0, 128
    %1637 = vxpose.xlu0.b32.cont [9/16] 0.0, 128
    %1638 = vxpose.xlu0.b32.cont [10/16] 0.0, 128
    %1639 = vxpose.xlu0.b32.cont [11/16] 0.0, 128
    %1640 = vxpose.xlu0.b32.cont [12/16] 0.0, 128
    %1641 = vxpose.xlu0.b32.cont [13/16] 0.0, 128
    %1642 = vxpose.xlu0.b32.cont [14/16] 0.0, 128
    %1643 = vxpose.xlu0.b32.cont [15/16] 0.0, 128
    %1644 = vxpose.xlu0.b32.end [16/16] 0.0, 128
    %v1645 = vpop.trf.xlu0
    %v1646 = vpop.trf.xlu0
    %v1647 = vpop.trf.xlu0
    %v1648 = vpop.trf.xlu0
    %v1649 = vpop.trf.xlu0
    %v1650 = vpop.trf.xlu0
    %v1651 = vpop.trf.xlu0
    %v1652 = vpop.trf.xlu0
    %v1653 = vpop.trf.xlu0
    %v1654 = vpop.trf.xlu0
    %v1655 = vpop.trf.xlu0
    %v1656 = vpop.trf.xlu0
    %v1657 = vpop.trf.xlu0
    %v1658 = vpop.trf.xlu0
    %v1659 = vpop.trf.xlu0
    %v1660 = vpop.trf.xlu0
    %v1662 = vsel %vm548, %v1645, 0
    %1664 = vmatpush.msra.mxu0 0.0
    %1665 = vmatpush.msra.mxu0 0.0
    %1666 = vmatpush.msra.mxu0 0.0
    %1667 = vmatpush.msra.mxu0 0.0
    %1668 = vmatpush.msra.mxu0 0.0
    %1669 = vmatpush.msra.mxu0 0.0
    %1670 = vmatpush.msra.mxu0 0.0
    %1671 = vmatpush.msra.mxu0 0.0
    %1672 = vmatpush.msra.mxu0 0.0
    %1673 = vmatpush.msra.mxu0 0.0
    %1674 = vmatpush.msra.mxu0 0.0
    %1675 = vmatpush.msra.mxu0 0.0
    %1676 = vmatpush.msra.mxu0 0.0
    %1677 = vmatpush.msra.mxu0 0.0
    %1678 = vmatpush.msra.mxu0 1.0
    %1679 = vmatpush.msra.mxu0 1.0
    %1680 = vmatmul.f32.gmra.mxu0 %v1662
    %v1681 = vpop.f32.mrf.mxu0
    %v1682 = vadd.f32 0.0, %v1681
    %1683 = vdwg.mxu0
    %v1684 = vsub.f32 1.0, %v1682
    %1686 = vset.pattern.permute.xlu0 0
    %1687 = vperm.xlu0 %1686, %v1684
    %v1688 = vpop.permute.xlu0 %1687
    %v1690 = vmul.f32 %v599, %v1688
    %1691 = vmatpush.msra.mxu0 0.0
    %1692 = vmatpush.msra.mxu0 0.0
    %1693 = vmatpush.msra.mxu0 0.0
    %1694 = vmatpush.msra.mxu0 0.0
    %1695 = vmatpush.msra.mxu0 0.0
    %1696 = vmatpush.msra.mxu0 0.0
    %1697 = vmatpush.msra.mxu0 0.0
    %1698 = vmatpush.msra.mxu0 0.0
    %1699 = vmatpush.msra.mxu0 0.0
    %1700 = vmatpush.msra.mxu0 0.0
    %1701 = vmatpush.msra.mxu0 0.0
    %1702 = vmatpush.msra.mxu0 0.0
    %1703 = vmatpush.msra.mxu0 0.0
    %1704 = vmatpush.msra.mxu0 0.0
    %1705 = vmatpush.msra.mxu0 %v1628
    %1706 = vmatpush.msra.mxu0 %v1627
    %1707 = vmatmul.f32.gmra.mxu0 %v1662
    %v1708 = vpop.f32.mrf.mxu0
    %v1709 = vadd.f32 0.0, %v1708
    %1710 = vdwg.mxu0
    %v1711 = vadd.f32 %v1690, %v1709
    %vm1712 = vcmp.ge.s32.totalorder %v176, 0
    %v1713 = vsel %vm1712, 1, 0
    %v1714 = vcvt.s32.f32 %v1713
    %v1716 = vsel %vm233, %v231, 0
    %v1719 = vsel %vm240, %v1711, 0
    %1721 = vmatpush.msra.mxu0 0.0
    %1722 = vmatpush.msra.mxu0 0.0
    %1723 = vmatpush.msra.mxu0 0.0
    %1724 = vmatpush.msra.mxu0 0.0
    %1725 = vmatpush.msra.mxu0 0.0
    %1726 = vmatpush.msra.mxu0 0.0
    %1727 = vmatpush.msra.mxu0 0.0
    %1728 = vmatpush.msra.mxu0 0.0
    %1729 = vmatpush.msra.mxu0 0.0
    %1730 = vmatpush.msra.mxu0 0.0
    %1731 = vmatpush.msra.mxu0 0.0
    %1732 = vmatpush.msra.mxu0 0.0
    %1733 = vmatpush.msra.mxu0 0.0
    %1734 = vmatpush.msra.mxu0 0.0
    %1735 = vmatpush.msra.mxu0 0.0
    %1736 = vmatpush.msra.mxu0 %v1719
    %1737 = vmatmul.f32.gmra.mxu0 %v1716
    %v1738 = vpop.f32.mrf.mxu0
    %v1739 = vadd.f32 0.0, %v1738
    %1740 = vdwg.mxu0
    %1741 = vmatpush.msra.mxu0 0.0
    %1742 = vmatpush.msra.mxu0 0.0
    %1743 = vmatpush.msra.mxu0 0.0
    %1744 = vmatpush.msra.mxu0 0.0
    %1745 = vmatpush.msra.mxu0 0.0
    %1746 = vmatpush.msra.mxu0 0.0
    %1747 = vmatpush.msra.mxu0 0.0
    %1748 = vmatpush.msra.mxu0 0.0
    %1749 = vmatpush.msra.mxu0 0.0
    %1750 = vmatpush.msra.mxu0 0.0
    %1751 = vmatpush.msra.mxu0 0.0
    %1752 = vmatpush.msra.mxu0 0.0
    %1753 = vmatpush.msra.mxu0 0.0
    %1754 = vmatpush.msra.mxu0 0.0
    %1755 = vmatpush.msra.mxu0 0.0
    %1756 = vmatpush.msra.mxu0 %v630
    %1757 = vmatmul.f32.gmra.mxu0 %v1716
    %v1758 = vpop.f32.mrf.mxu0
    %v1759 = vadd.f32 0.0, %v1758
    %1760 = vdwg.mxu0
    %1761 = vmatpush.msra.mxu0 0.0
    %1762 = vmatpush.msra.mxu0 0.0
    %1763 = vmatpush.msra.mxu0 0.0
    %1764 = vmatpush.msra.mxu0 0.0
    %1765 = vmatpush.msra.mxu0 0.0
    %1766 = vmatpush.msra.mxu0 0.0
    %1767 = vmatpush.msra.mxu0 0.0
    %1768 = vmatpush.msra.mxu0 0.0
    %1769 = vmatpush.msra.mxu0 0.0
    %1770 = vmatpush.msra.mxu0 0.0
    %1771 = vmatpush.msra.mxu0 0.0
    %1772 = vmatpush.msra.mxu0 0.0
    %1773 = vmatpush.msra.mxu0 0.0
    %1774 = vmatpush.msra.mxu0 0.0
    %1775 = vmatpush.msra.mxu0 0.0
    %1776 = vmatpush.msra.mxu0 %v630
    %1777 = vmatmul.f32.gmra.mxu0 %v235
    %v1778 = vpop.f32.mrf.mxu0
    %v1779 = vadd.f32 0.0, %v1778
    %1780 = vdwg.mxu0
    %1781 = vmatpush.msra.mxu0 0.0
    %1782 = vmatpush.msra.mxu0 0.0
    %1783 = vmatpush.msra.mxu0 0.0
    %1784 = vmatpush.msra.mxu0 0.0
    %1785 = vmatpush.msra.mxu0 0.0
    %1786 = vmatpush.msra.mxu0 0.0
    %1787 = vmatpush.msra.mxu0 0.0
    %1788 = vmatpush.msra.mxu0 0.0
    %1789 = vmatpush.msra.mxu0 0.0
    %1790 = vmatpush.msra.mxu0 0.0
    %1791 = vmatpush.msra.mxu0 0.0
    %1792 = vmatpush.msra.mxu0 0.0
    %1793 = vmatpush.msra.mxu0 0.0
    %1794 = vmatpush.msra.mxu0 0.0
    %1795 = vmatpush.msra.mxu0 0.0
    %1796 = vmatpush.msra.mxu0 %v630
    %1797 = vmatmul.f32.gmra.mxu0 %v268
    %v1798 = vpop.f32.mrf.mxu0
    %v1799 = vadd.f32 0.0, %v1798
    %1800 = vdwg.mxu0
    %v1802 = vsel %vm548, %v1739, 0
    %1804 = vmatpush.msra.mxu0 0.0
    %1805 = vmatpush.msra.mxu0 0.0
    %1806 = vmatpush.msra.mxu0 0.0
    %1807 = vmatpush.msra.mxu0 0.0
    %1808 = vmatpush.msra.mxu0 0.0
    %1809 = vmatpush.msra.mxu0 0.0
    %1810 = vmatpush.msra.mxu0 0.0
    %1811 = vmatpush.msra.mxu0 0.0
    %1812 = vmatpush.msra.mxu0 0.0
    %1813 = vmatpush.msra.mxu0 0.0
    %1814 = vmatpush.msra.mxu0 0.0
    %1815 = vmatpush.msra.mxu0 0.0
    %1816 = vmatpush.msra.mxu0 0.0
    %1817 = vmatpush.msra.mxu0 0.0
    %1818 = vmatpush.msra.mxu0 %v183
    %1819 = vmatpush.msra.mxu0 %v182
    %1820 = vmatmul.f32.gmra.mxu0 %v1802
    %v1821 = vpop.f32.mrf.mxu0
    %v1822 = vadd.f32 %v693, %v1821
    %1823 = vdwg.mxu0
    %v1824 = vtanh.pop %v1822
    %1825 = vmatpush.msra.mxu0 0.0
    %1826 = vmatpush.msra.mxu0 0.0
    %1827 = vmatpush.msra.mxu0 0.0
    %1828 = vmatpush.msra.mxu0 0.0
    %1829 = vmatpush.msra.mxu0 0.0
    %1830 = vmatpush.msra.mxu0 0.0
    %1831 = vmatpush.msra.mxu0 0.0
    %1832 = vmatpush.msra.mxu0 0.0
    %1833 = vmatpush.msra.mxu0 0.0
    %1834 = vmatpush.msra.mxu0 0.0
    %1835 = vmatpush.msra.mxu0 0.0
    %1836 = vmatpush.msra.mxu0 0.0
    %1837 = vmatpush.msra.mxu0 0.0
    %1838 = vmatpush.msra.mxu0 0.0
    %1839 = vmatpush.msra.mxu0 %v187
    %1840 = vmatpush.msra.mxu0 %v186
    %1841 = vmatmul.f32.gmra.mxu0 %v1802
    %v1842 = vpop.f32.mrf.mxu0
    %v1843 = vadd.f32 0.0, %v1842
    %1844 = vdwg.mxu0
    %v1846 = vsel %vm513, %v1759, 0
    %1848 = vmatpush.msra.mxu0 0.0
    %1849 = vmatpush.msra.mxu0 0.0
    %1850 = vmatpush.msra.mxu0 0.0
    %1851 = vmatpush.msra.mxu0 0.0
    %1852 = vmatpush.msra.mxu0 0.0
    %1853 = vmatpush.msra.mxu0 0.0
    %1854 = vmatpush.msra.mxu0 0.0
    %1855 = vmatpush.msra.mxu0 0.0
    %1856 = vmatpush.msra.mxu0 0.0
    %1857 = vmatpush.msra.mxu0 0.0
    %1858 = vmatpush.msra.mxu0 0.0
    %1859 = vmatpush.msra.mxu0 0.0
    %1860 = vmatpush.msra.mxu0 0.0
    %1861 = vmatpush.msra.mxu0 0.0
    %1862 = vmatpush.msra.mxu0 0.0
    %1863 = vmatpush.msra.mxu0 %v185
    %1864 = vmatmul.f32.gmra.mxu0 %v1846
    %v1865 = vpop.f32.mrf.mxu0
    %v1866 = vadd.f32 %v1843, %v1865
    %1867 = vdwg.mxu0
    %v1869 = vsel %vm548, %v1824, 0
    %1871 = vmatpush.msra.mxu0 0.0
    %1872 = vmatpush.msra.mxu0 0.0
    %1873 = vmatpush.msra.mxu0 0.0
    %1874 = vmatpush.msra.mxu0 0.0
    %1875 = vmatpush.msra.mxu0 0.0
    %1876 = vmatpush.msra.mxu0 0.0
    %1877 = vmatpush.msra.mxu0 0.0
    %1878 = vmatpush.msra.mxu0 0.0
    %1879 = vmatpush.msra.mxu0 0.0
    %1880 = vmatpush.msra.mxu0 0.0
    %1881 = vmatpush.msra.mxu0 0.0
    %1882 = vmatpush.msra.mxu0 0.0
    %1883 = vmatpush.msra.mxu0 0.0
    %1884 = vmatpush.msra.mxu0 0.0
    %1885 = vmatpush.msra.mxu0 %v189
    %1886 = vmatpush.msra.mxu0 %v188
    %1887 = vmatmul.f32.gmra.mxu0 %v1869
    %v1888 = vpop.f32.mrf.mxu0
    %v1889 = vadd.f32 0.0, %v1888
    %1890 = vdwg.mxu0
    %v1891 = vadd.f32 %v1866, %v1889
    %v1892 = vadd.f32 %v1891, %v787
    %v1893 = vxor.u32 %v1892, 2147483648
    %v1894 = vmul.f32 %v1893, 1.442695
    %v1895 = vpow.pop %v1894
    %v1896 = vadd.f32 %v1895, 1.0
    %v1897 = vrcp.pop %v1896
    %v1898 = vmul.f32 %v1896, %v1897
    %v1899 = vsub.f32 1.0, %v1898
    %v1900 = vmul.f32 %v1897, %v1899
    %v1901 = vadd.f32 %v1897, %v1900
    %vm1902 = vweird.f32 %v1896
    %vm1903 = vweird.f32 %v1897
    %vm1904 = vmor %vm1902, %vm1903
    %v1905 = vsel %vm1904, %v1897, %v1901
    %v1906 = vand.u32 2147483647, %v1896
    %vm1907 = vcmp.eq.f32.partialorder %v1906, 8.507059e+37
    %v1908 = vand.u32 %v1896, 2147483648
    %v1909 = vor.u32 1.1754944e-38, %v1908
    %v1910 = vsel %vm1907, %v1909, %v1905
    %v1911 = vmul.f32 1.0, %v1910
    %v1912 = vtanh.pop %v1892
    %v1913 = vmul.f32 %v1911, %v1824
    %1915 = vrot.lane.b32.xlu0 %v1912, 96
    %v1916 = vpop.permute.xlu0 %1915
    %v1918 = vmul.f32 %v1911, %v1916
    %1920 = vrot.lane.b32.xlu0 %v1918, 16
    %v1921 = vpop.permute.xlu0 %1920
    %v1923 = vadd.f32 %v1913, %v1921
    %v1924 = vtanh.pop %v1923
    %1926 = vrot.lane.b32.xlu0 %v1924, 32
    %v1927 = vpop.permute.xlu0 %1926
    %v1929 = vmul.f32 %v1911, %v1927
    %1931 = vrot.lane.b32.xlu0 %v1929, 120
    %v1932 = vpop.permute.xlu0 %1931
    %1933 = vrot.lane.b32.xlu0 %v1929, 80
    %v1934 = vpop.permute.xlu0 %1933
    %1935 = vrot.lane.b32.xlu0 %v1932, 80
    %v1936 = vpop.permute.xlu0 %1935
    %v1937 = vsel %vm513, %v1934, 0
    %v1939 = vsel %vm513, %v1936, 0
    %1941 = vmatpush.msra.mxu0 0.0
    %1942 = vmatpush.msra.mxu0 0.0
    %1943 = vmatpush.msra.mxu0 0.0
    %1944 = vmatpush.msra.mxu0 0.0
    %1945 = vmatpush.msra.mxu0 0.0
    %1946 = vmatpush.msra.mxu0 0.0
    %1947 = vmatpush.msra.mxu0 0.0
    %1948 = vmatpush.msra.mxu0 0.0
    %1949 = vmatpush.msra.mxu0 0.0
    %1950 = vmatpush.msra.mxu0 0.0
    %1951 = vmatpush.msra.mxu0 0.0
    %1952 = vmatpush.msra.mxu0 0.0
    %1953 = vmatpush.msra.mxu0 0.0
    %1954 = vmatpush.msra.mxu0 0.0
    %1955 = vmatpush.msra.mxu0 0.0
    %1956 = vmatpush.msra.mxu0 %v191
    %1957 = vmatmul.f32.gmra.mxu0 %v1937
    %v1958 = vpop.f32.mrf.mxu0
    %v1959 = vadd.f32 %v831, %v1958
    %1960 = vmatmul.f32.gmra.mxu0 %v1939
    %v1961 = vpop.f32.mrf.mxu0
    %v1962 = vadd.f32 %v831, %v1961
    %1963 = vdwg.mxu0
    %1964 = vmatpush.msra.mxu0 0.0
    %1965 = vmatpush.msra.mxu0 0.0
    %1966 = vmatpush.msra.mxu0 0.0
    %1967 = vmatpush.msra.mxu0 0.0
    %1968 = vmatpush.msra.mxu0 0.0
    %1969 = vmatpush.msra.mxu0 0.0
    %1970 = vmatpush.msra.mxu0 0.0
    %1971 = vmatpush.msra.mxu0 0.0
    %1972 = vmatpush.msra.mxu0 0.0
    %1973 = vmatpush.msra.mxu0 0.0
    %1974 = vmatpush.msra.mxu0 0.0
    %1975 = vmatpush.msra.mxu0 0.0
    %1976 = vmatpush.msra.mxu0 0.0
    %1977 = vmatpush.msra.mxu0 0.0
    %1978 = vmatpush.msra.mxu0 0.0
    %1979 = vmatpush.msra.mxu0 %v192
    %1980 = vmatmul.f32.gmra.mxu0 %v1937
    %v1981 = vpop.f32.mrf.mxu0
    %v1982 = vadd.f32 %v832, %v1981
    %1983 = vmatmul.f32.gmra.mxu0 %v1939
    %v1984 = vpop.f32.mrf.mxu0
    %v1985 = vadd.f32 %v832, %v1984
    %1986 = vdwg.mxu0
    %1987 = vmatpush.msra.mxu0 0.0
    %1988 = vmatpush.msra.mxu0 0.0
    %1989 = vmatpush.msra.mxu0 0.0
    %1990 = vmatpush.msra.mxu0 0.0
    %1991 = vmatpush.msra.mxu0 0.0
    %1992 = vmatpush.msra.mxu0 0.0
    %1993 = vmatpush.msra.mxu0 0.0
    %1994 = vmatpush.msra.mxu0 0.0
    %1995 = vmatpush.msra.mxu0 0.0
    %1996 = vmatpush.msra.mxu0 0.0
    %1997 = vmatpush.msra.mxu0 0.0
    %1998 = vmatpush.msra.mxu0 0.0
    %1999 = vmatpush.msra.mxu0 0.0
    %2000 = vmatpush.msra.mxu0 0.0
    %2001 = vmatpush.msra.mxu0 0.0
    %2002 = vmatpush.msra.mxu0 %v193
    %2003 = vmatmul.f32.gmra.mxu0 %v1937
    %v2004 = vpop.f32.mrf.mxu0
    %v2005 = vadd.f32 %v833, %v2004
    %2006 = vmatmul.f32.gmra.mxu0 %v1939
    %v2007 = vpop.f32.mrf.mxu0
    %v2008 = vadd.f32 %v833, %v2007
    %2009 = vdwg.mxu0
    %v2010 = vsel %vm914, %v1959, -inf
    %2011 = vmax.xlane.f32.xlu0 %v2010
    %v2012 = vpop.xlane.xlu0 %2011
    %v2013 = vsel %vm914, %v1962, -inf
    %2014 = vmax.xlane.f32.xlu0 %v2013
    %v2015 = vpop.xlane.xlu0 %2014
    %v2016 = vsub.f32 %v1959, %v2012
    %v2017 = vsub.f32 %v1962, %v2015
    %v2018 = vmul.f32 %v2016, 1.442695
    %v2019 = vpow.pop %v2018
    %v2020 = vmul.f32 %v2017, 1.442695
    %v2021 = vpow.pop %v2020
    %v2022 = vsel %vm914, %v2019, 0.0
    %2023 = vadd.xlane.f32.xlu0 %v2022
    %v2024 = vpop.xlane.xlu0 %2023
    %v2025 = vsel %vm914, %v2021, 0.0
    %2026 = vadd.xlane.f32.xlu0 %v2025
    %v2027 = vpop.xlane.xlu0 %2026
    %v2028 = vrcp.pop %v2024
    %v2029 = vmul.f32 %v2024, %v2028
    %v2030 = vsub.f32 1.0, %v2029
    %v2031 = vmul.f32 %v2028, %v2030
    %v2032 = vadd.f32 %v2028, %v2031
    %vm2033 = vweird.f32 %v2024
    %vm2034 = vweird.f32 %v2028
    %vm2035 = vmor %vm2033, %vm2034
    %v2036 = vsel %vm2035, %v2028, %v2032
    %v2037 = vand.u32 2147483647, %v2024
    %vm2038 = vcmp.eq.f32.partialorder %v2037, 8.507059e+37
    %v2039 = vand.u32 %v2024, 2147483648
    %v2040 = vor.u32 1.1754944e-38, %v2039
    %v2041 = vsel %vm2038, %v2040, %v2036
    %v2042 = vmul.f32 %v2019, %v2041
    %v2043 = vrcp.pop %v2027
    %v2044 = vmul.f32 %v2027, %v2043
    %v2045 = vsub.f32 1.0, %v2044
    %v2046 = vmul.f32 %v2043, %v2045
    %v2047 = vadd.f32 %v2043, %v2046
    %vm2048 = vweird.f32 %v2027
    %vm2049 = vweird.f32 %v2043
    %vm2050 = vmor %vm2048, %vm2049
    %v2051 = vsel %vm2050, %v2043, %v2047
    %v2052 = vand.u32 2147483647, %v2027
    %vm2053 = vcmp.eq.f32.partialorder %v2052, 8.507059e+37
    %v2054 = vand.u32 %v2027, 2147483648
    %v2055 = vor.u32 1.1754944e-38, %v2054
    %v2056 = vsel %vm2053, %v2055, %v2051
    %v2057 = vmul.f32 %v2021, %v2056
    %v2058 = vsub.f32 0.0, %v1959
    %v2059 = vsub.f32 0.0, %v1982
    %v2060 = vsub.f32 0.0, %v1962
    %v2061 = vsub.f32 0.0, %v1985
    %v2062 = vmul.f32 %v2058, 1.442695
    %v2063 = vpow.pop %v2062
    %v2064 = vmul.f32 %v2059, 1.442695
    %v2065 = vpow.pop %v2064
    %v2066 = vmul.f32 %v2060, 1.442695
    %v2067 = vpow.pop %v2066
    %v2068 = vmul.f32 %v2061, 1.442695
    %v2069 = vpow.pop %v2068
    %v2070 = vtanh.pop %v1982
    %v2071 = vtanh.pop %v2005
    %v2072 = vtanh.pop %v1985
    %v2073 = vtanh.pop %v2008
    %v2074 = vsel %vm979, %v2005, -inf
    %2075 = vmax.xlane.f32.xlu0 %v2074
    %v2076 = vpop.xlane.xlu0 %2075
    %v2077 = vsel %vm979, %v2008, -inf
    %2078 = vmax.xlane.f32.xlu0 %v2077
    %v2079 = vpop.xlane.xlu0 %2078
    %v2080 = vsub.f32 %v2005, %v2076
    %v2081 = vsub.f32 %v2008, %v2079
    %v2082 = vmul.f32 %v2080, 1.442695
    %v2083 = vpow.pop %v2082
    %v2084 = vmul.f32 %v2081, 1.442695
    %v2085 = vpow.pop %v2084
    %2088 = vrot.lane.b32.xlu0 %v2083, 124
    %v2089 = vpop.permute.xlu0 %2088
    %2090 = vrot.lane.b32.xlu0 %v2085, 124
    %v2091 = vpop.permute.xlu0 %2090
    %v2094 = vsel %vm1000, %v2089, 0.0
    %2095 = vadd.xlane.f32.xlu0 %v2094
    %v2096 = vpop.xlane.xlu0 %2095
    %v2097 = vsel %vm1000, %v2091, 0.0
    %2098 = vadd.xlane.f32.xlu0 %v2097
    %v2099 = vpop.xlane.xlu0 %2098
    %v2100 = vrcp.pop %v2096
    %v2101 = vmul.f32 %v2096, %v2100
    %v2102 = vsub.f32 1.0, %v2101
    %v2103 = vmul.f32 %v2100, %v2102
    %v2104 = vadd.f32 %v2100, %v2103
    %vm2105 = vweird.f32 %v2096
    %vm2106 = vweird.f32 %v2100
    %vm2107 = vmor %vm2105, %vm2106
    %v2108 = vsel %vm2107, %v2100, %v2104
    %v2109 = vand.u32 2147483647, %v2096
    %vm2110 = vcmp.eq.f32.partialorder %v2109, 8.507059e+37
    %v2111 = vand.u32 %v2096, 2147483648
    %v2112 = vor.u32 1.1754944e-38, %v2111
    %v2113 = vsel %vm2110, %v2112, %v2108
    %v2114 = vmul.f32 %v2083, %v2113
    %v2115 = vrcp.pop %v2099
    %v2116 = vmul.f32 %v2099, %v2115
    %v2117 = vsub.f32 1.0, %v2116
    %v2118 = vmul.f32 %v2115, %v2117
    %v2119 = vadd.f32 %v2115, %v2118
    %vm2120 = vweird.f32 %v2099
    %vm2121 = vweird.f32 %v2115
    %vm2122 = vmor %vm2120, %vm2121
    %v2123 = vsel %vm2122, %v2115, %v2119
    %v2124 = vand.u32 2147483647, %v2099
    %vm2125 = vcmp.eq.f32.partialorder %v2124, 8.507059e+37
    %v2126 = vand.u32 %v2099, 2147483648
    %v2127 = vor.u32 1.1754944e-38, %v2126
    %v2128 = vsel %vm2125, %v2127, %v2123
    %v2129 = vmul.f32 %v2085, %v2128
    %2131 = vset.pattern.permute.xlu0 0
    %2132 = vperm.xlu0 %2131, %v1779
    %v2133 = vpop.permute.xlu0 %2132
    %2136 = vset.pattern.permute.xlu0 0
    %2137 = vperm.xlu0 %2136, %v1799
    %v2138 = vpop.permute.xlu0 %2137
    %2140 = vset.pattern.permute.xlu0 2
    %2141 = vperm.xlu0 %2140, %v1779
    %v2142 = vpop.permute.xlu0 %2141
    %2144 = vset.pattern.permute.xlu0 2
    %2145 = vperm.xlu0 %2144, %v1799
    %v2146 = vpop.permute.xlu0 %2145
    %v2148 = vsel %vm1037, %v2133, %v2142
    %v2149 = vsel %vm1037, %v2138, %v2146
    %2150 = vset.pattern.permute.xlu0 1
    %2151 = vperm.xlu0 %2150, %v1779
    %v2152 = vpop.permute.xlu0 %2151
    %2154 = vset.pattern.permute.xlu0 1
    %2155 = vperm.xlu0 %2154, %v1799
    %v2156 = vpop.permute.xlu0 %2155
    %2158 = vset.pattern.permute.xlu0 3
    %2159 = vperm.xlu0 %2158, %v1779
    %v2160 = vpop.permute.xlu0 %2159
    %2162 = vset.pattern.permute.xlu0 3
    %2163 = vperm.xlu0 %2162, %v1799
    %v2164 = vpop.permute.xlu0 %2163
    %v2166 = vsel %vm1037, %v2152, %v2160
    %v2167 = vsel %vm1037, %v2156, %v2164
    %2170 = vrot.lane.b32.xlu0 %v1959, 108
    %v2171 = vpop.permute.xlu0 %2170
    %2172 = vrot.lane.b32.xlu0 %v1962, 108
    %v2173 = vpop.permute.xlu0 %2172
    %v2176 = vsub.f32 %v2148, %v2171
    %v2177 = vsub.f32 %v2149, %v2173
    %v2178 = vsub.f32 %v2148, %v2173
    %v2179 = vsub.f32 %v2149, %v2171
    %2184 = vrot.lane.b32.xlu0 %v2063, 8
    %v2185 = vpop.permute.xlu0 %2184
    %2186 = vrot.lane.b32.xlu0 %v2065, 8
    %v2187 = vpop.permute.xlu0 %2186
    %2188 = vrot.lane.b32.xlu0 %v2067, 8
    %v2189 = vpop.permute.xlu0 %2188
    %2190 = vrot.lane.b32.xlu0 %v2069, 8
    %v2191 = vpop.permute.xlu0 %2190
    %v2192 = vsel %vm513, %v2185, %v2187
    %v2193 = vsel %vm513, %v2189, %v2191
    %v2196 = vmul.f32 %v2176, %v2192
    %v2197 = vmul.f32 %v2177, %v2193
    %v2198 = vmul.f32 %v2178, %v2193
    %v2199 = vmul.f32 %v2179, %v2192
    %2200 = vrot.lane.b32.xlu0 %v1959, 68
    %v2201 = vpop.permute.xlu0 %2200
    %2202 = vrot.lane.b32.xlu0 %v1962, 68
    %v2203 = vpop.permute.xlu0 %2202
    %v2206 = vsub.f32 %v2166, %v2201
    %v2207 = vsub.f32 %v2167, %v2203
    %v2208 = vsub.f32 %v2166, %v2203
    %v2209 = vsub.f32 %v2167, %v2201
    %2210 = vrot.lane.b32.xlu0 %v2065, 96
    %v2211 = vpop.permute.xlu0 %2210
    %2212 = vrot.lane.b32.xlu0 %v2069, 96
    %v2213 = vpop.permute.xlu0 %2212
    %v2216 = vmul.f32 %v2206, %v2211
    %v2217 = vmul.f32 %v2207, %v2213
    %v2218 = vmul.f32 %v2208, %v2213
    %v2219 = vmul.f32 %v2209, %v2211
    %v2220 = vmul.f32 %v2070, %v2070
    %v2221 = vmul.f32 %v2071, %v2071
    %v2222 = vmul.f32 %v2072, %v2072
    %v2223 = vmul.f32 %v2073, %v2073
    %v2224 = vsub.f32 1.0, %v2220
    %v2225 = vsub.f32 1.0, %v2221
    %v2226 = vsub.f32 1.0, %v2222
    %v2227 = vsub.f32 1.0, %v2223
    %v2228 = vrcp.pop %v2224
    %v2229 = vrcp.pop %v2225
    %v2230 = vrcp.pop %v2226
    %v2231 = vrcp.pop %v2227
    %v2232 = vmul.f32 %v2196, %v2196
    %v2233 = vmul.f32 %v2197, %v2197
    %v2234 = vmul.f32 %v2198, %v2198
    %v2235 = vmul.f32 %v2199, %v2199
    %v2236 = vmul.f32 %v2216, %v2216
    %v2237 = vmul.f32 %v2217, %v2217
    %v2238 = vmul.f32 %v2218, %v2218
    %v2239 = vmul.f32 %v2219, %v2219
    %v2240 = vadd.f32 %v2232, %v2236
    %v2241 = vadd.f32 %v2233, %v2237
    %v2242 = vadd.f32 %v2234, %v2238
    %v2243 = vadd.f32 %v2235, %v2239
    %v2244 = vmul.f32 %v2070, 2.0
    %v2245 = vmul.f32 %v2071, 2.0
    %v2246 = vmul.f32 %v2072, 2.0
    %v2247 = vmul.f32 %v2073, 2.0
    %2252 = vrot.lane.b32.xlu0 %v2196, 92
    %v2253 = vpop.permute.xlu0 %2252
    %2254 = vrot.lane.b32.xlu0 %v2197, 92
    %v2255 = vpop.permute.xlu0 %2254
    %2256 = vrot.lane.b32.xlu0 %v2198, 92
    %v2257 = vpop.permute.xlu0 %2256
    %2258 = vrot.lane.b32.xlu0 %v2199, 92
    %v2259 = vpop.permute.xlu0 %2258
    %v2264 = vmul.f32 %v2244, %v2253
    %v2265 = vmul.f32 %v2245, %v2253
    %v2266 = vmul.f32 %v2246, %v2255
    %v2267 = vmul.f32 %v2247, %v2255
    %v2268 = vmul.f32 %v2246, %v2257
    %v2269 = vmul.f32 %v2247, %v2257
    %v2270 = vmul.f32 %v2244, %v2259
    %v2271 = vmul.f32 %v2245, %v2259
    %2276 = vrot.lane.b32.xlu0 %v2216, 92
    %v2277 = vpop.permute.xlu0 %2276
    %2278 = vrot.lane.b32.xlu0 %v2217, 92
    %v2279 = vpop.permute.xlu0 %2278
    %2280 = vrot.lane.b32.xlu0 %v2218, 92
    %v2281 = vpop.permute.xlu0 %2280
    %2282 = vrot.lane.b32.xlu0 %v2219, 92
    %v2283 = vpop.permute.xlu0 %2282
    %v2288 = vmul.f32 %v2264, %v2277
    %v2289 = vmul.f32 %v2265, %v2277
    %v2290 = vmul.f32 %v2266, %v2279
    %v2291 = vmul.f32 %v2267, %v2279
    %v2292 = vmul.f32 %v2268, %v2281
    %v2293 = vmul.f32 %v2269, %v2281
    %v2294 = vmul.f32 %v2270, %v2283
    %v2295 = vmul.f32 %v2271, %v2283
    %2304 = vrot.lane.b32.xlu0 %v2288, 36
    %v2305 = vpop.permute.xlu0 %2304
    %2306 = vrot.lane.b32.xlu0 %v2289, 36
    %v2307 = vpop.permute.xlu0 %2306
    %2308 = vrot.lane.b32.xlu0 %v2290, 36
    %v2309 = vpop.permute.xlu0 %2308
    %2310 = vrot.lane.b32.xlu0 %v2291, 36
    %v2311 = vpop.permute.xlu0 %2310
    %2312 = vrot.lane.b32.xlu0 %v2292, 36
    %v2313 = vpop.permute.xlu0 %2312
    %2314 = vrot.lane.b32.xlu0 %v2293, 36
    %v2315 = vpop.permute.xlu0 %2314
    %2316 = vrot.lane.b32.xlu0 %v2294, 36
    %v2317 = vpop.permute.xlu0 %2316
    %2318 = vrot.lane.b32.xlu0 %v2295, 36
    %v2319 = vpop.permute.xlu0 %2318
    %v2320 = vsel %vm1228, %v2305, %v2307
    %v2321 = vsel %vm1228, %v2309, %v2311
    %v2322 = vsel %vm1228, %v2313, %v2315
    %v2323 = vsel %vm1228, %v2317, %v2319
    %v2328 = vsub.f32 %v2240, %v2320
    %v2329 = vsub.f32 %v2241, %v2321
    %v2330 = vsub.f32 %v2242, %v2322
    %v2331 = vsub.f32 %v2243, %v2323
    %v2332 = vmul.f32 %v2328, -0.5
    %v2333 = vmul.f32 %v2329, -0.5
    %v2334 = vmul.f32 %v2330, -0.5
    %v2335 = vmul.f32 %v2331, -0.5
    %2340 = vrot.lane.b32.xlu0 %v2228, 36
    %v2341 = vpop.permute.xlu0 %2340
    %2342 = vrot.lane.b32.xlu0 %v2229, 36
    %v2343 = vpop.permute.xlu0 %2342
    %2344 = vrot.lane.b32.xlu0 %v2230, 36
    %v2345 = vpop.permute.xlu0 %2344
    %2346 = vrot.lane.b32.xlu0 %v2231, 36
    %v2347 = vpop.permute.xlu0 %2346
    %v2348 = vsel %vm1228, %v2341, %v2343
    %v2349 = vsel %vm1228, %v2345, %v2347
    %v2352 = vmul.f32 %v2332, %v2348
    %v2353 = vmul.f32 %v2333, %v2349
    %v2354 = vmul.f32 %v2334, %v2349
    %v2355 = vmul.f32 %v2335, %v2348
    %v2356 = vmul.f32 %v2352, 1.442695
    %v2357 = vpow.pop %v2356
    %v2358 = vmul.f32 %v2353, 1.442695
    %v2359 = vpow.pop %v2358
    %v2360 = vmul.f32 %v2354, 1.442695
    %v2361 = vpow.pop %v2360
    %v2362 = vmul.f32 %v2355, 1.442695
    %v2363 = vpow.pop %v2362
    %2364 = vrot.lane.b32.xlu0 %v2065, 88
    %v2365 = vpop.permute.xlu0 %2364
    %2366 = vrot.lane.b32.xlu0 %v2069, 88
    %v2367 = vpop.permute.xlu0 %2366
    %v2370 = vmul.f32 %v2063, %v2365
    %v2371 = vmul.f32 %v2065, %v2365
    %v2372 = vmul.f32 %v2067, %v2367
    %v2373 = vmul.f32 %v2069, %v2367
    %v2374 = vrsqrt.pop %v2224
    %v2375 = vmul.f32 %v2374, %v2224
    %v2376 = vmul.f32 %v2375, %v2374
    %v2377 = vmul.f32 0.5, %v2376
    %v2378 = vsub.f32 1.5, %v2377
    %v2379 = vmul.f32 %v2374, %v2378
    %vm2380 = vweird.f32 %v2224
    %vm2381 = vweird.f32 %v2374
    %vm2382 = vmor %vm2380, %vm2381
    %v2383 = vsel %vm2382, %v2374, %v2379
    %v2384 = vrsqrt.pop %v2225
    %v2385 = vmul.f32 %v2384, %v2225
    %v2386 = vmul.f32 %v2385, %v2384
    %v2387 = vmul.f32 0.5, %v2386
    %v2388 = vsub.f32 1.5, %v2387
    %v2389 = vmul.f32 %v2384, %v2388
    %vm2390 = vweird.f32 %v2225
    %vm2391 = vweird.f32 %v2384
    %vm2392 = vmor %vm2390, %vm2391
    %v2393 = vsel %vm2392, %v2384, %v2389
    %v2394 = vrsqrt.pop %v2226
    %v2395 = vmul.f32 %v2394, %v2226
    %v2396 = vmul.f32 %v2395, %v2394
    %v2397 = vmul.f32 0.5, %v2396
    %v2398 = vsub.f32 1.5, %v2397
    %v2399 = vmul.f32 %v2394, %v2398
    %vm2400 = vweird.f32 %v2226
    %vm2401 = vweird.f32 %v2394
    %vm2402 = vmor %vm2400, %vm2401
    %v2403 = vsel %vm2402, %v2394, %v2399
    %v2404 = vrsqrt.pop %v2227
    %v2405 = vmul.f32 %v2404, %v2227
    %v2406 = vmul.f32 %v2405, %v2404
    %v2407 = vmul.f32 0.5, %v2406
    %v2408 = vsub.f32 1.5, %v2407
    %v2409 = vmul.f32 %v2404, %v2408
    %vm2410 = vweird.f32 %v2227
    %vm2411 = vweird.f32 %v2404
    %vm2412 = vmor %vm2410, %vm2411
    %v2413 = vsel %vm2412, %v2404, %v2409
    %2418 = vrot.lane.b32.xlu0 %v2383, 28
    %v2419 = vpop.permute.xlu0 %2418
    %2420 = vrot.lane.b32.xlu0 %v2393, 28
    %v2421 = vpop.permute.xlu0 %2420
    %2422 = vrot.lane.b32.xlu0 %v2403, 28
    %v2423 = vpop.permute.xlu0 %2422
    %2424 = vrot.lane.b32.xlu0 %v2413, 28
    %v2425 = vpop.permute.xlu0 %2424
    %v2426 = vsel %vm1335, %v2419, %v2421
    %v2427 = vsel %vm1335, %v2423, %v2425
    %v2432 = vmul.f32 %v2370, %v2419
    %v2433 = vmul.f32 %v2371, %v2426
    %v2434 = vmul.f32 %v2372, %v2423
    %v2435 = vmul.f32 %v2373, %v2427
    %v2436 = vmul.f32 %v2432, 0.15915494
    %v2437 = vmul.f32 %v2433, 0.15915494
    %v2438 = vmul.f32 %v2434, 0.15915494
    %v2439 = vmul.f32 %v2435, 0.15915494
    %2444 = vrot.lane.b32.xlu0 %v2436, 8
    %v2445 = vpop.permute.xlu0 %2444
    %2446 = vrot.lane.b32.xlu0 %v2437, 8
    %v2447 = vpop.permute.xlu0 %2446
    %2448 = vrot.lane.b32.xlu0 %v2438, 8
    %v2449 = vpop.permute.xlu0 %2448
    %2450 = vrot.lane.b32.xlu0 %v2439, 8
    %v2451 = vpop.permute.xlu0 %2450
    %v2452 = vsel %vm513, %v2445, %v2447
    %v2453 = vsel %vm513, %v2449, %v2451
    %v2456 = vmul.f32 %v2357, %v2452
    %v2457 = vmul.f32 %v2359, %v2453
    %v2458 = vmul.f32 %v2361, %v2453
    %v2459 = vmul.f32 %v2363, %v2452
    %2460 = vset.pattern.permute.xlu0 4
    %2461 = vperm.xlu0 %2460, %v1779
    %v2462 = vpop.permute.xlu0 %2461
    %2464 = vset.pattern.permute.xlu0 4
    %2465 = vperm.xlu0 %2464, %v1799
    %v2466 = vpop.permute.xlu0 %2465
    %v2468 = vsub.f32 %v2462, %v1959
    %v2469 = vsub.f32 %v2466, %v1962
    %v2470 = vsub.f32 %v2462, %v1962
    %v2471 = vsub.f32 %v2466, %v1959
    %2472 = vrot.lane.b32.xlu0 %v2065, 28
    %v2473 = vpop.permute.xlu0 %2472
    %2474 = vrot.lane.b32.xlu0 %v2069, 28
    %v2475 = vpop.permute.xlu0 %2474
    %v2478 = vmul.f32 %v2468, %v2473
    %v2479 = vmul.f32 %v2469, %v2475
    %v2480 = vmul.f32 %v2470, %v2475
    %v2481 = vmul.f32 %v2471, %v2473
    %v2482 = vmul.f32 %v2478, -0.5
    %v2483 = vmul.f32 %v2479, -0.5
    %v2484 = vmul.f32 %v2480, -0.5
    %v2485 = vmul.f32 %v2481, -0.5
    %v2486 = vmul.f32 %v2482, %v2478
    %v2487 = vmul.f32 %v2483, %v2479
    %v2488 = vmul.f32 %v2484, %v2480
    %v2489 = vmul.f32 %v2485, %v2481
    %v2490 = vmul.f32 %v2486, 1.442695
    %v2491 = vpow.pop %v2490
    %v2492 = vmul.f32 %v2487, 1.442695
    %v2493 = vpow.pop %v2492
    %v2494 = vmul.f32 %v2488, 1.442695
    %v2495 = vpow.pop %v2494
    %v2496 = vmul.f32 %v2489, 1.442695
    %v2497 = vpow.pop %v2496
    %v2498 = vmul.f32 %v2065, 0.3989423
    %v2499 = vmul.f32 %v2069, 0.3989423
    %2502 = vrot.lane.b32.xlu0 %v2498, 28
    %v2503 = vpop.permute.xlu0 %2502
    %2504 = vrot.lane.b32.xlu0 %v2499, 28
    %v2505 = vpop.permute.xlu0 %2504
    %v2508 = vmul.f32 %v2491, %v2503
    %v2509 = vmul.f32 %v2493, %v2505
    %v2510 = vmul.f32 %v2495, %v2505
    %v2511 = vmul.f32 %v2497, %v2503
    %v2512 = vmul.f32 %v2042, %v2456
    %v2513 = vmul.f32 %v2057, %v2457
    %v2514 = vmul.f32 %v2057, %v2458
    %v2515 = vmul.f32 %v2042, %v2459
    %v2516 = vsel %vm914, %v2512, 0.0
    %2517 = vadd.xlane.f32.xlu0 %v2516
    %v2518 = vpop.xlane.xlu0 %2517
    %v2519 = vsel %vm914, %v2513, 0.0
    %2520 = vadd.xlane.f32.xlu0 %v2519
    %v2521 = vpop.xlane.xlu0 %2520
    %v2522 = vsel %vm914, %v2514, 0.0
    %2523 = vadd.xlane.f32.xlu0 %v2522
    %v2524 = vpop.xlane.xlu0 %2523
    %v2525 = vsel %vm914, %v2515, 0.0
    %2526 = vadd.xlane.f32.xlu0 %v2525
    %v2527 = vpop.xlane.xlu0 %2526
    %2532 = vrot.lane.b32.xlu0 %v2456, 108
    %v2533 = vpop.permute.xlu0 %2532
    %2534 = vrot.lane.b32.xlu0 %v2457, 108
    %v2535 = vpop.permute.xlu0 %2534
    %2536 = vrot.lane.b32.xlu0 %v2458, 108
    %v2537 = vpop.permute.xlu0 %2536
    %2538 = vrot.lane.b32.xlu0 %v2459, 108
    %v2539 = vpop.permute.xlu0 %2538
    %v2544 = vmul.f32 %v2042, %v2533
    %v2545 = vmul.f32 %v2057, %v2535
    %v2546 = vmul.f32 %v2057, %v2537
    %v2547 = vmul.f32 %v2042, %v2539
    %v2548 = vsel %vm914, %v2544, 0.0
    %2549 = vadd.xlane.f32.xlu0 %v2548
    %v2550 = vpop.xlane.xlu0 %2549
    %v2551 = vsel %vm914, %v2545, 0.0
    %2552 = vadd.xlane.f32.xlu0 %v2551
    %v2553 = vpop.xlane.xlu0 %2552
    %v2554 = vsel %vm914, %v2546, 0.0
    %2555 = vadd.xlane.f32.xlu0 %v2554
    %v2556 = vpop.xlane.xlu0 %2555
    %v2557 = vsel %vm914, %v2547, 0.0
    %2558 = vadd.xlane.f32.xlu0 %v2557
    %v2559 = vpop.xlane.xlu0 %2558
    %2564 = vrot.lane.b32.xlu0 %v2508, 28
    %v2565 = vpop.permute.xlu0 %2564
    %2566 = vrot.lane.b32.xlu0 %v2509, 28
    %v2567 = vpop.permute.xlu0 %2566
    %2568 = vrot.lane.b32.xlu0 %v2510, 28
    %v2569 = vpop.permute.xlu0 %2568
    %2570 = vrot.lane.b32.xlu0 %v2511, 28
    %v2571 = vpop.permute.xlu0 %2570
    %v2576 = vmul.f32 %v2042, %v2565
    %v2577 = vmul.f32 %v2057, %v2567
    %v2578 = vmul.f32 %v2057, %v2569
    %v2579 = vmul.f32 %v2042, %v2571
    %v2580 = vsel %vm914, %v2576, 0.0
    %2581 = vadd.xlane.f32.xlu0 %v2580
    %v2582 = vpop.xlane.xlu0 %2581
    %v2583 = vsel %vm914, %v2577, 0.0
    %2584 = vadd.xlane.f32.xlu0 %v2583
    %v2585 = vpop.xlane.xlu0 %2584
    %v2586 = vsel %vm914, %v2578, 0.0
    %2587 = vadd.xlane.f32.xlu0 %v2586
    %v2588 = vpop.xlane.xlu0 %2587
    %v2589 = vsel %vm914, %v2579, 0.0
    %2590 = vadd.xlane.f32.xlu0 %v2589
    %v2591 = vpop.xlane.xlu0 %2590
    %v2592 = vadd.f32 %v2518, 1e-05
    %v2593 = vadd.f32 %v2521, 1e-05
    %v2594 = vadd.f32 %v2524, 1e-05
    %v2595 = vadd.f32 %v2527, 1e-05
    %v2596 = vlog2.pop %v2592
    %v2597 = vmul.f32 %v2596, 0.6931472
    %v2598 = vlog2.pop %v2593
    %v2599 = vmul.f32 %v2598, 0.6931472
    %v2600 = vlog2.pop %v2594
    %v2601 = vmul.f32 %v2600, 0.6931472
    %v2602 = vlog2.pop %v2595
    %v2603 = vmul.f32 %v2602, 0.6931472
    %v2604 = vsub.f32 0.0, %v2597
    %v2605 = vsub.f32 0.0, %v2599
    %v2606 = vsub.f32 0.0, %v2601
    %v2607 = vsub.f32 0.0, %v2603
    %v2608 = vadd.f32 %v2550, 1e-05
    %v2609 = vadd.f32 %v2553, 1e-05
    %v2610 = vadd.f32 %v2556, 1e-05
    %v2611 = vadd.f32 %v2559, 1e-05
    %v2612 = vlog2.pop %v2608
    %v2613 = vmul.f32 %v2612, 0.6931472
    %v2614 = vlog2.pop %v2609
    %v2615 = vmul.f32 %v2614, 0.6931472
    %v2616 = vlog2.pop %v2610
    %v2617 = vmul.f32 %v2616, 0.6931472
    %v2618 = vlog2.pop %v2611
    %v2619 = vmul.f32 %v2618, 0.6931472
    %v2620 = vsub.f32 %v2604, %v2613
    %v2621 = vsub.f32 %v2605, %v2615
    %v2622 = vsub.f32 %v2606, %v2617
    %v2623 = vsub.f32 %v2607, %v2619
    %v2624 = vadd.f32 %v2582, 1e-05
    %v2625 = vadd.f32 %v2585, 1e-05
    %v2626 = vadd.f32 %v2588, 1e-05
    %v2627 = vadd.f32 %v2591, 1e-05
    %v2628 = vlog2.pop %v2624
    %v2629 = vmul.f32 %v2628, 0.6931472
    %v2630 = vlog2.pop %v2625
    %v2631 = vmul.f32 %v2630, 0.6931472
    %v2632 = vlog2.pop %v2626
    %v2633 = vmul.f32 %v2632, 0.6931472
    %v2634 = vlog2.pop %v2627
    %v2635 = vmul.f32 %v2634, 0.6931472
    %v2636 = vsub.f32 %v2620, %v2629
    %v2637 = vsub.f32 %v2621, %v2631
    %v2638 = vsub.f32 %v2622, %v2633
    %v2639 = vsub.f32 %v2623, %v2635
    %v2640 = vlog2.pop %v2114
    %v2641 = vmul.f32 %v2640, 0.6931472
    %v2642 = vlog2.pop %v2129
    %v2643 = vmul.f32 %v2642, 0.6931472
    %2646 = vrot.lane.b32.xlu0 %v2641, 1
    %v2647 = vpop.permute.xlu0 %2646
    %2648 = vrot.lane.b32.xlu0 %v2643, 1
    %v2649 = vpop.permute.xlu0 %2648
    %v2652 = vmul.f32 %v1779, %v2647
    %v2653 = vmul.f32 %v1799, %v2649
    %v2654 = vmul.f32 %v1779, %v2649
    %v2655 = vmul.f32 %v1799, %v2647
    %2660 = vrot.lane.b32.xlu0 %v2652, 123
    %v2661 = vpop.permute.xlu0 %2660
    %2662 = vrot.lane.b32.xlu0 %v2653, 123
    %v2663 = vpop.permute.xlu0 %2662
    %2664 = vrot.lane.b32.xlu0 %v2654, 123
    %v2665 = vpop.permute.xlu0 %2664
    %2666 = vrot.lane.b32.xlu0 %v2655, 123
    %v2667 = vpop.permute.xlu0 %2666
    %v2672 = vsel %vm1000, %v2661, 0.0
    %2673 = vadd.xlane.f32.xlu0 %v2672
    %v2674 = vpop.xlane.xlu0 %2673
    %v2675 = vsel %vm1000, %v2663, 0.0
    %2676 = vadd.xlane.f32.xlu0 %v2675
    %v2677 = vpop.xlane.xlu0 %2676
    %v2678 = vsel %vm1000, %v2665, 0.0
    %2679 = vadd.xlane.f32.xlu0 %v2678
    %v2680 = vpop.xlane.xlu0 %2679
    %v2681 = vsel %vm1000, %v2667, 0.0
    %2682 = vadd.xlane.f32.xlu0 %v2681
    %v2683 = vpop.xlane.xlu0 %2682
    %v2684 = vsub.f32 %v2636, %v2674
    %v2685 = vsub.f32 %v2637, %v2677
    %v2686 = vsub.f32 %v2638, %v2680
    %v2687 = vsub.f32 %v2639, %v2683
    %v2688 = vadd.f32 %v2684, %v2685
    %v2689 = vadd.f32 %v2686, %v2687
    %v2690 = vmin.f32 %v2688, %v2689
    %v2691 = vmul.f32 %v2690, %v1714
    %v2692 = vsel %vm1602, %v2691, 0.0
    %v2693 = vrot.slane %v2692, 4
    %v2694 = vadd.f32 %v2692, %v2693
    %v2695 = vrot.slane %v2694, 2
    %v2696 = vadd.f32 %v2694, %v2695
    %v2697 = vrot.slane %v2696, 1
    %v2698 = vadd.f32 %v2696, %v2697
    %v2699 = vmul.f32 %v2698, 0.5
    %v2700 = vadd.f32 %v1610, %v2699
    %v2701 = vmul.f32 %v2700, 0.5
    %vm2702 = vcmask 0
    %2703 = vst.msk [vmem:[#allocation16] sm:$0x1] %vm2702, %v2701
    // Predicated region
    $region98: #{tpu_custom_call.1} parent=1 // pred_check
      _
    $region99: #{tpu_custom_call.1} parent=1 // pred_check_branch
      %2705 = sbr.rel (0) target = $region101
    $region100: #{tpu_custom_call.1} parent=1 // pred_region
      %2707 = vsyncadd [#allocation4], 0
      %s2709 = sshll.u32 [#allocation16], 4
      %s2710 = int_to_ptr.vmem [resolvable:$true] %s2709
      %s2711 = sshll.u32 %s16, 4
      %s2712 = int_to_ptr.hbm [resolvable:$true] %s2711
      %2714 = dma.vmem_to_hbm [thread:$0]  %s2710, 16, %s2712, [#allocation4]
    $region101: #{tpu_custom_call.1} parent=1 // pred_fallthru
      _
    // Predicated region
    $region102: #{tpu_custom_call.1} parent=1 // pred_check
      _
    $region103: #{tpu_custom_call.1} parent=1 // pred_check_branch
      %2716 = sbr.rel (0) target = $region105
    $region104: #{tpu_custom_call.1} parent=1 // pred_region
      %2718 = dma.done [#allocation4], 16
    $region105: #{tpu_custom_call.1} parent=1 // pred_fallthru
      _
    %2719 = vsyncpa [#allocation3], 1
    %2720 = vsyncpa [#allocation6], 1
    %2721 = vsyncpa [#allocation9], 1
    %2722 = vsyncpa [#allocation12], 1
    %2723 = vsyncpa [#allocation15], 1
    %2724 = vsyncpa [#allocation4], 1

</llo_original>
